<compile_context>
chip_gen: v6e
topology: v6e:2x2x1
jax: 0.10.0
libtpu: 0.0.40
codegen_flags: <defaults>
</compile_context>

<pallas_src>
import math

import jax
import jax.numpy as jnp
from jax.experimental import pallas as pl
from jax.experimental.pallas import tpu as pltpu


def _round_up(x, m):
    return ((x + m - 1) // m) * m


def _make_mapper_kernel(n_layers, has_bias):
    """Kernel factory: signature is (x_ref, *param_refs, o_ref)."""
    # Python floats -> jaxpr literals (no captured device constants).
    pos = math.sqrt(2.0)          # slope for y >= 0, sqrt(2) gain folded in
    neg = 0.2 * math.sqrt(2.0)    # slope for y <  0, sqrt(2) gain folded in
    stride = 2 if has_bias else 1

    def kernel(*refs):
        x_ref = refs[0]
        o_ref = refs[-1]
        params = refs[1:-1]

        x = x_ref[...].astype(jnp.float32)

        # --- PixelNorm over the feature (lane) dim, in f32 ---
        # (Padded rows of the last grid block hold undefined data, but every op here
        #  is strictly row-wise and padded output rows are never stored, so it's safe.)
        x = x * jax.lax.rsqrt(jnp.mean(x * x, axis=-1, keepdims=True) + 1e-8)

        # bf16 carry for the MXU; matmul accumulates in f32.
        carry_dtype = params[0].dtype
        x = x.astype(carry_dtype)

        act = x  # placeholder; overwritten below (n_layers >= 1)
        # --- n_layers x EqualLinear + fused leaky-relu ---
        for l in range(n_layers):
            w_ref = params[l * stride]
            y = jnp.dot(x, w_ref[...], preferred_element_type=jnp.float32)
            if has_bias:
                y = y + params[l * stride + 1][...].astype(jnp.float32)
            # leaky_relu(y, 0.2) * sqrt(2): select the slope, then one multiply.
            act = y * jnp.where(y >= 0.0, pos, neg)          # f32
            x = act.astype(carry_dtype)                       # bf16 loop carry

        o_ref[...] = act.astype(o_ref.dtype)

    return kernel


def mapper_forward(x, weights, biases=None, *, block_b=None,
                   weight_dtype=jnp.bfloat16):
    """x: (B, D) float32.
    weights: list of (D, D) pre-scaled (W * lr_mul / sqrt(D)), pre-transposed so the
             kernel computes x @ W (equivalent to F.linear's x @ W^T). Cast to bf16
             at this boundary regardless of input dtype.
    biases:  optional list of (1, D) pre-scaled (bias * lr_mul). Pass None to skip the
             bias add entirely (module init has bias == 0)."""
    B, D = x.shape
    # Lane padding would corrupt the PixelNorm mean; require full 128-lane tiles.
    assert D % 128 == 0, "latent_dim must be a multiple of 128"
    n_layers = len(weights)
    has_bias = biases is not None

    # Guarantee the bf16 MXU fast path and halve weight HBM/VMEM traffic.
    weights = [w.astype(weight_dtype) for w in weights]
    if has_bias:
        biases = [b.astype(jnp.float32) for b in biases]

    # Batch tile: at least 2 grid steps when B >= 16 so both v7x TensorCores get work
    # ("parallel" grid axis); capped at 512 rows so even v5e's modest scoped-VMEM
    # budget holds with room to spare. Multiple of 8 (sublane).
    if block_b is None:
        if B >= 16:
            block_b = min(512, _round_up(pl.cdiv(B, 2), 8))
        else:
            block_b = _round_up(B, 8)
    else:
        block_b = min(_round_up(block_b, 8), _round_up(B, 8))
    grid = (pl.cdiv(B, block_b),)

    x_spec = pl.BlockSpec((block_b, D), lambda i: (i, 0))
    # Weights / biases are grid-invariant: same block every step, so Pallas keeps them
    # resident in VMEM after the first fetch (4 x 512 x 512 bf16 = 2 MiB total).
    w_spec = pl.BlockSpec((D, D), lambda i: (0, 0))
    b_spec = pl.BlockSpec((1, D), lambda i: (0, 0))

    in_specs = [x_spec]
    operands = [x]
    for l in range(n_layers):
        in_specs.append(w_spec)
        operands.append(weights[l])
        if has_bias:
            in_specs.append(b_spec)
            operands.append(biases[l])

    itemsize = lambda a: a.size * a.dtype.itemsize
    cost = pl.CostEstimate(
        flops=2 * B * D * D * n_layers,
        transcendentals=B,  # one rsqrt per row (PixelNorm)
        bytes_accessed=(itemsize(x)
                        + sum(itemsize(w) for w in weights)
                        + (sum(itemsize(b) for b in biases) if has_bias else 0)
                        + B * D * x.dtype.itemsize),
    )

    return pl.pallas_call(
        _make_mapper_kernel(n_layers, has_bias),
        out_shape=jax.ShapeDtypeStruct((B, D), x.dtype),
        grid_spec=pltpu.PrefetchScalarGridSpec(
            num_scalar_prefetch=0,
            grid=grid,
            in_specs=in_specs,
            out_specs=x_spec,
        ),
        compiler_params=pltpu.CompilerParams(
            dimension_semantics=("parallel",),
            # Explicit scoped-VMEM budget: v5e's 16 MiB default would be the binding
            # limit at block_b=512; 32 MiB is safe on v5e/v6e/v7x alike.
            vmem_limit_bytes=32 * 1024 * 1024,
        ),
        cost_estimate=cost,
    )(*operands)


def init_mapper_params(key, latent_dim, lr_mul=0.01, n_layers=4):
    """Deterministic synthetic init mirroring EqualLinear.__init__.
    Weights are returned pre-scaled (W * lr_mul / sqrt(D)) and pre-transposed, in f32
    (mapper_forward casts them to bf16 at the call boundary); biases are the module's
    zero init (scaled by lr_mul)."""
    scale = (1.0 / math.sqrt(latent_dim)) * lr_mul
    weights, biases = [], []
    for _ in range(n_layers):
        key, sub = jax.random.split(key)
        w_raw = jax.random.normal(sub, (latent_dim, latent_dim), jnp.float32) / lr_mul
        w_eff = (w_raw * scale).T           # effective F.linear weight, transposed
        b_eff = jnp.zeros((1, latent_dim), jnp.float32) * lr_mul  # bias_init = 0
        weights.append(w_eff)
        biases.append(b_eff)
    return weights, biases


def mapper_reference(x, weights, biases=None):
    """Pure-JAX f32 reference with identical semantics (for validation)."""
    x = x * jax.lax.rsqrt(jnp.mean(x * x, axis=-1, keepdims=True) + 1e-8)
    for i, w in enumerate(weights):
        y = x @ w.astype(jnp.float32)
        if biases is not None:
            y = y + biases[i].astype(jnp.float32)
        x = jnp.where(y >= 0, y, 0.2 * y) * math.sqrt(2.0)
    return x


if __name__ == "__main__":
    latent_dim = 512   # module default (EqualLinear(512, 512))
    batch = 16         # small batch for the smoke test

    key = jax.random.PRNGKey(0)
    key, kx = jax.random.split(key)
    x = jax.random.normal(kx, (batch, latent_dim), jnp.float32)

    weights, biases = init_mapper_params(key, latent_dim)
    ref = mapper_reference(x, weights)          # biases are zero at init

    # Fast path: zero biases skipped entirely.
    out = jax.block_until_ready(mapper_forward(x, weights, biases=None))
    assert out.shape == (batch, latent_dim)
    assert jnp.allclose(out, ref, atol=5e-2, rtol=5e-2), \
        "mismatch vs reference (no-bias path)"

    # Fidelity path: bias plumbing exercised (biases are zero, so same reference).
    out_b = jax.block_until_ready(mapper_forward(x, weights, biases=biases))
    assert jnp.allclose(out_b, ref, atol=5e-2, rtol=5e-2), \
        "mismatch vs reference (bias path)"

    print("KERNEL_OK")
</pallas_src>

<mosaic_0001>
module attributes {stable_mosaic.version = 11 : i64} {
  func.func @kernel(%arg0: i32, %arg1: memref<8x512xf32, #tpu.memory_space<vmem>>, %arg2: memref<512x512xbf16, #tpu.memory_space<vmem>>, %arg3: memref<512x512xbf16, #tpu.memory_space<vmem>>, %arg4: memref<512x512xbf16, #tpu.memory_space<vmem>>, %arg5: memref<512x512xbf16, #tpu.memory_space<vmem>>, %arg6: memref<8x512xf32, #tpu.memory_space<vmem>>) attributes {dimension_semantics = [#tpu.dimension_semantics<parallel>], iteration_bounds = array<i64: 2>, scalar_prefetch = 0 : i64, scratch_operands = 0 : i64, tpu.core_type = #tpu.core_type<tc>, window_params = [{transform_indices = @transform_0, window_bounds = array<i64: 8, 512>}, {pipeline_mode = #tpu.pipeline_mode<synchronous>, transform_indices = @transform_1, window_bounds = array<i64: 512, 512>}, {pipeline_mode = #tpu.pipeline_mode<synchronous>, transform_indices = @transform_2, window_bounds = array<i64: 512, 512>}, {pipeline_mode = #tpu.pipeline_mode<synchronous>, transform_indices = @transform_3, window_bounds = array<i64: 512, 512>}, {pipeline_mode = #tpu.pipeline_mode<synchronous>, transform_indices = @transform_4, window_bounds = array<i64: 512, 512>}, {transform_indices = @transform_5, window_bounds = array<i64: 8, 512>}]} {
    %c0 = arith.constant 0 : index
    %c0_0 = arith.constant 0 : index
    %0 = vector.load %arg1[%c0, %c0_0] : memref<8x512xf32, #tpu.memory_space<vmem>>, vector<8x512xf32>
    %1 = arith.mulf %0, %0 : vector<8x512xf32>
    %cst = arith.constant dense<0.000000e+00> : vector<8xf32>
    %2 = vector.multi_reduction <add>, %1, %cst [1] : vector<8x512xf32> to vector<8xf32>
    %3 = vector.shape_cast %2 : vector<8xf32> to vector<8x1xf32>
    %cst_1 = arith.constant 5.120000e+02 : f32
    %4 = vector.broadcast %cst_1 : f32 to vector<8x1xf32>
    %5 = arith.divf %3, %4 : vector<8x1xf32>
    %cst_2 = arith.constant 9.99999993E-9 : f32
    %6 = vector.broadcast %cst_2 : f32 to vector<8x1xf32>
    %7 = arith.addf %5, %6 : vector<8x1xf32>
    %8 = math.rsqrt %7 : vector<8x1xf32>
    %9 = vector.broadcast %8 : vector<8x1xf32> to vector<8x512xf32>
    %10 = arith.mulf %0, %9 : vector<8x512xf32>
    %11 = arith.truncf %10 : vector<8x512xf32> to vector<8x512xbf16>
    %c0_3 = arith.constant 0 : index
    %c0_4 = arith.constant 0 : index
    %12 = vector.load %arg2[%c0_3, %c0_4] : memref<512x512xbf16, #tpu.memory_space<vmem>>, vector<512x512xbf16>
    %cst_5 = arith.constant dense<0.000000e+00> : vector<8x512xf32>
    %13 = tpu.matmul %11, %12, %cst_5 {dimension_numbers = #tpu.dot_dimension_numbers<[1], [0], [0], [1], [0, 0, 1, 1], [], []>} : vector<8x512xbf16>, vector<512x512xbf16>, vector<8x512xf32> -> vector<8x512xf32>
    %cst_6 = arith.constant 0.000000e+00 : f32
    %14 = vector.broadcast %cst_6 : f32 to vector<8x512xf32>
    %15 = arith.cmpf oge, %13, %14 : vector<8x512xf32>
    %cst_7 = arith.constant 1.41421354 : f32
    %cst_8 = arith.constant 0.282842726 : f32
    %16 = vector.broadcast %cst_7 : f32 to vector<8x512xf32>
    %17 = vector.broadcast %cst_8 : f32 to vector<8x512xf32>
    %18 = arith.select %15, %16, %17 : vector<8x512xi1>, vector<8x512xf32>
    %19 = arith.mulf %13, %18 : vector<8x512xf32>
    %20 = arith.truncf %19 : vector<8x512xf32> to vector<8x512xbf16>
    %c0_9 = arith.constant 0 : index
    %c0_10 = arith.constant 0 : index
    %21 = vector.load %arg3[%c0_9, %c0_10] : memref<512x512xbf16, #tpu.memory_space<vmem>>, vector<512x512xbf16>
    %cst_11 = arith.constant dense<0.000000e+00> : vector<8x512xf32>
    %22 = tpu.matmul %20, %21, %cst_11 {dimension_numbers = #tpu.dot_dimension_numbers<[1], [0], [0], [1], [0, 0, 1, 1], [], []>} : vector<8x512xbf16>, vector<512x512xbf16>, vector<8x512xf32> -> vector<8x512xf32>
    %cst_12 = arith.constant 0.000000e+00 : f32
    %23 = vector.broadcast %cst_12 : f32 to vector<8x512xf32>
    %24 = arith.cmpf oge, %22, %23 : vector<8x512xf32>
    %cst_13 = arith.constant 1.41421354 : f32
    %cst_14 = arith.constant 0.282842726 : f32
    %25 = vector.broadcast %cst_13 : f32 to vector<8x512xf32>
    %26 = vector.broadcast %cst_14 : f32 to vector<8x512xf32>
    %27 = arith.select %24, %25, %26 : vector<8x512xi1>, vector<8x512xf32>
    %28 = arith.mulf %22, %27 : vector<8x512xf32>
    %29 = arith.truncf %28 : vector<8x512xf32> to vector<8x512xbf16>
    %c0_15 = arith.constant 0 : index
    %c0_16 = arith.constant 0 : index
    %30 = vector.load %arg4[%c0_15, %c0_16] : memref<512x512xbf16, #tpu.memory_space<vmem>>, vector<512x512xbf16>
    %cst_17 = arith.constant dense<0.000000e+00> : vector<8x512xf32>
    %31 = tpu.matmul %29, %30, %cst_17 {dimension_numbers = #tpu.dot_dimension_numbers<[1], [0], [0], [1], [0, 0, 1, 1], [], []>} : vector<8x512xbf16>, vector<512x512xbf16>, vector<8x512xf32> -> vector<8x512xf32>
    %cst_18 = arith.constant 0.000000e+00 : f32
    %32 = vector.broadcast %cst_18 : f32 to vector<8x512xf32>
    %33 = arith.cmpf oge, %31, %32 : vector<8x512xf32>
    %cst_19 = arith.constant 1.41421354 : f32
    %cst_20 = arith.constant 0.282842726 : f32
    %34 = vector.broadcast %cst_19 : f32 to vector<8x512xf32>
    %35 = vector.broadcast %cst_20 : f32 to vector<8x512xf32>
    %36 = arith.select %33, %34, %35 : vector<8x512xi1>, vector<8x512xf32>
    %37 = arith.mulf %31, %36 : vector<8x512xf32>
    %38 = arith.truncf %37 : vector<8x512xf32> to vector<8x512xbf16>
    %c0_21 = arith.constant 0 : index
    %c0_22 = arith.constant 0 : index
    %39 = vector.load %arg5[%c0_21, %c0_22] : memref<512x512xbf16, #tpu.memory_space<vmem>>, vector<512x512xbf16>
    %cst_23 = arith.constant dense<0.000000e+00> : vector<8x512xf32>
    %40 = tpu.matmul %38, %39, %cst_23 {dimension_numbers = #tpu.dot_dimension_numbers<[1], [0], [0], [1], [0, 0, 1, 1], [], []>} : vector<8x512xbf16>, vector<512x512xbf16>, vector<8x512xf32> -> vector<8x512xf32>
    %cst_24 = arith.constant 0.000000e+00 : f32
    %41 = vector.broadcast %cst_24 : f32 to vector<8x512xf32>
    %42 = arith.cmpf oge, %40, %41 : vector<8x512xf32>
    %cst_25 = arith.constant 1.41421354 : f32
    %cst_26 = arith.constant 0.282842726 : f32
    %43 = vector.broadcast %cst_25 : f32 to vector<8x512xf32>
    %44 = vector.broadcast %cst_26 : f32 to vector<8x512xf32>
    %45 = arith.select %42, %43, %44 : vector<8x512xi1>, vector<8x512xf32>
    %46 = arith.mulf %40, %45 : vector<8x512xf32>
    %c0_27 = arith.constant 0 : index
    %c0_28 = arith.constant 0 : index
    %47 = vector.load %arg6[%c0_27, %c0_28] : memref<8x512xf32, #tpu.memory_space<vmem>>, vector<8x512xf32>
    tpu.vector_store %arg6[%c0_27, %c0_28], %46 {strides = array<i32>} : memref<8x512xf32, #tpu.memory_space<vmem>>, vector<8x512xf32>,
    return
  }
  func.func @transform_0(%arg0: i32) -> (i32, i32) {
    %c0_i32 = arith.constant 0 : i32
    %c0_i32_0 = arith.constant 0 : i32
    return %arg0, %c0_i32 : i32, i32
  }
  func.func @transform_1(%arg0: i32) -> (i32, i32) {
    %c0_i32 = arith.constant 0 : i32
    %c0_i32_0 = arith.constant 0 : i32
    %c0_i32_1 = arith.constant 0 : i32
    return %c0_i32, %c0_i32_0 : i32, i32
  }
  func.func @transform_2(%arg0: i32) -> (i32, i32) {
    %c0_i32 = arith.constant 0 : i32
    %c0_i32_0 = arith.constant 0 : i32
    %c0_i32_1 = arith.constant 0 : i32
    return %c0_i32, %c0_i32_0 : i32, i32
  }
  func.func @transform_3(%arg0: i32) -> (i32, i32) {
    %c0_i32 = arith.constant 0 : i32
    %c0_i32_0 = arith.constant 0 : i32
    %c0_i32_1 = arith.constant 0 : i32
    return %c0_i32, %c0_i32_0 : i32, i32
  }
  func.func @transform_4(%arg0: i32) -> (i32, i32) {
    %c0_i32 = arith.constant 0 : i32
    %c0_i32_0 = arith.constant 0 : i32
    %c0_i32_1 = arith.constant 0 : i32
    return %c0_i32, %c0_i32_0 : i32, i32
  }
  func.func @transform_5(%arg0: i32) -> (i32, i32) {
    %c0_i32 = arith.constant 0 : i32
    %c0_i32_0 = arith.constant 0 : i32
    return %arg0, %c0_i32 : i32, i32
  }
}

</mosaic_0001>

<llo_original>
// kernel: tpu_custom_call.1
$region0: #{tpu_custom_call.1}
  #allocation0 [shape = 'u32[]', space=smem, size = 0x4, offset = 0x4, fixed_abs, tag = 'smem constant byte address 0x4 - core index']
  #allocation1 [shape = 'u32[144,128]{1,0:T(1,128)}', space=vmem, size = 0x12000, scoped, tag = 'internal scratch']
  %s0 = inlined_call_operand.hbm [shape: f32[16,512], index: 0, kind: input, shape index: {}]
  %s1 = inlined_call_operand.hbm [shape: bf16[512,512], index: 1, kind: input, shape index: {}]
  %s2 = inlined_call_operand.hbm [shape: bf16[512,512], index: 2, kind: input, shape index: {}]
  %s3 = inlined_call_operand.hbm [shape: bf16[512,512], index: 3, kind: input, shape index: {}]
  %s4 = inlined_call_operand.hbm [shape: bf16[512,512], index: 4, kind: input, shape index: {}]
  %s5 = inlined_call_operand.hbm [shape: f32[16,512], index: 5, kind: output, shape index: {}]
  %s6 = sld [smem:[#allocation0]]
  $region73: #{tpu_custom_call.1} parent=0
    _
  %s8 = ssub.s32 1, %s6
  %s9 = scalar_select 0, %s8, %s6
  $region1: #{tpu_custom_call.1} parent=0
    #allocation2 [shape = 'u8[32768]{0}', space=vmem, size = 0x8000, scoped, tag = 'input window, operand 0']
    #allocation3 [shape = 's32[2]{0}', space=sflag, size = 0x8, scoped, tag = 'scoped memory for tpu_custom_call.1']
    #allocation4 [shape = 's32[2]{0}', space=sflag, size = 0x8, scoped, tag = 'scoped memory for tpu_custom_call.1']
    #allocation5 [shape = 'u8[524288]{0}', space=vmem, size = 0x80000, scoped, tag = 'input window, operand 1, single buffered']
    #allocation6 [shape = 's32[1]{0}', space=sflag, size = 0x4, scoped, tag = 'scoped memory for tpu_custom_call.1']
    #allocation7 [shape = 'u8[524288]{0}', space=vmem, size = 0x80000, scoped, tag = 'input window, operand 2, single buffered']
    #allocation8 [shape = 'u8[524288]{0}', space=vmem, size = 0x80000, scoped, tag = 'input window, operand 3, single buffered']
    #allocation9 [shape = 's32[1]{0}', space=sflag, size = 0x4, scoped, tag = 'scoped memory for tpu_custom_call.1']
    #allocation10 [shape = 'u8[524288]{0}', space=vmem, size = 0x80000, scoped, tag = 'input window, operand 4, single buffered']
    #allocation11 [shape = 'u8[32768]{0}', space=vmem, size = 0x8000, scoped, tag = 'output window, operand 0']
    %10 = vsyncpa [#allocation3], 0
    %s11 = scalar_lea.sflag [#allocation3], 1
    %12 = vsyncpa %s11, 0
    %13 = vsyncpa [#allocation6], 0
    %14 = vsyncpa [#allocation9], 0
    %15 = vsyncpa [#allocation4], 0
    %s16 = scalar_lea.sflag [#allocation4], 1
    %17 = vsyncpa %s16, 0
    loop: start=0, step=1, limit=4
    $region2: #{tpu_custom_call.1} parent=1 // loop_pre_header
      _
    $region3: #{tpu_custom_call.1} parent=1 // loop_header
      %s19 = sphi 0, %s23
      %p20 = scmp.ge.s32.totalorder %s19, 4
      %s29 = sphi 0, %s31
      %s32 = sphi 0, %s29
      %s33 = sphi 0, %s32
      %s49 = sphi 0, %s33
      %s53 = sphi 0, %s53
      %s55 = sphi 0, %s53
      %s56 = sphi 0, %s55
      %s70 = sphi 0, %s56
      %s74 = sphi 0, %s74
      %s76 = sphi 0, %s74
      %s77 = sphi 0, %s76
      %s91 = sphi 0, %s77
      %s95 = sphi 0, %s95
      %s97 = sphi 0, %s95
      %s98 = sphi 0, %s97
      %s112 = sphi 0, %s98
      %s116 = sphi 0, %s116
      %s118 = sphi 0, %s116
      %s119 = sphi 0, %s118
      %s133 = sphi 0, %s119
      %s139 = sphi 0, %s141
      %s142 = sphi 0, %s139
      %s143 = sphi 0, %s142
      %s159 = sphi 0, %s143
    $region4: #{tpu_custom_call.1} parent=1 // loop_header_branch
      %22 = sbr.rel (%p20) target = $region8
    $region5: #{tpu_custom_call.1} parent=1 // loop_body
      %s24 = ssub.s32 %s19, 1
      %s25 = ssub.s32 %s19, 2
      %s26 = sadd.s32 %s19, 1
      %s27 = ssub.s32 %s19, %s26
      %p28 = scmp.eq.s32.totalorder %s27, 0
      %s30 = sadd.s32 %s29, 1
      %s31 = scalar_select %p28, %s29, %s30
      %p34 = pneg %p28
      %p35 = scmp.eq.s32.totalorder %s19, 1
      %p36 = por %p34, %p35
      %p37 = scmp.ne.s32.totalorder %s29, %s32
      %p38 = scmp.eq.s32.totalorder %s19, 0
      %p39 = por %p37, %p38
      %p40 = scmp.ne.s32.totalorder %s29, %s32
      %p41 = scmp.eq.s32.totalorder %s24, 1
      %p42 = por %p40, %p41
      %p43 = scmp.ne.s32.totalorder %s32, %s33
      %p44 = scmp.eq.s32.totalorder %s24, 0
      %p45 = por %p43, %p44
      %p46 = scmp.ne.s32.totalorder %s32, %s33
      %p47 = scmp.eq.s32.totalorder %s25, 1
      %p48 = por %p46, %p47
      %p50 = scmp.ne.s32.totalorder %s33, %s49
      %p51 = scmp.eq.s32.totalorder %s25, 0
      %p52 = por %p50, %p51
      %s54 = sadd.s32 %s53, 1
      %p57 = scmp.eq.s32.totalorder %s19, 1
      %p58 = scmp.ne.s32.totalorder %s53, %s55
      %p59 = scmp.eq.s32.totalorder %s19, 0
      %p60 = por %p58, %p59
      %p61 = scmp.ne.s32.totalorder %s53, %s55
      %p62 = scmp.eq.s32.totalorder %s24, 1
      %p63 = por %p61, %p62
      %p64 = scmp.ne.s32.totalorder %s55, %s56
      %p65 = scmp.eq.s32.totalorder %s24, 0
      %p66 = por %p64, %p65
      %p67 = scmp.ne.s32.totalorder %s55, %s56
      %p68 = scmp.eq.s32.totalorder %s25, 1
      %p69 = por %p67, %p68
      %p71 = scmp.ne.s32.totalorder %s56, %s70
      %p72 = scmp.eq.s32.totalorder %s25, 0
      %p73 = por %p71, %p72
      %s75 = sadd.s32 %s74, 1
      %p78 = scmp.eq.s32.totalorder %s19, 1
      %p79 = scmp.ne.s32.totalorder %s74, %s76
      %p80 = scmp.eq.s32.totalorder %s19, 0
      %p81 = por %p79, %p80
      %p82 = scmp.ne.s32.totalorder %s74, %s76
      %p83 = scmp.eq.s32.totalorder %s24, 1
      %p84 = por %p82, %p83
      %p85 = scmp.ne.s32.totalorder %s76, %s77
      %p86 = scmp.eq.s32.totalorder %s24, 0
      %p87 = por %p85, %p86
      %p88 = scmp.ne.s32.totalorder %s76, %s77
      %p89 = scmp.eq.s32.totalorder %s25, 1
      %p90 = por %p88, %p89
      %p92 = scmp.ne.s32.totalorder %s77, %s91
      %p93 = scmp.eq.s32.totalorder %s25, 0
      %p94 = por %p92, %p93
      %s96 = sadd.s32 %s95, 1
      %p99 = scmp.eq.s32.totalorder %s19, 1
      %p100 = scmp.ne.s32.totalorder %s95, %s97
      %p101 = scmp.eq.s32.totalorder %s19, 0
      %p102 = por %p100, %p101
      %p103 = scmp.ne.s32.totalorder %s95, %s97
      %p104 = scmp.eq.s32.totalorder %s24, 1
      %p105 = por %p103, %p104
      %p106 = scmp.ne.s32.totalorder %s97, %s98
      %p107 = scmp.eq.s32.totalorder %s24, 0
      %p108 = por %p106, %p107
      %p109 = scmp.ne.s32.totalorder %s97, %s98
      %p110 = scmp.eq.s32.totalorder %s25, 1
      %p111 = por %p109, %p110
      %p113 = scmp.ne.s32.totalorder %s98, %s112
      %p114 = scmp.eq.s32.totalorder %s25, 0
      %p115 = por %p113, %p114
      %s117 = sadd.s32 %s116, 1
      %p120 = scmp.eq.s32.totalorder %s19, 1
      %p121 = scmp.ne.s32.totalorder %s116, %s118
      %p122 = scmp.eq.s32.totalorder %s19, 0
      %p123 = por %p121, %p122
      %p124 = scmp.ne.s32.totalorder %s116, %s118
      %p125 = scmp.eq.s32.totalorder %s24, 1
      %p126 = por %p124, %p125
      %p127 = scmp.ne.s32.totalorder %s118, %s119
      %p128 = scmp.eq.s32.totalorder %s24, 0
      %p129 = por %p127, %p128
      %p130 = scmp.ne.s32.totalorder %s118, %s119
      %p131 = scmp.eq.s32.totalorder %s25, 1
      %p132 = por %p130, %p131
      %p134 = scmp.ne.s32.totalorder %s119, %s133
      %p135 = scmp.eq.s32.totalorder %s25, 0
      %p136 = por %p134, %p135
      %s137 = ssub.s32 %s19, %s26
      %p138 = scmp.eq.s32.totalorder %s137, 0
      %s140 = sadd.s32 %s139, 1
      %s141 = scalar_select %p138, %s139, %s140
      %p144 = pneg %p138
      %p145 = scmp.eq.s32.totalorder %s19, 1
      %p146 = por %p144, %p145
      %p147 = scmp.ne.s32.totalorder %s139, %s142
      %p148 = scmp.eq.s32.totalorder %s19, 0
      %p149 = por %p147, %p148
      %p150 = scmp.ne.s32.totalorder %s139, %s142
      %p151 = scmp.eq.s32.totalorder %s24, 1
      %p152 = por %p150, %p151
      %p153 = scmp.ne.s32.totalorder %s142, %s143
      %p154 = scmp.eq.s32.totalorder %s24, 0
      %p155 = por %p153, %p154
      %p156 = scmp.ne.s32.totalorder %s142, %s143
      %p157 = scmp.eq.s32.totalorder %s25, 1
      %p158 = por %p156, %p157
      %p160 = scmp.ne.s32.totalorder %s143, %s159
      %p161 = scmp.eq.s32.totalorder %s25, 0
      %p162 = por %p160, %p161
      %p163 = scmp.le.s32.totalorder 1, %s19
      %p164 = scmp.lt.s32.totalorder %s19, 3
      %p165 = pnand %p163, %p164
      %p166 = pneg %p165
      // Predicated region
      $region9: #{tpu_custom_call.1} parent=5 // pred_check
        _
      $region10: #{tpu_custom_call.1} parent=5 // pred_check_branch
        %168 = sbr.rel (%p165) target = $region12
      $region11: #{tpu_custom_call.1} parent=5 // pred_region
        %s169 = ssub.s32 %s19, 1
        // Predicated region
        $region13: #{tpu_custom_call.1} parent=11 // pred_check
          %p170 = pneg %p66
        $region14: #{tpu_custom_call.1} parent=11 // pred_check_branch
          %172 = sbr.rel (%p170) target = $region16
        $region15: #{tpu_custom_call.1} parent=11 // pred_region
          %s174 = ssub.s32 16384, 16384
          %175 = vsyncadd [#allocation6], %s174
          %s176 = sshll.u32 [#allocation5], 4
          %s177 = int_to_ptr.vmem [resolvable:$true] %s176
          %182 = dma.hbm_to_vmem [thread:$0]  %s1, 16384, %s177, [#allocation6], 256, 256, 16
        $region16: #{tpu_custom_call.1} parent=11 // pred_fallthru
          _
        // Predicated region
        $region17: #{tpu_custom_call.1} parent=11 // pred_check
          %p183 = pneg %p87
        $region18: #{tpu_custom_call.1} parent=11 // pred_check_branch
          %185 = sbr.rel (%p183) target = $region20
        $region19: #{tpu_custom_call.1} parent=11 // pred_region
          %s187 = ssub.s32 16384, 16384
          %188 = vsyncadd [#allocation6], %s187
          %s189 = sshll.u32 [#allocation7], 4
          %s190 = int_to_ptr.vmem [resolvable:$true] %s189
          %195 = dma.hbm_to_vmem [thread:$0]  %s2, 16384, %s190, [#allocation6], 256, 256, 16
        $region20: #{tpu_custom_call.1} parent=11 // pred_fallthru
          _
        // Predicated region
        $region21: #{tpu_custom_call.1} parent=11 // pred_check
          %p196 = pneg %p108
        $region22: #{tpu_custom_call.1} parent=11 // pred_check_branch
          %198 = sbr.rel (%p196) target = $region24
        $region23: #{tpu_custom_call.1} parent=11 // pred_region
          %s200 = ssub.s32 16384, 16384
          %201 = vsyncadd [#allocation9], %s200
          %s202 = sshll.u32 [#allocation8], 4
          %s203 = int_to_ptr.vmem [resolvable:$true] %s202
          %208 = dma.hbm_to_vmem [thread:$0]  %s3, 16384, %s203, [#allocation9], 256, 256, 16
        $region24: #{tpu_custom_call.1} parent=11 // pred_fallthru
          _
        // Predicated region
        $region25: #{tpu_custom_call.1} parent=11 // pred_check
          %p209 = pneg %p129
        $region26: #{tpu_custom_call.1} parent=11 // pred_check_branch
          %211 = sbr.rel (%p209) target = $region28
        $region27: #{tpu_custom_call.1} parent=11 // pred_region
          %s213 = ssub.s32 16384, 16384
          %214 = vsyncadd [#allocation9], %s213
          %s215 = sshll.u32 [#allocation10], 4
          %s216 = int_to_ptr.vmem [resolvable:$true] %s215
          %221 = dma.hbm_to_vmem [thread:$0]  %s4, 16384, %s216, [#allocation9], 256, 256, 16
        $region28: #{tpu_custom_call.1} parent=11 // pred_fallthru
          _
      $region12: #{tpu_custom_call.1} parent=5 // pred_fallthru
        _
      %p222 = scmp.lt.s32.totalorder %s19, 2
      // Predicated region
      $region29: #{tpu_custom_call.1} parent=5 // pred_check
        %p223 = pneg %p222
      $region30: #{tpu_custom_call.1} parent=5 // pred_check_branch
        %225 = sbr.rel (%p223) target = $region32
      $region31: #{tpu_custom_call.1} parent=5 // pred_region
        // Predicated region
        $region33: #{tpu_custom_call.1} parent=31 // pred_check
          %p226 = pneg %p39
        $region34: #{tpu_custom_call.1} parent=31 // pred_check_branch
          %228 = sbr.rel (%p226) target = $region36
        $region35: #{tpu_custom_call.1} parent=31 // pred_region
          %s229 = sand.u32 %s29, 1
          %s230 = scalar_lea.sflag [#allocation3], %s229
          %s231 = sand.u32 %s29, 1
          %s232 = smul.addr %s231, 32
          %s233 = scalar_lea.vmem [#allocation2], %s232
          %s235 = ssub.s32 512, 512
          %236 = vsyncadd %s230, %s235
          %s237 = smul.addr %s19, 4
          %s238 = smul.addr %s237, 128
          %s239 = scalar_lea.hbm %s0, %s238
          %s241 = sshll.u32 %s233, 4
          %s242 = int_to_ptr.vmem [resolvable:$true] %s241
          %244 = dma.hbm_to_vmem [thread:$0]  %s239, 512, %s242, %s230
        $region36: #{tpu_custom_call.1} parent=31 // pred_fallthru
          _
      $region32: #{tpu_custom_call.1} parent=5 // pred_fallthru
        _
      %p245 = scmp.le.s32.totalorder 1, %s19
      %p246 = scmp.lt.s32.totalorder %s19, 3
      %p247 = pnand %p245, %p246
      %p248 = pneg %p247
      // Predicated region
      $region37: #{tpu_custom_call.1} parent=5 // pred_check
        _
      $region38: #{tpu_custom_call.1} parent=5 // pred_check_branch
        %250 = sbr.rel (%p247) target = $region40
      $region39: #{tpu_custom_call.1} parent=5 // pred_region
        %s251 = ssub.s32 %s19, 1
        %s252 = sand.u32 %s32, 1
        %s253 = scalar_lea.sflag [#allocation3], %s252
        %s254 = sand.u32 %s32, 1
        %s255 = smul.addr %s254, 32
        %s256 = scalar_lea.vmem [#allocation2], %s255
        // Predicated region
        $region41: #{tpu_custom_call.1} parent=39 // pred_check
          %p257 = pneg %p45
        $region42: #{tpu_custom_call.1} parent=39 // pred_check_branch
          %259 = sbr.rel (%p257) target = $region44
        $region43: #{tpu_custom_call.1} parent=39 // pred_region
          %260 = dma.done %s253, 512
        $region44: #{tpu_custom_call.1} parent=39 // pred_fallthru
          _
        // Predicated region
        $region45: #{tpu_custom_call.1} parent=39 // pred_check
          %p261 = pneg %p66
        $region46: #{tpu_custom_call.1} parent=39 // pred_check_branch
          %263 = sbr.rel (%p261) target = $region48
        $region47: #{tpu_custom_call.1} parent=39 // pred_region
          %264 = dma.done [#allocation6], 16384
        $region48: #{tpu_custom_call.1} parent=39 // pred_fallthru
          _
        // Predicated region
        $region49: #{tpu_custom_call.1} parent=39 // pred_check
          %p265 = pneg %p87
        $region50: #{tpu_custom_call.1} parent=39 // pred_check_branch
          %267 = sbr.rel (%p265) target = $region52
        $region51: #{tpu_custom_call.1} parent=39 // pred_region
          %268 = dma.done [#allocation6], 16384
        $region52: #{tpu_custom_call.1} parent=39 // pred_fallthru
          _
        // Predicated region
        $region53: #{tpu_custom_call.1} parent=39 // pred_check
          %p269 = pneg %p108
        $region54: #{tpu_custom_call.1} parent=39 // pred_check_branch
          %271 = sbr.rel (%p269) target = $region56
        $region55: #{tpu_custom_call.1} parent=39 // pred_region
          %272 = dma.done [#allocation9], 16384
        $region56: #{tpu_custom_call.1} parent=39 // pred_fallthru
          _
        // Predicated region
        $region57: #{tpu_custom_call.1} parent=39 // pred_check
          %p273 = pneg %p129
        $region58: #{tpu_custom_call.1} parent=39 // pred_check_branch
          %275 = sbr.rel (%p273) target = $region60
        $region59: #{tpu_custom_call.1} parent=39 // pred_region
          %276 = dma.done [#allocation9], 16384
        $region60: #{tpu_custom_call.1} parent=39 // pred_fallthru
          _
        %s277 = sand.u32 %s32, 1
        %s278 = scalar_lea.sflag [#allocation3], %s277
        %s279 = sand.u32 %s32, 1
        %s280 = smul.addr %s279, 32
        %s281 = scalar_lea.vmem [#allocation2], %s280
        %p282 = pneg %p45
        %p283 = pneg %p42
        %p284 = pneg %p66
        %p285 = pneg %p63
        %p286 = pneg %p87
        %p287 = pneg %p84
        %p288 = pneg %p108
        %p289 = pneg %p105
        %p290 = pneg %p129
        %p291 = pneg %p126
        %p292 = pneg %p155
        %p293 = pneg %p152
        %s294 = sand.u32 %s142, 1
        %s295 = scalar_lea.sflag [#allocation4], %s294
        %s296 = sand.u32 %s142, 1
        %s297 = smul.addr %s296, 32
        %s298 = scalar_lea.vmem [#allocation11], %s297
        %v299 = vld [vmem:[%s256] sm:$0xff]
        %v300 = vld [vmem:[%s256 + $0x8] sm:$0xff]
        %v301 = vld [vmem:[%s256 + $0x10] sm:$0xff]
        %v302 = vld [vmem:[%s256 + $0x18] sm:$0xff]
        %v303 = vmul.f32 %v299, %v299
        %v304 = vmul.f32 %v300, %v300
        %v305 = vmul.f32 %v301, %v301
        %v306 = vmul.f32 %v302, %v302
        %v307 = vadd.f32 %v303, %v304
        %v308 = vadd.f32 %v307, %v305
        %v309 = vadd.f32 %v308, %v306
        %310 = vadd.xlane.f32.xlu0 %v309
        %v311 = vpop.xlane.xlu0 %310
        %v312 = vrcp.pop 512.0
        %v313 = vmul.f32 %v311, %v312
        %v314 = vadd.f32 %v313, 1e-08
        %v315 = vrsqrt.pop %v314
        %v316 = vmul.f32 %v299, %v315
        %v317 = vmul.f32 %v300, %v315
        %v318 = vmul.f32 %v301, %v315
        %v319 = vmul.f32 %v302, %v315
        %v320 = vpack.c.bf16 %v316, %v316
        %v321 = vpack.c.bf16 %v317, %v317
        %v322 = vpack.c.bf16 %v318, %v318
        %v323 = vpack.c.bf16 %v319, %v319
        %v324 = vld [vmem:[#allocation5] sm:$0xff]
        %v325 = vld [vmem:[#allocation5 + $0x8] sm:$0xff]
        %v326 = vld [vmem:[#allocation5 + $0x10] sm:$0xff]
        %v327 = vld [vmem:[#allocation5 + $0x18] sm:$0xff]
        %v328 = vld [vmem:[#allocation5 + $0x20] sm:$0xff]
        %v329 = vld [vmem:[#allocation5 + $0x28] sm:$0xff]
        %v330 = vld [vmem:[#allocation5 + $0x30] sm:$0xff]
        %v331 = vld [vmem:[#allocation5 + $0x38] sm:$0xff]
        %v332 = vld [vmem:[#allocation5 + $0x40] sm:$0xff]
        %v333 = vld [vmem:[#allocation5 + $0x48] sm:$0xff]
        %v334 = vld [vmem:[#allocation5 + $0x50] sm:$0xff]
        %v335 = vld [vmem:[#allocation5 + $0x58] sm:$0xff]
        %v336 = vld [vmem:[#allocation5 + $0x60] sm:$0xff]
        %v337 = vld [vmem:[#allocation5 + $0x68] sm:$0xff]
        %v338 = vld [vmem:[#allocation5 + $0x70] sm:$0xff]
        %v339 = vld [vmem:[#allocation5 + $0x78] sm:$0xff]
        %v340 = vld [vmem:[#allocation5 + $0x80] sm:$0xff]
        %v341 = vld [vmem:[#allocation5 + $0x88] sm:$0xff]
        %v342 = vld [vmem:[#allocation5 + $0x90] sm:$0xff]
        %v343 = vld [vmem:[#allocation5 + $0x98] sm:$0xff]
        %v344 = vld [vmem:[#allocation5 + $0xa0] sm:$0xff]
        %v345 = vld [vmem:[#allocation5 + $0xa8] sm:$0xff]
        %v346 = vld [vmem:[#allocation5 + $0xb0] sm:$0xff]
        %v347 = vld [vmem:[#allocation5 + $0xb8] sm:$0xff]
        %v348 = vld [vmem:[#allocation5 + $0xc0] sm:$0xff]
        %v349 = vld [vmem:[#allocation5 + $0xc8] sm:$0xff]
        %v350 = vld [vmem:[#allocation5 + $0xd0] sm:$0xff]
        %v351 = vld [vmem:[#allocation5 + $0xd8] sm:$0xff]
        %v352 = vld [vmem:[#allocation5 + $0xe0] sm:$0xff]
        %v353 = vld [vmem:[#allocation5 + $0xe8] sm:$0xff]
        %v354 = vld [vmem:[#allocation5 + $0xf0] sm:$0xff]
        %v355 = vld [vmem:[#allocation5 + $0xf8] sm:$0xff]
        %v356 = vld [vmem:[#allocation5 + $0x100] sm:$0xff]
        %v357 = vld [vmem:[#allocation5 + $0x108] sm:$0xff]
        %v358 = vld [vmem:[#allocation5 + $0x110] sm:$0xff]
        %v359 = vld [vmem:[#allocation5 + $0x118] sm:$0xff]
        %v360 = vld [vmem:[#allocation5 + $0x120] sm:$0xff]
        %v361 = vld [vmem:[#allocation5 + $0x128] sm:$0xff]
        %v362 = vld [vmem:[#allocation5 + $0x130] sm:$0xff]
        %v363 = vld [vmem:[#allocation5 + $0x138] sm:$0xff]
        %v364 = vld [vmem:[#allocation5 + $0x140] sm:$0xff]
        %v365 = vld [vmem:[#allocation5 + $0x148] sm:$0xff]
        %v366 = vld [vmem:[#allocation5 + $0x150] sm:$0xff]
        %v367 = vld [vmem:[#allocation5 + $0x158] sm:$0xff]
        %v368 = vld [vmem:[#allocation5 + $0x160] sm:$0xff]
        %v369 = vld [vmem:[#allocation5 + $0x168] sm:$0xff]
        %v370 = vld [vmem:[#allocation5 + $0x170] sm:$0xff]
        %v371 = vld [vmem:[#allocation5 + $0x178] sm:$0xff]
        %v372 = vld [vmem:[#allocation5 + $0x180] sm:$0xff]
        %v373 = vld [vmem:[#allocation5 + $0x188] sm:$0xff]
        %v374 = vld [vmem:[#allocation5 + $0x190] sm:$0xff]
        %v375 = vld [vmem:[#allocation5 + $0x198] sm:$0xff]
        %v376 = vld [vmem:[#allocation5 + $0x1a0] sm:$0xff]
        %v377 = vld [vmem:[#allocation5 + $0x1a8] sm:$0xff]
        %v378 = vld [vmem:[#allocation5 + $0x1b0] sm:$0xff]
        %v379 = vld [vmem:[#allocation5 + $0x1b8] sm:$0xff]
        %v380 = vld [vmem:[#allocation5 + $0x1c0] sm:$0xff]
        %v381 = vld [vmem:[#allocation5 + $0x1c8] sm:$0xff]
        %v382 = vld [vmem:[#allocation5 + $0x1d0] sm:$0xff]
        %v383 = vld [vmem:[#allocation5 + $0x1d8] sm:$0xff]
        %v384 = vld [vmem:[#allocation5 + $0x1e0] sm:$0xff]
        %v385 = vld [vmem:[#allocation5 + $0x1e8] sm:$0xff]
        %v386 = vld [vmem:[#allocation5 + $0x1f0] sm:$0xff]
        %v387 = vld [vmem:[#allocation5 + $0x1f8] sm:$0xff]
        %v388 = vld [vmem:[#allocation5 + $0x200] sm:$0xff]
        %v389 = vld [vmem:[#allocation5 + $0x208] sm:$0xff]
        %v390 = vld [vmem:[#allocation5 + $0x210] sm:$0xff]
        %v391 = vld [vmem:[#allocation5 + $0x218] sm:$0xff]
        %v392 = vld [vmem:[#allocation5 + $0x220] sm:$0xff]
        %v393 = vld [vmem:[#allocation5 + $0x228] sm:$0xff]
        %v394 = vld [vmem:[#allocation5 + $0x230] sm:$0xff]
        %v395 = vld [vmem:[#allocation5 + $0x238] sm:$0xff]
        %v396 = vld [vmem:[#allocation5 + $0x240] sm:$0xff]
        %v397 = vld [vmem:[#allocation5 + $0x248] sm:$0xff]
        %v398 = vld [vmem:[#allocation5 + $0x250] sm:$0xff]
        %v399 = vld [vmem:[#allocation5 + $0x258] sm:$0xff]
        %v400 = vld [vmem:[#allocation5 + $0x260] sm:$0xff]
        %v401 = vld [vmem:[#allocation5 + $0x268] sm:$0xff]
        %v402 = vld [vmem:[#allocation5 + $0x270] sm:$0xff]
        %v403 = vld [vmem:[#allocation5 + $0x278] sm:$0xff]
        %v404 = vld [vmem:[#allocation5 + $0x280] sm:$0xff]
        %v405 = vld [vmem:[#allocation5 + $0x288] sm:$0xff]
        %v406 = vld [vmem:[#allocation5 + $0x290] sm:$0xff]
        %v407 = vld [vmem:[#allocation5 + $0x298] sm:$0xff]
        %v408 = vld [vmem:[#allocation5 + $0x2a0] sm:$0xff]
        %v409 = vld [vmem:[#allocation5 + $0x2a8] sm:$0xff]
        %v410 = vld [vmem:[#allocation5 + $0x2b0] sm:$0xff]
        %v411 = vld [vmem:[#allocation5 + $0x2b8] sm:$0xff]
        %v412 = vld [vmem:[#allocation5 + $0x2c0] sm:$0xff]
        %v413 = vld [vmem:[#allocation5 + $0x2c8] sm:$0xff]
        %v414 = vld [vmem:[#allocation5 + $0x2d0] sm:$0xff]
        %v415 = vld [vmem:[#allocation5 + $0x2d8] sm:$0xff]
        %v416 = vld [vmem:[#allocation5 + $0x2e0] sm:$0xff]
        %v417 = vld [vmem:[#allocation5 + $0x2e8] sm:$0xff]
        %v418 = vld [vmem:[#allocation5 + $0x2f0] sm:$0xff]
        %v419 = vld [vmem:[#allocation5 + $0x2f8] sm:$0xff]
        %v420 = vld [vmem:[#allocation5 + $0x300] sm:$0xff]
        %v421 = vld [vmem:[#allocation5 + $0x308] sm:$0xff]
        %v422 = vld [vmem:[#allocation5 + $0x310] sm:$0xff]
        %v423 = vld [vmem:[#allocation5 + $0x318] sm:$0xff]
        %v424 = vld [vmem:[#allocation5 + $0x320] sm:$0xff]
        %v425 = vld [vmem:[#allocation5 + $0x328] sm:$0xff]
        %v426 = vld [vmem:[#allocation5 + $0x330] sm:$0xff]
        %v427 = vld [vmem:[#allocation5 + $0x338] sm:$0xff]
        %v428 = vld [vmem:[#allocation5 + $0x340] sm:$0xff]
        %v429 = vld [vmem:[#allocation5 + $0x348] sm:$0xff]
        %v430 = vld [vmem:[#allocation5 + $0x350] sm:$0xff]
        %v431 = vld [vmem:[#allocation5 + $0x358] sm:$0xff]
        %v432 = vld [vmem:[#allocation5 + $0x360] sm:$0xff]
        %v433 = vld [vmem:[#allocation5 + $0x368] sm:$0xff]
        %v434 = vld [vmem:[#allocation5 + $0x370] sm:$0xff]
        %v435 = vld [vmem:[#allocation5 + $0x378] sm:$0xff]
        %v436 = vld [vmem:[#allocation5 + $0x380] sm:$0xff]
        %v437 = vld [vmem:[#allocation5 + $0x388] sm:$0xff]
        %v438 = vld [vmem:[#allocation5 + $0x390] sm:$0xff]
        %v439 = vld [vmem:[#allocation5 + $0x398] sm:$0xff]
        %v440 = vld [vmem:[#allocation5 + $0x3a0] sm:$0xff]
        %v441 = vld [vmem:[#allocation5 + $0x3a8] sm:$0xff]
        %v442 = vld [vmem:[#allocation5 + $0x3b0] sm:$0xff]
        %v443 = vld [vmem:[#allocation5 + $0x3b8] sm:$0xff]
        %v444 = vld [vmem:[#allocation5 + $0x3c0] sm:$0xff]
        %v445 = vld [vmem:[#allocation5 + $0x3c8] sm:$0xff]
        %v446 = vld [vmem:[#allocation5 + $0x3d0] sm:$0xff]
        %v447 = vld [vmem:[#allocation5 + $0x3d8] sm:$0xff]
        %v448 = vld [vmem:[#allocation5 + $0x3e0] sm:$0xff]
        %v449 = vld [vmem:[#allocation5 + $0x3e8] sm:$0xff]
        %v450 = vld [vmem:[#allocation5 + $0x3f0] sm:$0xff]
        %v451 = vld [vmem:[#allocation5 + $0x3f8] sm:$0xff]
        %v580 = vunpack.c.l.b16 %v324
        %v581 = vunpack.c.h.b16 %v324
        %v582 = vunpack.c.l.b16 %v325
        %v583 = vunpack.c.h.b16 %v325
        %v584 = vunpack.c.l.b16 %v326
        %v585 = vunpack.c.h.b16 %v326
        %v586 = vunpack.c.l.b16 %v327
        %v587 = vunpack.c.h.b16 %v327
        %v588 = vunpack.c.l.b16 %v328
        %v589 = vunpack.c.h.b16 %v328
        %v590 = vunpack.c.l.b16 %v329
        %v591 = vunpack.c.h.b16 %v329
        %v592 = vunpack.c.l.b16 %v330
        %v593 = vunpack.c.h.b16 %v330
        %v594 = vunpack.c.l.b16 %v331
        %v595 = vunpack.c.h.b16 %v331
        %v596 = vunpack.c.l.b16 %v332
        %v597 = vunpack.c.h.b16 %v332
        %v598 = vunpack.c.l.b16 %v333
        %v599 = vunpack.c.h.b16 %v333
        %v600 = vunpack.c.l.b16 %v334
        %v601 = vunpack.c.h.b16 %v334
        %v602 = vunpack.c.l.b16 %v335
        %v603 = vunpack.c.h.b16 %v335
        %v604 = vunpack.c.l.b16 %v336
        %v605 = vunpack.c.h.b16 %v336
        %v606 = vunpack.c.l.b16 %v337
        %v607 = vunpack.c.h.b16 %v337
        %v608 = vunpack.c.l.b16 %v338
        %v609 = vunpack.c.h.b16 %v338
        %v610 = vunpack.c.l.b16 %v339
        %v611 = vunpack.c.h.b16 %v339
        %v612 = vunpack.c.l.b16 %v340
        %v613 = vunpack.c.h.b16 %v340
        %v614 = vunpack.c.l.b16 %v341
        %v615 = vunpack.c.h.b16 %v341
        %v616 = vunpack.c.l.b16 %v342
        %v617 = vunpack.c.h.b16 %v342
        %v618 = vunpack.c.l.b16 %v343
        %v619 = vunpack.c.h.b16 %v343
        %v620 = vunpack.c.l.b16 %v344
        %v621 = vunpack.c.h.b16 %v344
        %v622 = vunpack.c.l.b16 %v345
        %v623 = vunpack.c.h.b16 %v345
        %v624 = vunpack.c.l.b16 %v346
        %v625 = vunpack.c.h.b16 %v346
        %v626 = vunpack.c.l.b16 %v347
        %v627 = vunpack.c.h.b16 %v347
        %v628 = vunpack.c.l.b16 %v348
        %v629 = vunpack.c.h.b16 %v348
        %v630 = vunpack.c.l.b16 %v349
        %v631 = vunpack.c.h.b16 %v349
        %v632 = vunpack.c.l.b16 %v350
        %v633 = vunpack.c.h.b16 %v350
        %v634 = vunpack.c.l.b16 %v351
        %v635 = vunpack.c.h.b16 %v351
        %v636 = vunpack.c.l.b16 %v352
        %v637 = vunpack.c.h.b16 %v352
        %v638 = vunpack.c.l.b16 %v353
        %v639 = vunpack.c.h.b16 %v353
        %v640 = vunpack.c.l.b16 %v354
        %v641 = vunpack.c.h.b16 %v354
        %v642 = vunpack.c.l.b16 %v355
        %v643 = vunpack.c.h.b16 %v355
        %v644 = vunpack.c.l.b16 %v356
        %v645 = vunpack.c.h.b16 %v356
        %v646 = vunpack.c.l.b16 %v357
        %v647 = vunpack.c.h.b16 %v357
        %v648 = vunpack.c.l.b16 %v358
        %v649 = vunpack.c.h.b16 %v358
        %v650 = vunpack.c.l.b16 %v359
        %v651 = vunpack.c.h.b16 %v359
        %v652 = vunpack.c.l.b16 %v360
        %v653 = vunpack.c.h.b16 %v360
        %v654 = vunpack.c.l.b16 %v361
        %v655 = vunpack.c.h.b16 %v361
        %v656 = vunpack.c.l.b16 %v362
        %v657 = vunpack.c.h.b16 %v362
        %v658 = vunpack.c.l.b16 %v363
        %v659 = vunpack.c.h.b16 %v363
        %v660 = vunpack.c.l.b16 %v364
        %v661 = vunpack.c.h.b16 %v364
        %v662 = vunpack.c.l.b16 %v365
        %v663 = vunpack.c.h.b16 %v365
        %v664 = vunpack.c.l.b16 %v366
        %v665 = vunpack.c.h.b16 %v366
        %v666 = vunpack.c.l.b16 %v367
        %v667 = vunpack.c.h.b16 %v367
        %v668 = vunpack.c.l.b16 %v368
        %v669 = vunpack.c.h.b16 %v368
        %v670 = vunpack.c.l.b16 %v369
        %v671 = vunpack.c.h.b16 %v369
        %v672 = vunpack.c.l.b16 %v370
        %v673 = vunpack.c.h.b16 %v370
        %v674 = vunpack.c.l.b16 %v371
        %v675 = vunpack.c.h.b16 %v371
        %v676 = vunpack.c.l.b16 %v372
        %v677 = vunpack.c.h.b16 %v372
        %v678 = vunpack.c.l.b16 %v373
        %v679 = vunpack.c.h.b16 %v373
        %v680 = vunpack.c.l.b16 %v374
        %v681 = vunpack.c.h.b16 %v374
        %v682 = vunpack.c.l.b16 %v375
        %v683 = vunpack.c.h.b16 %v375
        %v684 = vunpack.c.l.b16 %v376
        %v685 = vunpack.c.h.b16 %v376
        %v686 = vunpack.c.l.b16 %v377
        %v687 = vunpack.c.h.b16 %v377
        %v688 = vunpack.c.l.b16 %v378
        %v689 = vunpack.c.h.b16 %v378
        %v690 = vunpack.c.l.b16 %v379
        %v691 = vunpack.c.h.b16 %v379
        %v692 = vunpack.c.l.b16 %v380
        %v693 = vunpack.c.h.b16 %v380
        %v694 = vunpack.c.l.b16 %v381
        %v695 = vunpack.c.h.b16 %v381
        %v696 = vunpack.c.l.b16 %v382
        %v697 = vunpack.c.h.b16 %v382
        %v698 = vunpack.c.l.b16 %v383
        %v699 = vunpack.c.h.b16 %v383
        %v700 = vunpack.c.l.b16 %v384
        %v701 = vunpack.c.h.b16 %v384
        %v702 = vunpack.c.l.b16 %v385
        %v703 = vunpack.c.h.b16 %v385
        %v704 = vunpack.c.l.b16 %v386
        %v705 = vunpack.c.h.b16 %v386
        %v706 = vunpack.c.l.b16 %v387
        %v707 = vunpack.c.h.b16 %v387
        %v708 = vunpack.c.l.b16 %v388
        %v709 = vunpack.c.h.b16 %v388
        %v710 = vunpack.c.l.b16 %v389
        %v711 = vunpack.c.h.b16 %v389
        %v712 = vunpack.c.l.b16 %v390
        %v713 = vunpack.c.h.b16 %v390
        %v714 = vunpack.c.l.b16 %v391
        %v715 = vunpack.c.h.b16 %v391
        %v716 = vunpack.c.l.b16 %v392
        %v717 = vunpack.c.h.b16 %v392
        %v718 = vunpack.c.l.b16 %v393
        %v719 = vunpack.c.h.b16 %v393
        %v720 = vunpack.c.l.b16 %v394
        %v721 = vunpack.c.h.b16 %v394
        %v722 = vunpack.c.l.b16 %v395
        %v723 = vunpack.c.h.b16 %v395
        %v724 = vunpack.c.l.b16 %v396
        %v725 = vunpack.c.h.b16 %v396
        %v726 = vunpack.c.l.b16 %v397
        %v727 = vunpack.c.h.b16 %v397
        %v728 = vunpack.c.l.b16 %v398
        %v729 = vunpack.c.h.b16 %v398
        %v730 = vunpack.c.l.b16 %v399
        %v731 = vunpack.c.h.b16 %v399
        %v732 = vunpack.c.l.b16 %v400
        %v733 = vunpack.c.h.b16 %v400
        %v734 = vunpack.c.l.b16 %v401
        %v735 = vunpack.c.h.b16 %v401
        %v736 = vunpack.c.l.b16 %v402
        %v737 = vunpack.c.h.b16 %v402
        %v738 = vunpack.c.l.b16 %v403
        %v739 = vunpack.c.h.b16 %v403
        %v740 = vunpack.c.l.b16 %v404
        %v741 = vunpack.c.h.b16 %v404
        %v742 = vunpack.c.l.b16 %v405
        %v743 = vunpack.c.h.b16 %v405
        %v744 = vunpack.c.l.b16 %v406
        %v745 = vunpack.c.h.b16 %v406
        %v746 = vunpack.c.l.b16 %v407
        %v747 = vunpack.c.h.b16 %v407
        %v748 = vunpack.c.l.b16 %v408
        %v749 = vunpack.c.h.b16 %v408
        %v750 = vunpack.c.l.b16 %v409
        %v751 = vunpack.c.h.b16 %v409
        %v752 = vunpack.c.l.b16 %v410
        %v753 = vunpack.c.h.b16 %v410
        %v754 = vunpack.c.l.b16 %v411
        %v755 = vunpack.c.h.b16 %v411
        %v756 = vunpack.c.l.b16 %v412
        %v757 = vunpack.c.h.b16 %v412
        %v758 = vunpack.c.l.b16 %v413
        %v759 = vunpack.c.h.b16 %v413
        %v760 = vunpack.c.l.b16 %v414
        %v761 = vunpack.c.h.b16 %v414
        %v762 = vunpack.c.l.b16 %v415
        %v763 = vunpack.c.h.b16 %v415
        %v764 = vunpack.c.l.b16 %v416
        %v765 = vunpack.c.h.b16 %v416
        %v766 = vunpack.c.l.b16 %v417
        %v767 = vunpack.c.h.b16 %v417
        %v768 = vunpack.c.l.b16 %v418
        %v769 = vunpack.c.h.b16 %v418
        %v770 = vunpack.c.l.b16 %v419
        %v771 = vunpack.c.h.b16 %v419
        %v772 = vunpack.c.l.b16 %v420
        %v773 = vunpack.c.h.b16 %v420
        %v774 = vunpack.c.l.b16 %v421
        %v775 = vunpack.c.h.b16 %v421
        %v776 = vunpack.c.l.b16 %v422
        %v777 = vunpack.c.h.b16 %v422
        %v778 = vunpack.c.l.b16 %v423
        %v779 = vunpack.c.h.b16 %v423
        %v780 = vunpack.c.l.b16 %v424
        %v781 = vunpack.c.h.b16 %v424
        %v782 = vunpack.c.l.b16 %v425
        %v783 = vunpack.c.h.b16 %v425
        %v784 = vunpack.c.l.b16 %v426
        %v785 = vunpack.c.h.b16 %v426
        %v786 = vunpack.c.l.b16 %v427
        %v787 = vunpack.c.h.b16 %v427
        %v788 = vunpack.c.l.b16 %v428
        %v789 = vunpack.c.h.b16 %v428
        %v790 = vunpack.c.l.b16 %v429
        %v791 = vunpack.c.h.b16 %v429
        %v792 = vunpack.c.l.b16 %v430
        %v793 = vunpack.c.h.b16 %v430
        %v794 = vunpack.c.l.b16 %v431
        %v795 = vunpack.c.h.b16 %v431
        %v796 = vunpack.c.l.b16 %v432
        %v797 = vunpack.c.h.b16 %v432
        %v798 = vunpack.c.l.b16 %v433
        %v799 = vunpack.c.h.b16 %v433
        %v800 = vunpack.c.l.b16 %v434
        %v801 = vunpack.c.h.b16 %v434
        %v802 = vunpack.c.l.b16 %v435
        %v803 = vunpack.c.h.b16 %v435
        %v804 = vunpack.c.l.b16 %v436
        %v805 = vunpack.c.h.b16 %v436
        %v806 = vunpack.c.l.b16 %v437
        %v807 = vunpack.c.h.b16 %v437
        %v808 = vunpack.c.l.b16 %v438
        %v809 = vunpack.c.h.b16 %v438
        %v810 = vunpack.c.l.b16 %v439
        %v811 = vunpack.c.h.b16 %v439
        %v812 = vunpack.c.l.b16 %v440
        %v813 = vunpack.c.h.b16 %v440
        %v814 = vunpack.c.l.b16 %v441
        %v815 = vunpack.c.h.b16 %v441
        %v816 = vunpack.c.l.b16 %v442
        %v817 = vunpack.c.h.b16 %v442
        %v818 = vunpack.c.l.b16 %v443
        %v819 = vunpack.c.h.b16 %v443
        %v820 = vunpack.c.l.b16 %v444
        %v821 = vunpack.c.h.b16 %v444
        %v822 = vunpack.c.l.b16 %v445
        %v823 = vunpack.c.h.b16 %v445
        %v824 = vunpack.c.l.b16 %v446
        %v825 = vunpack.c.h.b16 %v446
        %v826 = vunpack.c.l.b16 %v447
        %v827 = vunpack.c.h.b16 %v447
        %v828 = vunpack.c.l.b16 %v448
        %v829 = vunpack.c.h.b16 %v448
        %v830 = vunpack.c.l.b16 %v449
        %v831 = vunpack.c.h.b16 %v449
        %v832 = vunpack.c.l.b16 %v450
        %v833 = vunpack.c.h.b16 %v450
        %v834 = vunpack.c.l.b16 %v451
        %v835 = vunpack.c.h.b16 %v451
        %v836 = vpack.c.b16 %v584, %v580
        %v837 = vpack.c.b16 %v585, %v581
        %v838 = vpack.c.b16 %v586, %v582
        %v839 = vpack.c.b16 %v587, %v583
        %v840 = vpack.c.b16 %v592, %v588
        %v841 = vpack.c.b16 %v593, %v589
        %v842 = vpack.c.b16 %v594, %v590
        %v843 = vpack.c.b16 %v595, %v591
        %v844 = vpack.c.b16 %v600, %v596
        %v845 = vpack.c.b16 %v601, %v597
        %v846 = vpack.c.b16 %v602, %v598
        %v847 = vpack.c.b16 %v603, %v599
        %v848 = vpack.c.b16 %v608, %v604
        %v849 = vpack.c.b16 %v609, %v605
        %v850 = vpack.c.b16 %v610, %v606
        %v851 = vpack.c.b16 %v611, %v607
        %v852 = vpack.c.b16 %v616, %v612
        %v853 = vpack.c.b16 %v617, %v613
        %v854 = vpack.c.b16 %v618, %v614
        %v855 = vpack.c.b16 %v619, %v615
        %v856 = vpack.c.b16 %v624, %v620
        %v857 = vpack.c.b16 %v625, %v621
        %v858 = vpack.c.b16 %v626, %v622
        %v859 = vpack.c.b16 %v627, %v623
        %v860 = vpack.c.b16 %v632, %v628
        %v861 = vpack.c.b16 %v633, %v629
        %v862 = vpack.c.b16 %v634, %v630
        %v863 = vpack.c.b16 %v635, %v631
        %v864 = vpack.c.b16 %v640, %v636
        %v865 = vpack.c.b16 %v641, %v637
        %v866 = vpack.c.b16 %v642, %v638
        %v867 = vpack.c.b16 %v643, %v639
        %v868 = vpack.c.b16 %v648, %v644
        %v869 = vpack.c.b16 %v649, %v645
        %v870 = vpack.c.b16 %v650, %v646
        %v871 = vpack.c.b16 %v651, %v647
        %v872 = vpack.c.b16 %v656, %v652
        %v873 = vpack.c.b16 %v657, %v653
        %v874 = vpack.c.b16 %v658, %v654
        %v875 = vpack.c.b16 %v659, %v655
        %v876 = vpack.c.b16 %v664, %v660
        %v877 = vpack.c.b16 %v665, %v661
        %v878 = vpack.c.b16 %v666, %v662
        %v879 = vpack.c.b16 %v667, %v663
        %v880 = vpack.c.b16 %v672, %v668
        %v881 = vpack.c.b16 %v673, %v669
        %v882 = vpack.c.b16 %v674, %v670
        %v883 = vpack.c.b16 %v675, %v671
        %v884 = vpack.c.b16 %v680, %v676
        %v885 = vpack.c.b16 %v681, %v677
        %v886 = vpack.c.b16 %v682, %v678
        %v887 = vpack.c.b16 %v683, %v679
        %v888 = vpack.c.b16 %v688, %v684
        %v889 = vpack.c.b16 %v689, %v685
        %v890 = vpack.c.b16 %v690, %v686
        %v891 = vpack.c.b16 %v691, %v687
        %v892 = vpack.c.b16 %v696, %v692
        %v893 = vpack.c.b16 %v697, %v693
        %v894 = vpack.c.b16 %v698, %v694
        %v895 = vpack.c.b16 %v699, %v695
        %v896 = vpack.c.b16 %v704, %v700
        %v897 = vpack.c.b16 %v705, %v701
        %v898 = vpack.c.b16 %v706, %v702
        %v899 = vpack.c.b16 %v707, %v703
        %v900 = vpack.c.b16 %v712, %v708
        %v901 = vpack.c.b16 %v713, %v709
        %v902 = vpack.c.b16 %v714, %v710
        %v903 = vpack.c.b16 %v715, %v711
        %v904 = vpack.c.b16 %v720, %v716
        %v905 = vpack.c.b16 %v721, %v717
        %v906 = vpack.c.b16 %v722, %v718
        %v907 = vpack.c.b16 %v723, %v719
        %v908 = vpack.c.b16 %v728, %v724
        %v909 = vpack.c.b16 %v729, %v725
        %v910 = vpack.c.b16 %v730, %v726
        %v911 = vpack.c.b16 %v731, %v727
        %v912 = vpack.c.b16 %v736, %v732
        %v913 = vpack.c.b16 %v737, %v733
        %v914 = vpack.c.b16 %v738, %v734
        %v915 = vpack.c.b16 %v739, %v735
        %v916 = vpack.c.b16 %v744, %v740
        %v917 = vpack.c.b16 %v745, %v741
        %v918 = vpack.c.b16 %v746, %v742
        %v919 = vpack.c.b16 %v747, %v743
        %v920 = vpack.c.b16 %v752, %v748
        %v921 = vpack.c.b16 %v753, %v749
        %v922 = vpack.c.b16 %v754, %v750
        %v923 = vpack.c.b16 %v755, %v751
        %v924 = vpack.c.b16 %v760, %v756
        %v925 = vpack.c.b16 %v761, %v757
        %v926 = vpack.c.b16 %v762, %v758
        %v927 = vpack.c.b16 %v763, %v759
        %v928 = vpack.c.b16 %v768, %v764
        %v929 = vpack.c.b16 %v769, %v765
        %v930 = vpack.c.b16 %v770, %v766
        %v931 = vpack.c.b16 %v771, %v767
        %v932 = vpack.c.b16 %v776, %v772
        %v933 = vpack.c.b16 %v777, %v773
        %v934 = vpack.c.b16 %v778, %v774
        %v935 = vpack.c.b16 %v779, %v775
        %v936 = vpack.c.b16 %v784, %v780
        %v937 = vpack.c.b16 %v785, %v781
        %v938 = vpack.c.b16 %v786, %v782
        %v939 = vpack.c.b16 %v787, %v783
        %v940 = vpack.c.b16 %v792, %v788
        %v941 = vpack.c.b16 %v793, %v789
        %v942 = vpack.c.b16 %v794, %v790
        %v943 = vpack.c.b16 %v795, %v791
        %v944 = vpack.c.b16 %v800, %v796
        %v945 = vpack.c.b16 %v801, %v797
        %v946 = vpack.c.b16 %v802, %v798
        %v947 = vpack.c.b16 %v803, %v799
        %v948 = vpack.c.b16 %v808, %v804
        %v949 = vpack.c.b16 %v809, %v805
        %v950 = vpack.c.b16 %v810, %v806
        %v951 = vpack.c.b16 %v811, %v807
        %v952 = vpack.c.b16 %v816, %v812
        %v953 = vpack.c.b16 %v817, %v813
        %v954 = vpack.c.b16 %v818, %v814
        %v955 = vpack.c.b16 %v819, %v815
        %v956 = vpack.c.b16 %v824, %v820
        %v957 = vpack.c.b16 %v825, %v821
        %v958 = vpack.c.b16 %v826, %v822
        %v959 = vpack.c.b16 %v827, %v823
        %v960 = vpack.c.b16 %v832, %v828
        %v961 = vpack.c.b16 %v833, %v829
        %v962 = vpack.c.b16 %v834, %v830
        %v963 = vpack.c.b16 %v835, %v831
        %1092 = vmatprep.subr.bf16.mxu0 %v865
        %1093 = vmatpush1.bf16.msra.mxu0 %v864
        %1094 = vmatprep.subr.bf16.mxu0 %v861
        %1095 = vmatpush1.bf16.msra.mxu0 %v860
        %1096 = vmatprep.subr.bf16.mxu0 %v857
        %1097 = vmatpush1.bf16.msra.mxu0 %v856
        %1098 = vmatprep.subr.bf16.mxu0 %v853
        %1099 = vmatpush1.bf16.msra.mxu0 %v852
        %1100 = vmatprep.subr.bf16.mxu0 %v849
        %1101 = vmatpush1.bf16.msra.mxu0 %v848
        %1102 = vmatprep.subr.bf16.mxu0 %v845
        %1103 = vmatpush1.bf16.msra.mxu0 %v844
        %1104 = vmatprep.subr.bf16.mxu0 %v841
        %1105 = vmatpush1.bf16.msra.mxu0 %v840
        %1106 = vmatprep.subr.bf16.mxu0 %v837
        %1107 = vmatpush1.bf16.msra.mxu0 %v836
        %1108 = vmatprep.subr.bf16.mxu0 %v897
        %1109 = vmatpush2.bf16.msra.mxu0 %v896
        %1110 = vmatprep.subr.bf16.mxu0 %v893
        %1111 = vmatpush2.bf16.msra.mxu0 %v892
        %1112 = vmatprep.subr.bf16.mxu0 %v889
        %1113 = vmatpush2.bf16.msra.mxu0 %v888
        %1114 = vmatprep.subr.bf16.mxu0 %v885
        %1115 = vmatpush2.bf16.msra.mxu0 %v884
        %1116 = vmatprep.subr.bf16.mxu0 %v881
        %1117 = vmatpush2.bf16.msra.mxu0 %v880
        %1118 = vmatprep.subr.bf16.mxu0 %v877
        %1119 = vmatpush2.bf16.msra.mxu0 %v876
        %1120 = vmatprep.subr.bf16.mxu0 %v873
        %1121 = vmatpush2.bf16.msra.mxu0 %v872
        %1122 = vmatprep.subr.bf16.mxu0 %v869
        %1123 = vmatpush2.bf16.msra.mxu0 %v868
        %1124 = vmatprep.mubr.bf16.mxu0 %v321
        %1125 = vmatmul.mubr.bf16.gmra.mxu0 %v320
        %v1126 = vpop.f32.mrf.mxu0
        %v1127 = vadd.f32 0.0, %v1126
        %v1128 = vpop.f32.mrf.mxu0
        %v1129 = vadd.f32 0.0, %v1128
        %v1130 = vpop.f32.mrf.mxu0
        %v1131 = vpop.f32.mrf.mxu0
        %1132 = vdwg.mxu0
        %1133 = vmatprep.subr.bf16.mxu0 %v929
        %1134 = vmatpush1.bf16.msra.mxu0 %v928
        %1135 = vmatprep.subr.bf16.mxu0 %v925
        %1136 = vmatpush1.bf16.msra.mxu0 %v924
        %1137 = vmatprep.subr.bf16.mxu0 %v921
        %1138 = vmatpush1.bf16.msra.mxu0 %v920
        %1139 = vmatprep.subr.bf16.mxu0 %v917
        %1140 = vmatpush1.bf16.msra.mxu0 %v916
        %1141 = vmatprep.subr.bf16.mxu0 %v913
        %1142 = vmatpush1.bf16.msra.mxu0 %v912
        %1143 = vmatprep.subr.bf16.mxu0 %v909
        %1144 = vmatpush1.bf16.msra.mxu0 %v908
        %1145 = vmatprep.subr.bf16.mxu0 %v905
        %1146 = vmatpush1.bf16.msra.mxu0 %v904
        %1147 = vmatprep.subr.bf16.mxu0 %v901
        %1148 = vmatpush1.bf16.msra.mxu0 %v900
        %1149 = vmatprep.subr.bf16.mxu0 %v961
        %1150 = vmatpush2.bf16.msra.mxu0 %v960
        %1151 = vmatprep.subr.bf16.mxu0 %v957
        %1152 = vmatpush2.bf16.msra.mxu0 %v956
        %1153 = vmatprep.subr.bf16.mxu0 %v953
        %1154 = vmatpush2.bf16.msra.mxu0 %v952
        %1155 = vmatprep.subr.bf16.mxu0 %v949
        %1156 = vmatpush2.bf16.msra.mxu0 %v948
        %1157 = vmatprep.subr.bf16.mxu0 %v945
        %1158 = vmatpush2.bf16.msra.mxu0 %v944
        %1159 = vmatprep.subr.bf16.mxu0 %v941
        %1160 = vmatpush2.bf16.msra.mxu0 %v940
        %1161 = vmatprep.subr.bf16.mxu0 %v937
        %1162 = vmatpush2.bf16.msra.mxu0 %v936
        %1163 = vmatprep.subr.bf16.mxu0 %v933
        %1164 = vmatpush2.bf16.msra.mxu0 %v932
        %1165 = vmatprep.mubr.bf16.mxu0 %v323
        %1166 = vmatmul.mubr.bf16.gmra.mxu0 %v322
        %v1167 = vpop.f32.mrf.mxu0
        %v1168 = vadd.f32 %v1127, %v1167
        %v1169 = vpop.f32.mrf.mxu0
        %v1170 = vadd.f32 %v1129, %v1169
        %v1171 = vpop.f32.mrf.mxu0
        %v1172 = vpop.f32.mrf.mxu0
        %1173 = vdwg.mxu0
        %1174 = vmatprep.subr.bf16.mxu0 %v867
        %1175 = vmatpush1.bf16.msra.mxu0 %v866
        %1176 = vmatprep.subr.bf16.mxu0 %v863
        %1177 = vmatpush1.bf16.msra.mxu0 %v862
        %1178 = vmatprep.subr.bf16.mxu0 %v859
        %1179 = vmatpush1.bf16.msra.mxu0 %v858
        %1180 = vmatprep.subr.bf16.mxu0 %v855
        %1181 = vmatpush1.bf16.msra.mxu0 %v854
        %1182 = vmatprep.subr.bf16.mxu0 %v851
        %1183 = vmatpush1.bf16.msra.mxu0 %v850
        %1184 = vmatprep.subr.bf16.mxu0 %v847
        %1185 = vmatpush1.bf16.msra.mxu0 %v846
        %1186 = vmatprep.subr.bf16.mxu0 %v843
        %1187 = vmatpush1.bf16.msra.mxu0 %v842
        %1188 = vmatprep.subr.bf16.mxu0 %v839
        %1189 = vmatpush1.bf16.msra.mxu0 %v838
        %1190 = vmatprep.subr.bf16.mxu0 %v899
        %1191 = vmatpush2.bf16.msra.mxu0 %v898
        %1192 = vmatprep.subr.bf16.mxu0 %v895
        %1193 = vmatpush2.bf16.msra.mxu0 %v894
        %1194 = vmatprep.subr.bf16.mxu0 %v891
        %1195 = vmatpush2.bf16.msra.mxu0 %v890
        %1196 = vmatprep.subr.bf16.mxu0 %v887
        %1197 = vmatpush2.bf16.msra.mxu0 %v886
        %1198 = vmatprep.subr.bf16.mxu0 %v883
        %1199 = vmatpush2.bf16.msra.mxu0 %v882
        %1200 = vmatprep.subr.bf16.mxu0 %v879
        %1201 = vmatpush2.bf16.msra.mxu0 %v878
        %1202 = vmatprep.subr.bf16.mxu0 %v875
        %1203 = vmatpush2.bf16.msra.mxu0 %v874
        %1204 = vmatprep.subr.bf16.mxu0 %v871
        %1205 = vmatpush2.bf16.msra.mxu0 %v870
        %1206 = vmatprep.mubr.bf16.mxu0 %v321
        %1207 = vmatmul.mubr.bf16.gmra.mxu0 %v320
        %v1208 = vpop.f32.mrf.mxu0
        %v1209 = vadd.f32 0.0, %v1208
        %v1210 = vpop.f32.mrf.mxu0
        %v1211 = vadd.f32 0.0, %v1210
        %v1212 = vpop.f32.mrf.mxu0
        %v1213 = vpop.f32.mrf.mxu0
        %1214 = vdwg.mxu0
        %1215 = vmatprep.subr.bf16.mxu0 %v931
        %1216 = vmatpush1.bf16.msra.mxu0 %v930
        %1217 = vmatprep.subr.bf16.mxu0 %v927
        %1218 = vmatpush1.bf16.msra.mxu0 %v926
        %1219 = vmatprep.subr.bf16.mxu0 %v923
        %1220 = vmatpush1.bf16.msra.mxu0 %v922
        %1221 = vmatprep.subr.bf16.mxu0 %v919
        %1222 = vmatpush1.bf16.msra.mxu0 %v918
        %1223 = vmatprep.subr.bf16.mxu0 %v915
        %1224 = vmatpush1.bf16.msra.mxu0 %v914
        %1225 = vmatprep.subr.bf16.mxu0 %v911
        %1226 = vmatpush1.bf16.msra.mxu0 %v910
        %1227 = vmatprep.subr.bf16.mxu0 %v907
        %1228 = vmatpush1.bf16.msra.mxu0 %v906
        %1229 = vmatprep.subr.bf16.mxu0 %v903
        %1230 = vmatpush1.bf16.msra.mxu0 %v902
        %1231 = vmatprep.subr.bf16.mxu0 %v963
        %1232 = vmatpush2.bf16.msra.mxu0 %v962
        %1233 = vmatprep.subr.bf16.mxu0 %v959
        %1234 = vmatpush2.bf16.msra.mxu0 %v958
        %1235 = vmatprep.subr.bf16.mxu0 %v955
        %1236 = vmatpush2.bf16.msra.mxu0 %v954
        %1237 = vmatprep.subr.bf16.mxu0 %v951
        %1238 = vmatpush2.bf16.msra.mxu0 %v950
        %1239 = vmatprep.subr.bf16.mxu0 %v947
        %1240 = vmatpush2.bf16.msra.mxu0 %v946
        %1241 = vmatprep.subr.bf16.mxu0 %v943
        %1242 = vmatpush2.bf16.msra.mxu0 %v942
        %1243 = vmatprep.subr.bf16.mxu0 %v939
        %1244 = vmatpush2.bf16.msra.mxu0 %v938
        %1245 = vmatprep.subr.bf16.mxu0 %v935
        %1246 = vmatpush2.bf16.msra.mxu0 %v934
        %1247 = vmatprep.mubr.bf16.mxu0 %v323
        %1248 = vmatmul.mubr.bf16.gmra.mxu0 %v322
        %v1249 = vpop.f32.mrf.mxu0
        %v1250 = vadd.f32 %v1209, %v1249
        %v1251 = vpop.f32.mrf.mxu0
        %v1252 = vadd.f32 %v1211, %v1251
        %v1253 = vpop.f32.mrf.mxu0
        %v1254 = vpop.f32.mrf.mxu0
        %1255 = vdwg.mxu0
        %vm1256 = vcmp.ge.f32.partialorder %v1168, 0.0
        %vm1257 = vcmp.ge.f32.partialorder %v1170, 0.0
        %vm1258 = vcmp.ge.f32.partialorder %v1250, 0.0
        %vm1259 = vcmp.ge.f32.partialorder %v1252, 0.0
        %v1260 = vsel %vm1256, 1.4142135, 0.28284273
        %v1261 = vsel %vm1257, 1.4142135, 0.28284273
        %v1262 = vsel %vm1258, 1.4142135, 0.28284273
        %v1263 = vsel %vm1259, 1.4142135, 0.28284273
        %v1264 = vmul.f32 %v1168, %v1260
        %v1265 = vmul.f32 %v1170, %v1261
        %v1266 = vmul.f32 %v1250, %v1262
        %v1267 = vmul.f32 %v1252, %v1263
        %v1268 = vpack.c.bf16 %v1264, %v1264
        %v1269 = vpack.c.bf16 %v1265, %v1265
        %v1270 = vpack.c.bf16 %v1266, %v1266
        %v1271 = vpack.c.bf16 %v1267, %v1267
        %v1272 = vld [vmem:[#allocation7] sm:$0xff]
        %v1273 = vld [vmem:[#allocation7 + $0x8] sm:$0xff]
        %v1274 = vld [vmem:[#allocation7 + $0x10] sm:$0xff]
        %v1275 = vld [vmem:[#allocation7 + $0x18] sm:$0xff]
        %v1276 = vld [vmem:[#allocation7 + $0x20] sm:$0xff]
        %v1277 = vld [vmem:[#allocation7 + $0x28] sm:$0xff]
        %v1278 = vld [vmem:[#allocation7 + $0x30] sm:$0xff]
        %v1279 = vld [vmem:[#allocation7 + $0x38] sm:$0xff]
        %v1280 = vld [vmem:[#allocation7 + $0x40] sm:$0xff]
        %v1281 = vld [vmem:[#allocation7 + $0x48] sm:$0xff]
        %v1282 = vld [vmem:[#allocation7 + $0x50] sm:$0xff]
        %v1283 = vld [vmem:[#allocation7 + $0x58] sm:$0xff]
        %v1284 = vld [vmem:[#allocation7 + $0x60] sm:$0xff]
        %v1285 = vld [vmem:[#allocation7 + $0x68] sm:$0xff]
        %v1286 = vld [vmem:[#allocation7 + $0x70] sm:$0xff]
        %v1287 = vld [vmem:[#allocation7 + $0x78] sm:$0xff]
        %v1288 = vld [vmem:[#allocation7 + $0x80] sm:$0xff]
        %v1289 = vld [vmem:[#allocation7 + $0x88] sm:$0xff]
        %v1290 = vld [vmem:[#allocation7 + $0x90] sm:$0xff]
        %v1291 = vld [vmem:[#allocation7 + $0x98] sm:$0xff]
        %v1292 = vld [vmem:[#allocation7 + $0xa0] sm:$0xff]
        %v1293 = vld [vmem:[#allocation7 + $0xa8] sm:$0xff]
        %v1294 = vld [vmem:[#allocation7 + $0xb0] sm:$0xff]
        %v1295 = vld [vmem:[#allocation7 + $0xb8] sm:$0xff]
        %v1296 = vld [vmem:[#allocation7 + $0xc0] sm:$0xff]
        %v1297 = vld [vmem:[#allocation7 + $0xc8] sm:$0xff]
        %v1298 = vld [vmem:[#allocation7 + $0xd0] sm:$0xff]
        %v1299 = vld [vmem:[#allocation7 + $0xd8] sm:$0xff]
        %v1300 = vld [vmem:[#allocation7 + $0xe0] sm:$0xff]
        %v1301 = vld [vmem:[#allocation7 + $0xe8] sm:$0xff]
        %v1302 = vld [vmem:[#allocation7 + $0xf0] sm:$0xff]
        %v1303 = vld [vmem:[#allocation7 + $0xf8] sm:$0xff]
        %v1304 = vld [vmem:[#allocation7 + $0x100] sm:$0xff]
        %v1305 = vld [vmem:[#allocation7 + $0x108] sm:$0xff]
        %v1306 = vld [vmem:[#allocation7 + $0x110] sm:$0xff]
        %v1307 = vld [vmem:[#allocation7 + $0x118] sm:$0xff]
        %v1308 = vld [vmem:[#allocation7 + $0x120] sm:$0xff]
        %v1309 = vld [vmem:[#allocation7 + $0x128] sm:$0xff]
        %v1310 = vld [vmem:[#allocation7 + $0x130] sm:$0xff]
        %v1311 = vld [vmem:[#allocation7 + $0x138] sm:$0xff]
        %v1312 = vld [vmem:[#allocation7 + $0x140] sm:$0xff]
        %v1313 = vld [vmem:[#allocation7 + $0x148] sm:$0xff]
        %v1314 = vld [vmem:[#allocation7 + $0x150] sm:$0xff]
        %v1315 = vld [vmem:[#allocation7 + $0x158] sm:$0xff]
        %v1316 = vld [vmem:[#allocation7 + $0x160] sm:$0xff]
        %v1317 = vld [vmem:[#allocation7 + $0x168] sm:$0xff]
        %v1318 = vld [vmem:[#allocation7 + $0x170] sm:$0xff]
        %v1319 = vld [vmem:[#allocation7 + $0x178] sm:$0xff]
        %v1320 = vld [vmem:[#allocation7 + $0x180] sm:$0xff]
        %v1321 = vld [vmem:[#allocation7 + $0x188] sm:$0xff]
        %v1322 = vld [vmem:[#allocation7 + $0x190] sm:$0xff]
        %v1323 = vld [vmem:[#allocation7 + $0x198] sm:$0xff]
        %v1324 = vld [vmem:[#allocation7 + $0x1a0] sm:$0xff]
        %v1325 = vld [vmem:[#allocation7 + $0x1a8] sm:$0xff]
        %v1326 = vld [vmem:[#allocation7 + $0x1b0] sm:$0xff]
        %v1327 = vld [vmem:[#allocation7 + $0x1b8] sm:$0xff]
        %v1328 = vld [vmem:[#allocation7 + $0x1c0] sm:$0xff]
        %v1329 = vld [vmem:[#allocation7 + $0x1c8] sm:$0xff]
        %v1330 = vld [vmem:[#allocation7 + $0x1d0] sm:$0xff]
        %v1331 = vld [vmem:[#allocation7 + $0x1d8] sm:$0xff]
        %v1332 = vld [vmem:[#allocation7 + $0x1e0] sm:$0xff]
        %v1333 = vld [vmem:[#allocation7 + $0x1e8] sm:$0xff]
        %v1334 = vld [vmem:[#allocation7 + $0x1f0] sm:$0xff]
        %v1335 = vld [vmem:[#allocation7 + $0x1f8] sm:$0xff]
        %v1336 = vld [vmem:[#allocation7 + $0x200] sm:$0xff]
        %v1337 = vld [vmem:[#allocation7 + $0x208] sm:$0xff]
        %v1338 = vld [vmem:[#allocation7 + $0x210] sm:$0xff]
        %v1339 = vld [vmem:[#allocation7 + $0x218] sm:$0xff]
        %v1340 = vld [vmem:[#allocation7 + $0x220] sm:$0xff]
        %v1341 = vld [vmem:[#allocation7 + $0x228] sm:$0xff]
        %v1342 = vld [vmem:[#allocation7 + $0x230] sm:$0xff]
        %v1343 = vld [vmem:[#allocation7 + $0x238] sm:$0xff]
        %v1344 = vld [vmem:[#allocation7 + $0x240] sm:$0xff]
        %v1345 = vld [vmem:[#allocation7 + $0x248] sm:$0xff]
        %v1346 = vld [vmem:[#allocation7 + $0x250] sm:$0xff]
        %v1347 = vld [vmem:[#allocation7 + $0x258] sm:$0xff]
        %v1348 = vld [vmem:[#allocation7 + $0x260] sm:$0xff]
        %v1349 = vld [vmem:[#allocation7 + $0x268] sm:$0xff]
        %v1350 = vld [vmem:[#allocation7 + $0x270] sm:$0xff]
        %v1351 = vld [vmem:[#allocation7 + $0x278] sm:$0xff]
        %v1352 = vld [vmem:[#allocation7 + $0x280] sm:$0xff]
        %v1353 = vld [vmem:[#allocation7 + $0x288] sm:$0xff]
        %v1354 = vld [vmem:[#allocation7 + $0x290] sm:$0xff]
        %v1355 = vld [vmem:[#allocation7 + $0x298] sm:$0xff]
        %v1356 = vld [vmem:[#allocation7 + $0x2a0] sm:$0xff]
        %v1357 = vld [vmem:[#allocation7 + $0x2a8] sm:$0xff]
        %v1358 = vld [vmem:[#allocation7 + $0x2b0] sm:$0xff]
        %v1359 = vld [vmem:[#allocation7 + $0x2b8] sm:$0xff]
        %v1360 = vld [vmem:[#allocation7 + $0x2c0] sm:$0xff]
        %v1361 = vld [vmem:[#allocation7 + $0x2c8] sm:$0xff]
        %v1362 = vld [vmem:[#allocation7 + $0x2d0] sm:$0xff]
        %v1363 = vld [vmem:[#allocation7 + $0x2d8] sm:$0xff]
        %v1364 = vld [vmem:[#allocation7 + $0x2e0] sm:$0xff]
        %v1365 = vld [vmem:[#allocation7 + $0x2e8] sm:$0xff]
        %v1366 = vld [vmem:[#allocation7 + $0x2f0] sm:$0xff]
        %v1367 = vld [vmem:[#allocation7 + $0x2f8] sm:$0xff]
        %v1368 = vld [vmem:[#allocation7 + $0x300] sm:$0xff]
        %v1369 = vld [vmem:[#allocation7 + $0x308] sm:$0xff]
        %v1370 = vld [vmem:[#allocation7 + $0x310] sm:$0xff]
        %v1371 = vld [vmem:[#allocation7 + $0x318] sm:$0xff]
        %v1372 = vld [vmem:[#allocation7 + $0x320] sm:$0xff]
        %v1373 = vld [vmem:[#allocation7 + $0x328] sm:$0xff]
        %v1374 = vld [vmem:[#allocation7 + $0x330] sm:$0xff]
        %v1375 = vld [vmem:[#allocation7 + $0x338] sm:$0xff]
        %v1376 = vld [vmem:[#allocation7 + $0x340] sm:$0xff]
        %v1377 = vld [vmem:[#allocation7 + $0x348] sm:$0xff]
        %v1378 = vld [vmem:[#allocation7 + $0x350] sm:$0xff]
        %v1379 = vld [vmem:[#allocation7 + $0x358] sm:$0xff]
        %v1380 = vld [vmem:[#allocation7 + $0x360] sm:$0xff]
        %v1381 = vld [vmem:[#allocation7 + $0x368] sm:$0xff]
        %v1382 = vld [vmem:[#allocation7 + $0x370] sm:$0xff]
        %v1383 = vld [vmem:[#allocation7 + $0x378] sm:$0xff]
        %v1384 = vld [vmem:[#allocation7 + $0x380] sm:$0xff]
        %v1385 = vld [vmem:[#allocation7 + $0x388] sm:$0xff]
        %v1386 = vld [vmem:[#allocation7 + $0x390] sm:$0xff]
        %v1387 = vld [vmem:[#allocation7 + $0x398] sm:$0xff]
        %v1388 = vld [vmem:[#allocation7 + $0x3a0] sm:$0xff]
        %v1389 = vld [vmem:[#allocation7 + $0x3a8] sm:$0xff]
        %v1390 = vld [vmem:[#allocation7 + $0x3b0] sm:$0xff]
        %v1391 = vld [vmem:[#allocation7 + $0x3b8] sm:$0xff]
        %v1392 = vld [vmem:[#allocation7 + $0x3c0] sm:$0xff]
        %v1393 = vld [vmem:[#allocation7 + $0x3c8] sm:$0xff]
        %v1394 = vld [vmem:[#allocation7 + $0x3d0] sm:$0xff]
        %v1395 = vld [vmem:[#allocation7 + $0x3d8] sm:$0xff]
        %v1396 = vld [vmem:[#allocation7 + $0x3e0] sm:$0xff]
        %v1397 = vld [vmem:[#allocation7 + $0x3e8] sm:$0xff]
        %v1398 = vld [vmem:[#allocation7 + $0x3f0] sm:$0xff]
        %v1399 = vld [vmem:[#allocation7 + $0x3f8] sm:$0xff]
        %v1528 = vunpack.c.l.b16 %v1272
        %v1529 = vunpack.c.h.b16 %v1272
        %v1530 = vunpack.c.l.b16 %v1273
        %v1531 = vunpack.c.h.b16 %v1273
        %v1532 = vunpack.c.l.b16 %v1274
        %v1533 = vunpack.c.h.b16 %v1274
        %v1534 = vunpack.c.l.b16 %v1275
        %v1535 = vunpack.c.h.b16 %v1275
        %v1536 = vunpack.c.l.b16 %v1276
        %v1537 = vunpack.c.h.b16 %v1276
        %v1538 = vunpack.c.l.b16 %v1277
        %v1539 = vunpack.c.h.b16 %v1277
        %v1540 = vunpack.c.l.b16 %v1278
        %v1541 = vunpack.c.h.b16 %v1278
        %v1542 = vunpack.c.l.b16 %v1279
        %v1543 = vunpack.c.h.b16 %v1279
        %v1544 = vunpack.c.l.b16 %v1280
        %v1545 = vunpack.c.h.b16 %v1280
        %v1546 = vunpack.c.l.b16 %v1281
        %v1547 = vunpack.c.h.b16 %v1281
        %v1548 = vunpack.c.l.b16 %v1282
        %v1549 = vunpack.c.h.b16 %v1282
        %v1550 = vunpack.c.l.b16 %v1283
        %v1551 = vunpack.c.h.b16 %v1283
        %v1552 = vunpack.c.l.b16 %v1284
        %v1553 = vunpack.c.h.b16 %v1284
        %v1554 = vunpack.c.l.b16 %v1285
        %v1555 = vunpack.c.h.b16 %v1285
        %v1556 = vunpack.c.l.b16 %v1286
        %v1557 = vunpack.c.h.b16 %v1286
        %v1558 = vunpack.c.l.b16 %v1287
        %v1559 = vunpack.c.h.b16 %v1287
        %v1560 = vunpack.c.l.b16 %v1288
        %v1561 = vunpack.c.h.b16 %v1288
        %v1562 = vunpack.c.l.b16 %v1289
        %v1563 = vunpack.c.h.b16 %v1289
        %v1564 = vunpack.c.l.b16 %v1290
        %v1565 = vunpack.c.h.b16 %v1290
        %v1566 = vunpack.c.l.b16 %v1291
        %v1567 = vunpack.c.h.b16 %v1291
        %v1568 = vunpack.c.l.b16 %v1292
        %v1569 = vunpack.c.h.b16 %v1292
        %v1570 = vunpack.c.l.b16 %v1293
        %v1571 = vunpack.c.h.b16 %v1293
        %v1572 = vunpack.c.l.b16 %v1294
        %v1573 = vunpack.c.h.b16 %v1294
        %v1574 = vunpack.c.l.b16 %v1295
        %v1575 = vunpack.c.h.b16 %v1295
        %v1576 = vunpack.c.l.b16 %v1296
        %v1577 = vunpack.c.h.b16 %v1296
        %v1578 = vunpack.c.l.b16 %v1297
        %v1579 = vunpack.c.h.b16 %v1297
        %v1580 = vunpack.c.l.b16 %v1298
        %v1581 = vunpack.c.h.b16 %v1298
        %v1582 = vunpack.c.l.b16 %v1299
        %v1583 = vunpack.c.h.b16 %v1299
        %v1584 = vunpack.c.l.b16 %v1300
        %v1585 = vunpack.c.h.b16 %v1300
        %v1586 = vunpack.c.l.b16 %v1301
        %v1587 = vunpack.c.h.b16 %v1301
        %v1588 = vunpack.c.l.b16 %v1302
        %v1589 = vunpack.c.h.b16 %v1302
        %v1590 = vunpack.c.l.b16 %v1303
        %v1591 = vunpack.c.h.b16 %v1303
        %v1592 = vunpack.c.l.b16 %v1304
        %v1593 = vunpack.c.h.b16 %v1304
        %v1594 = vunpack.c.l.b16 %v1305
        %v1595 = vunpack.c.h.b16 %v1305
        %v1596 = vunpack.c.l.b16 %v1306
        %v1597 = vunpack.c.h.b16 %v1306
        %v1598 = vunpack.c.l.b16 %v1307
        %v1599 = vunpack.c.h.b16 %v1307
        %v1600 = vunpack.c.l.b16 %v1308
        %v1601 = vunpack.c.h.b16 %v1308
        %v1602 = vunpack.c.l.b16 %v1309
        %v1603 = vunpack.c.h.b16 %v1309
        %v1604 = vunpack.c.l.b16 %v1310
        %v1605 = vunpack.c.h.b16 %v1310
        %v1606 = vunpack.c.l.b16 %v1311
        %v1607 = vunpack.c.h.b16 %v1311
        %v1608 = vunpack.c.l.b16 %v1312
        %v1609 = vunpack.c.h.b16 %v1312
        %v1610 = vunpack.c.l.b16 %v1313
        %v1611 = vunpack.c.h.b16 %v1313
        %v1612 = vunpack.c.l.b16 %v1314
        %v1613 = vunpack.c.h.b16 %v1314
        %v1614 = vunpack.c.l.b16 %v1315
        %v1615 = vunpack.c.h.b16 %v1315
        %v1616 = vunpack.c.l.b16 %v1316
        %v1617 = vunpack.c.h.b16 %v1316
        %v1618 = vunpack.c.l.b16 %v1317
        %v1619 = vunpack.c.h.b16 %v1317
        %v1620 = vunpack.c.l.b16 %v1318
        %v1621 = vunpack.c.h.b16 %v1318
        %v1622 = vunpack.c.l.b16 %v1319
        %v1623 = vunpack.c.h.b16 %v1319
        %v1624 = vunpack.c.l.b16 %v1320
        %v1625 = vunpack.c.h.b16 %v1320
        %v1626 = vunpack.c.l.b16 %v1321
        %v1627 = vunpack.c.h.b16 %v1321
        %v1628 = vunpack.c.l.b16 %v1322
        %v1629 = vunpack.c.h.b16 %v1322
        %v1630 = vunpack.c.l.b16 %v1323
        %v1631 = vunpack.c.h.b16 %v1323
        %v1632 = vunpack.c.l.b16 %v1324
        %v1633 = vunpack.c.h.b16 %v1324
        %v1634 = vunpack.c.l.b16 %v1325
        %v1635 = vunpack.c.h.b16 %v1325
        %v1636 = vunpack.c.l.b16 %v1326
        %v1637 = vunpack.c.h.b16 %v1326
        %v1638 = vunpack.c.l.b16 %v1327
        %v1639 = vunpack.c.h.b16 %v1327
        %v1640 = vunpack.c.l.b16 %v1328
        %v1641 = vunpack.c.h.b16 %v1328
        %v1642 = vunpack.c.l.b16 %v1329
        %v1643 = vunpack.c.h.b16 %v1329
        %v1644 = vunpack.c.l.b16 %v1330
        %v1645 = vunpack.c.h.b16 %v1330
        %v1646 = vunpack.c.l.b16 %v1331
        %v1647 = vunpack.c.h.b16 %v1331
        %v1648 = vunpack.c.l.b16 %v1332
        %v1649 = vunpack.c.h.b16 %v1332
        %v1650 = vunpack.c.l.b16 %v1333
        %v1651 = vunpack.c.h.b16 %v1333
        %v1652 = vunpack.c.l.b16 %v1334
        %v1653 = vunpack.c.h.b16 %v1334
        %v1654 = vunpack.c.l.b16 %v1335
        %v1655 = vunpack.c.h.b16 %v1335
        %v1656 = vunpack.c.l.b16 %v1336
        %v1657 = vunpack.c.h.b16 %v1336
        %v1658 = vunpack.c.l.b16 %v1337
        %v1659 = vunpack.c.h.b16 %v1337
        %v1660 = vunpack.c.l.b16 %v1338
        %v1661 = vunpack.c.h.b16 %v1338
        %v1662 = vunpack.c.l.b16 %v1339
        %v1663 = vunpack.c.h.b16 %v1339
        %v1664 = vunpack.c.l.b16 %v1340
        %v1665 = vunpack.c.h.b16 %v1340
        %v1666 = vunpack.c.l.b16 %v1341
        %v1667 = vunpack.c.h.b16 %v1341
        %v1668 = vunpack.c.l.b16 %v1342
        %v1669 = vunpack.c.h.b16 %v1342
        %v1670 = vunpack.c.l.b16 %v1343
        %v1671 = vunpack.c.h.b16 %v1343
        %v1672 = vunpack.c.l.b16 %v1344
        %v1673 = vunpack.c.h.b16 %v1344
        %v1674 = vunpack.c.l.b16 %v1345
        %v1675 = vunpack.c.h.b16 %v1345
        %v1676 = vunpack.c.l.b16 %v1346
        %v1677 = vunpack.c.h.b16 %v1346
        %v1678 = vunpack.c.l.b16 %v1347
        %v1679 = vunpack.c.h.b16 %v1347
        %v1680 = vunpack.c.l.b16 %v1348
        %v1681 = vunpack.c.h.b16 %v1348
        %v1682 = vunpack.c.l.b16 %v1349
        %v1683 = vunpack.c.h.b16 %v1349
        %v1684 = vunpack.c.l.b16 %v1350
        %v1685 = vunpack.c.h.b16 %v1350
        %v1686 = vunpack.c.l.b16 %v1351
        %v1687 = vunpack.c.h.b16 %v1351
        %v1688 = vunpack.c.l.b16 %v1352
        %v1689 = vunpack.c.h.b16 %v1352
        %v1690 = vunpack.c.l.b16 %v1353
        %v1691 = vunpack.c.h.b16 %v1353
        %v1692 = vunpack.c.l.b16 %v1354
        %v1693 = vunpack.c.h.b16 %v1354
        %v1694 = vunpack.c.l.b16 %v1355
        %v1695 = vunpack.c.h.b16 %v1355
        %v1696 = vunpack.c.l.b16 %v1356
        %v1697 = vunpack.c.h.b16 %v1356
        %v1698 = vunpack.c.l.b16 %v1357
        %v1699 = vunpack.c.h.b16 %v1357
        %v1700 = vunpack.c.l.b16 %v1358
        %v1701 = vunpack.c.h.b16 %v1358
        %v1702 = vunpack.c.l.b16 %v1359
        %v1703 = vunpack.c.h.b16 %v1359
        %v1704 = vunpack.c.l.b16 %v1360
        %v1705 = vunpack.c.h.b16 %v1360
        %v1706 = vunpack.c.l.b16 %v1361
        %v1707 = vunpack.c.h.b16 %v1361
        %v1708 = vunpack.c.l.b16 %v1362
        %v1709 = vunpack.c.h.b16 %v1362
        %v1710 = vunpack.c.l.b16 %v1363
        %v1711 = vunpack.c.h.b16 %v1363
        %v1712 = vunpack.c.l.b16 %v1364
        %v1713 = vunpack.c.h.b16 %v1364
        %v1714 = vunpack.c.l.b16 %v1365
        %v1715 = vunpack.c.h.b16 %v1365
        %v1716 = vunpack.c.l.b16 %v1366
        %v1717 = vunpack.c.h.b16 %v1366
        %v1718 = vunpack.c.l.b16 %v1367
        %v1719 = vunpack.c.h.b16 %v1367
        %v1720 = vunpack.c.l.b16 %v1368
        %v1721 = vunpack.c.h.b16 %v1368
        %v1722 = vunpack.c.l.b16 %v1369
        %v1723 = vunpack.c.h.b16 %v1369
        %v1724 = vunpack.c.l.b16 %v1370
        %v1725 = vunpack.c.h.b16 %v1370
        %v1726 = vunpack.c.l.b16 %v1371
        %v1727 = vunpack.c.h.b16 %v1371
        %v1728 = vunpack.c.l.b16 %v1372
        %v1729 = vunpack.c.h.b16 %v1372
        %v1730 = vunpack.c.l.b16 %v1373
        %v1731 = vunpack.c.h.b16 %v1373
        %v1732 = vunpack.c.l.b16 %v1374
        %v1733 = vunpack.c.h.b16 %v1374
        %v1734 = vunpack.c.l.b16 %v1375
        %v1735 = vunpack.c.h.b16 %v1375
        %v1736 = vunpack.c.l.b16 %v1376
        %v1737 = vunpack.c.h.b16 %v1376
        %v1738 = vunpack.c.l.b16 %v1377
        %v1739 = vunpack.c.h.b16 %v1377
        %v1740 = vunpack.c.l.b16 %v1378
        %v1741 = vunpack.c.h.b16 %v1378
        %v1742 = vunpack.c.l.b16 %v1379
        %v1743 = vunpack.c.h.b16 %v1379
        %v1744 = vunpack.c.l.b16 %v1380
        %v1745 = vunpack.c.h.b16 %v1380
        %v1746 = vunpack.c.l.b16 %v1381
        %v1747 = vunpack.c.h.b16 %v1381
        %v1748 = vunpack.c.l.b16 %v1382
        %v1749 = vunpack.c.h.b16 %v1382
        %v1750 = vunpack.c.l.b16 %v1383
        %v1751 = vunpack.c.h.b16 %v1383
        %v1752 = vunpack.c.l.b16 %v1384
        %v1753 = vunpack.c.h.b16 %v1384
        %v1754 = vunpack.c.l.b16 %v1385
        %v1755 = vunpack.c.h.b16 %v1385
        %v1756 = vunpack.c.l.b16 %v1386
        %v1757 = vunpack.c.h.b16 %v1386
        %v1758 = vunpack.c.l.b16 %v1387
        %v1759 = vunpack.c.h.b16 %v1387
        %v1760 = vunpack.c.l.b16 %v1388
        %v1761 = vunpack.c.h.b16 %v1388
        %v1762 = vunpack.c.l.b16 %v1389
        %v1763 = vunpack.c.h.b16 %v1389
        %v1764 = vunpack.c.l.b16 %v1390
        %v1765 = vunpack.c.h.b16 %v1390
        %v1766 = vunpack.c.l.b16 %v1391
        %v1767 = vunpack.c.h.b16 %v1391
        %v1768 = vunpack.c.l.b16 %v1392
        %v1769 = vunpack.c.h.b16 %v1392
        %v1770 = vunpack.c.l.b16 %v1393
        %v1771 = vunpack.c.h.b16 %v1393
        %v1772 = vunpack.c.l.b16 %v1394
        %v1773 = vunpack.c.h.b16 %v1394
        %v1774 = vunpack.c.l.b16 %v1395
        %v1775 = vunpack.c.h.b16 %v1395
        %v1776 = vunpack.c.l.b16 %v1396
        %v1777 = vunpack.c.h.b16 %v1396
        %v1778 = vunpack.c.l.b16 %v1397
        %v1779 = vunpack.c.h.b16 %v1397
        %v1780 = vunpack.c.l.b16 %v1398
        %v1781 = vunpack.c.h.b16 %v1398
        %v1782 = vunpack.c.l.b16 %v1399
        %v1783 = vunpack.c.h.b16 %v1399
        %v1784 = vpack.c.b16 %v1532, %v1528
        %v1785 = vpack.c.b16 %v1533, %v1529
        %v1786 = vpack.c.b16 %v1534, %v1530
        %v1787 = vpack.c.b16 %v1535, %v1531
        %v1788 = vpack.c.b16 %v1540, %v1536
        %v1789 = vpack.c.b16 %v1541, %v1537
        %v1790 = vpack.c.b16 %v1542, %v1538
        %v1791 = vpack.c.b16 %v1543, %v1539
        %v1792 = vpack.c.b16 %v1548, %v1544
        %v1793 = vpack.c.b16 %v1549, %v1545
        %v1794 = vpack.c.b16 %v1550, %v1546
        %v1795 = vpack.c.b16 %v1551, %v1547
        %v1796 = vpack.c.b16 %v1556, %v1552
        %v1797 = vpack.c.b16 %v1557, %v1553
        %v1798 = vpack.c.b16 %v1558, %v1554
        %v1799 = vpack.c.b16 %v1559, %v1555
        %v1800 = vpack.c.b16 %v1564, %v1560
        %v1801 = vpack.c.b16 %v1565, %v1561
        %v1802 = vpack.c.b16 %v1566, %v1562
        %v1803 = vpack.c.b16 %v1567, %v1563
        %v1804 = vpack.c.b16 %v1572, %v1568
        %v1805 = vpack.c.b16 %v1573, %v1569
        %v1806 = vpack.c.b16 %v1574, %v1570
        %v1807 = vpack.c.b16 %v1575, %v1571
        %v1808 = vpack.c.b16 %v1580, %v1576
        %v1809 = vpack.c.b16 %v1581, %v1577
        %v1810 = vpack.c.b16 %v1582, %v1578
        %v1811 = vpack.c.b16 %v1583, %v1579
        %v1812 = vpack.c.b16 %v1588, %v1584
        %v1813 = vpack.c.b16 %v1589, %v1585
        %v1814 = vpack.c.b16 %v1590, %v1586
        %v1815 = vpack.c.b16 %v1591, %v1587
        %v1816 = vpack.c.b16 %v1596, %v1592
        %v1817 = vpack.c.b16 %v1597, %v1593
        %v1818 = vpack.c.b16 %v1598, %v1594
        %v1819 = vpack.c.b16 %v1599, %v1595
        %v1820 = vpack.c.b16 %v1604, %v1600
        %v1821 = vpack.c.b16 %v1605, %v1601
        %v1822 = vpack.c.b16 %v1606, %v1602
        %v1823 = vpack.c.b16 %v1607, %v1603
        %v1824 = vpack.c.b16 %v1612, %v1608
        %v1825 = vpack.c.b16 %v1613, %v1609
        %v1826 = vpack.c.b16 %v1614, %v1610
        %v1827 = vpack.c.b16 %v1615, %v1611
        %v1828 = vpack.c.b16 %v1620, %v1616
        %v1829 = vpack.c.b16 %v1621, %v1617
        %v1830 = vpack.c.b16 %v1622, %v1618
        %v1831 = vpack.c.b16 %v1623, %v1619
        %v1832 = vpack.c.b16 %v1628, %v1624
        %v1833 = vpack.c.b16 %v1629, %v1625
        %v1834 = vpack.c.b16 %v1630, %v1626
        %v1835 = vpack.c.b16 %v1631, %v1627
        %v1836 = vpack.c.b16 %v1636, %v1632
        %v1837 = vpack.c.b16 %v1637, %v1633
        %v1838 = vpack.c.b16 %v1638, %v1634
        %v1839 = vpack.c.b16 %v1639, %v1635
        %v1840 = vpack.c.b16 %v1644, %v1640
        %v1841 = vpack.c.b16 %v1645, %v1641
        %v1842 = vpack.c.b16 %v1646, %v1642
        %v1843 = vpack.c.b16 %v1647, %v1643
        %v1844 = vpack.c.b16 %v1652, %v1648
        %v1845 = vpack.c.b16 %v1653, %v1649
        %v1846 = vpack.c.b16 %v1654, %v1650
        %v1847 = vpack.c.b16 %v1655, %v1651
        %v1848 = vpack.c.b16 %v1660, %v1656
        %v1849 = vpack.c.b16 %v1661, %v1657
        %v1850 = vpack.c.b16 %v1662, %v1658
        %v1851 = vpack.c.b16 %v1663, %v1659
        %v1852 = vpack.c.b16 %v1668, %v1664
        %v1853 = vpack.c.b16 %v1669, %v1665
        %v1854 = vpack.c.b16 %v1670, %v1666
        %v1855 = vpack.c.b16 %v1671, %v1667
        %v1856 = vpack.c.b16 %v1676, %v1672
        %v1857 = vpack.c.b16 %v1677, %v1673
        %v1858 = vpack.c.b16 %v1678, %v1674
        %v1859 = vpack.c.b16 %v1679, %v1675
        %v1860 = vpack.c.b16 %v1684, %v1680
        %v1861 = vpack.c.b16 %v1685, %v1681
        %v1862 = vpack.c.b16 %v1686, %v1682
        %v1863 = vpack.c.b16 %v1687, %v1683
        %v1864 = vpack.c.b16 %v1692, %v1688
        %v1865 = vpack.c.b16 %v1693, %v1689
        %v1866 = vpack.c.b16 %v1694, %v1690
        %v1867 = vpack.c.b16 %v1695, %v1691
        %v1868 = vpack.c.b16 %v1700, %v1696
        %v1869 = vpack.c.b16 %v1701, %v1697
        %v1870 = vpack.c.b16 %v1702, %v1698
        %v1871 = vpack.c.b16 %v1703, %v1699
        %v1872 = vpack.c.b16 %v1708, %v1704
        %v1873 = vpack.c.b16 %v1709, %v1705
        %v1874 = vpack.c.b16 %v1710, %v1706
        %v1875 = vpack.c.b16 %v1711, %v1707
        %v1876 = vpack.c.b16 %v1716, %v1712
        %v1877 = vpack.c.b16 %v1717, %v1713
        %v1878 = vpack.c.b16 %v1718, %v1714
        %v1879 = vpack.c.b16 %v1719, %v1715
        %v1880 = vpack.c.b16 %v1724, %v1720
        %v1881 = vpack.c.b16 %v1725, %v1721
        %v1882 = vpack.c.b16 %v1726, %v1722
        %v1883 = vpack.c.b16 %v1727, %v1723
        %v1884 = vpack.c.b16 %v1732, %v1728
        %v1885 = vpack.c.b16 %v1733, %v1729
        %v1886 = vpack.c.b16 %v1734, %v1730
        %v1887 = vpack.c.b16 %v1735, %v1731
        %v1888 = vpack.c.b16 %v1740, %v1736
        %v1889 = vpack.c.b16 %v1741, %v1737
        %v1890 = vpack.c.b16 %v1742, %v1738
        %v1891 = vpack.c.b16 %v1743, %v1739
        %v1892 = vpack.c.b16 %v1748, %v1744
        %v1893 = vpack.c.b16 %v1749, %v1745
        %v1894 = vpack.c.b16 %v1750, %v1746
        %v1895 = vpack.c.b16 %v1751, %v1747
        %v1896 = vpack.c.b16 %v1756, %v1752
        %v1897 = vpack.c.b16 %v1757, %v1753
        %v1898 = vpack.c.b16 %v1758, %v1754
        %v1899 = vpack.c.b16 %v1759, %v1755
        %v1900 = vpack.c.b16 %v1764, %v1760
        %v1901 = vpack.c.b16 %v1765, %v1761
        %v1902 = vpack.c.b16 %v1766, %v1762
        %v1903 = vpack.c.b16 %v1767, %v1763
        %v1904 = vpack.c.b16 %v1772, %v1768
        %v1905 = vpack.c.b16 %v1773, %v1769
        %v1906 = vpack.c.b16 %v1774, %v1770
        %v1907 = vpack.c.b16 %v1775, %v1771
        %v1908 = vpack.c.b16 %v1780, %v1776
        %v1909 = vpack.c.b16 %v1781, %v1777
        %v1910 = vpack.c.b16 %v1782, %v1778
        %v1911 = vpack.c.b16 %v1783, %v1779
        %2040 = vmatprep.subr.bf16.mxu0 %v1813
        %2041 = vmatpush1.bf16.msra.mxu0 %v1812
        %2042 = vmatprep.subr.bf16.mxu0 %v1809
        %2043 = vmatpush1.bf16.msra.mxu0 %v1808
        %2044 = vmatprep.subr.bf16.mxu0 %v1805
        %2045 = vmatpush1.bf16.msra.mxu0 %v1804
        %2046 = vmatprep.subr.bf16.mxu0 %v1801
        %2047 = vmatpush1.bf16.msra.mxu0 %v1800
        %2048 = vmatprep.subr.bf16.mxu0 %v1797
        %2049 = vmatpush1.bf16.msra.mxu0 %v1796
        %2050 = vmatprep.subr.bf16.mxu0 %v1793
        %2051 = vmatpush1.bf16.msra.mxu0 %v1792
        %2052 = vmatprep.subr.bf16.mxu0 %v1789
        %2053 = vmatpush1.bf16.msra.mxu0 %v1788
        %2054 = vmatprep.subr.bf16.mxu0 %v1785
        %2055 = vmatpush1.bf16.msra.mxu0 %v1784
        %2056 = vmatprep.subr.bf16.mxu0 %v1845
        %2057 = vmatpush2.bf16.msra.mxu0 %v1844
        %2058 = vmatprep.subr.bf16.mxu0 %v1841
        %2059 = vmatpush2.bf16.msra.mxu0 %v1840
        %2060 = vmatprep.subr.bf16.mxu0 %v1837
        %2061 = vmatpush2.bf16.msra.mxu0 %v1836
        %2062 = vmatprep.subr.bf16.mxu0 %v1833
        %2063 = vmatpush2.bf16.msra.mxu0 %v1832
        %2064 = vmatprep.subr.bf16.mxu0 %v1829
        %2065 = vmatpush2.bf16.msra.mxu0 %v1828
        %2066 = vmatprep.subr.bf16.mxu0 %v1825
        %2067 = vmatpush2.bf16.msra.mxu0 %v1824
        %2068 = vmatprep.subr.bf16.mxu0 %v1821
        %2069 = vmatpush2.bf16.msra.mxu0 %v1820
        %2070 = vmatprep.subr.bf16.mxu0 %v1817
        %2071 = vmatpush2.bf16.msra.mxu0 %v1816
        %2072 = vmatprep.mubr.bf16.mxu0 %v1269
        %2073 = vmatmul.mubr.bf16.gmra.mxu0 %v1268
        %v2074 = vpop.f32.mrf.mxu0
        %v2075 = vadd.f32 0.0, %v2074
        %v2076 = vpop.f32.mrf.mxu0
        %v2077 = vadd.f32 0.0, %v2076
        %v2078 = vpop.f32.mrf.mxu0
        %v2079 = vpop.f32.mrf.mxu0
        %2080 = vdwg.mxu0
        %2081 = vmatprep.subr.bf16.mxu0 %v1877
        %2082 = vmatpush1.bf16.msra.mxu0 %v1876
        %2083 = vmatprep.subr.bf16.mxu0 %v1873
        %2084 = vmatpush1.bf16.msra.mxu0 %v1872
        %2085 = vmatprep.subr.bf16.mxu0 %v1869
        %2086 = vmatpush1.bf16.msra.mxu0 %v1868
        %2087 = vmatprep.subr.bf16.mxu0 %v1865
        %2088 = vmatpush1.bf16.msra.mxu0 %v1864
        %2089 = vmatprep.subr.bf16.mxu0 %v1861
        %2090 = vmatpush1.bf16.msra.mxu0 %v1860
        %2091 = vmatprep.subr.bf16.mxu0 %v1857
        %2092 = vmatpush1.bf16.msra.mxu0 %v1856
        %2093 = vmatprep.subr.bf16.mxu0 %v1853
        %2094 = vmatpush1.bf16.msra.mxu0 %v1852
        %2095 = vmatprep.subr.bf16.mxu0 %v1849
        %2096 = vmatpush1.bf16.msra.mxu0 %v1848
        %2097 = vmatprep.subr.bf16.mxu0 %v1909
        %2098 = vmatpush2.bf16.msra.mxu0 %v1908
        %2099 = vmatprep.subr.bf16.mxu0 %v1905
        %2100 = vmatpush2.bf16.msra.mxu0 %v1904
        %2101 = vmatprep.subr.bf16.mxu0 %v1901
        %2102 = vmatpush2.bf16.msra.mxu0 %v1900
        %2103 = vmatprep.subr.bf16.mxu0 %v1897
        %2104 = vmatpush2.bf16.msra.mxu0 %v1896
        %2105 = vmatprep.subr.bf16.mxu0 %v1893
        %2106 = vmatpush2.bf16.msra.mxu0 %v1892
        %2107 = vmatprep.subr.bf16.mxu0 %v1889
        %2108 = vmatpush2.bf16.msra.mxu0 %v1888
        %2109 = vmatprep.subr.bf16.mxu0 %v1885
        %2110 = vmatpush2.bf16.msra.mxu0 %v1884
        %2111 = vmatprep.subr.bf16.mxu0 %v1881
        %2112 = vmatpush2.bf16.msra.mxu0 %v1880
        %2113 = vmatprep.mubr.bf16.mxu0 %v1271
        %2114 = vmatmul.mubr.bf16.gmra.mxu0 %v1270
        %v2115 = vpop.f32.mrf.mxu0
        %v2116 = vadd.f32 %v2075, %v2115
        %v2117 = vpop.f32.mrf.mxu0
        %v2118 = vadd.f32 %v2077, %v2117
        %v2119 = vpop.f32.mrf.mxu0
        %v2120 = vpop.f32.mrf.mxu0
        %2121 = vdwg.mxu0
        %2122 = vmatprep.subr.bf16.mxu0 %v1815
        %2123 = vmatpush1.bf16.msra.mxu0 %v1814
        %2124 = vmatprep.subr.bf16.mxu0 %v1811
        %2125 = vmatpush1.bf16.msra.mxu0 %v1810
        %2126 = vmatprep.subr.bf16.mxu0 %v1807
        %2127 = vmatpush1.bf16.msra.mxu0 %v1806
        %2128 = vmatprep.subr.bf16.mxu0 %v1803
        %2129 = vmatpush1.bf16.msra.mxu0 %v1802
        %2130 = vmatprep.subr.bf16.mxu0 %v1799
        %2131 = vmatpush1.bf16.msra.mxu0 %v1798
        %2132 = vmatprep.subr.bf16.mxu0 %v1795
        %2133 = vmatpush1.bf16.msra.mxu0 %v1794
        %2134 = vmatprep.subr.bf16.mxu0 %v1791
        %2135 = vmatpush1.bf16.msra.mxu0 %v1790
        %2136 = vmatprep.subr.bf16.mxu0 %v1787
        %2137 = vmatpush1.bf16.msra.mxu0 %v1786
        %2138 = vmatprep.subr.bf16.mxu0 %v1847
        %2139 = vmatpush2.bf16.msra.mxu0 %v1846
        %2140 = vmatprep.subr.bf16.mxu0 %v1843
        %2141 = vmatpush2.bf16.msra.mxu0 %v1842
        %2142 = vmatprep.subr.bf16.mxu0 %v1839
        %2143 = vmatpush2.bf16.msra.mxu0 %v1838
        %2144 = vmatprep.subr.bf16.mxu0 %v1835
        %2145 = vmatpush2.bf16.msra.mxu0 %v1834
        %2146 = vmatprep.subr.bf16.mxu0 %v1831
        %2147 = vmatpush2.bf16.msra.mxu0 %v1830
        %2148 = vmatprep.subr.bf16.mxu0 %v1827
        %2149 = vmatpush2.bf16.msra.mxu0 %v1826
        %2150 = vmatprep.subr.bf16.mxu0 %v1823
        %2151 = vmatpush2.bf16.msra.mxu0 %v1822
        %2152 = vmatprep.subr.bf16.mxu0 %v1819
        %2153 = vmatpush2.bf16.msra.mxu0 %v1818
        %2154 = vmatprep.mubr.bf16.mxu0 %v1269
        %2155 = vmatmul.mubr.bf16.gmra.mxu0 %v1268
        %v2156 = vpop.f32.mrf.mxu0
        %v2157 = vadd.f32 0.0, %v2156
        %v2158 = vpop.f32.mrf.mxu0
        %v2159 = vadd.f32 0.0, %v2158
        %v2160 = vpop.f32.mrf.mxu0
        %v2161 = vpop.f32.mrf.mxu0
        %2162 = vdwg.mxu0
        %2163 = vmatprep.subr.bf16.mxu0 %v1879
        %2164 = vmatpush1.bf16.msra.mxu0 %v1878
        %2165 = vmatprep.subr.bf16.mxu0 %v1875
        %2166 = vmatpush1.bf16.msra.mxu0 %v1874
        %2167 = vmatprep.subr.bf16.mxu0 %v1871
        %2168 = vmatpush1.bf16.msra.mxu0 %v1870
        %2169 = vmatprep.subr.bf16.mxu0 %v1867
        %2170 = vmatpush1.bf16.msra.mxu0 %v1866
        %2171 = vmatprep.subr.bf16.mxu0 %v1863
        %2172 = vmatpush1.bf16.msra.mxu0 %v1862
        %2173 = vmatprep.subr.bf16.mxu0 %v1859
        %2174 = vmatpush1.bf16.msra.mxu0 %v1858
        %2175 = vmatprep.subr.bf16.mxu0 %v1855
        %2176 = vmatpush1.bf16.msra.mxu0 %v1854
        %2177 = vmatprep.subr.bf16.mxu0 %v1851
        %2178 = vmatpush1.bf16.msra.mxu0 %v1850
        %2179 = vmatprep.subr.bf16.mxu0 %v1911
        %2180 = vmatpush2.bf16.msra.mxu0 %v1910
        %2181 = vmatprep.subr.bf16.mxu0 %v1907
        %2182 = vmatpush2.bf16.msra.mxu0 %v1906
        %2183 = vmatprep.subr.bf16.mxu0 %v1903
        %2184 = vmatpush2.bf16.msra.mxu0 %v1902
        %2185 = vmatprep.subr.bf16.mxu0 %v1899
        %2186 = vmatpush2.bf16.msra.mxu0 %v1898
        %2187 = vmatprep.subr.bf16.mxu0 %v1895
        %2188 = vmatpush2.bf16.msra.mxu0 %v1894
        %2189 = vmatprep.subr.bf16.mxu0 %v1891
        %2190 = vmatpush2.bf16.msra.mxu0 %v1890
        %2191 = vmatprep.subr.bf16.mxu0 %v1887
        %2192 = vmatpush2.bf16.msra.mxu0 %v1886
        %2193 = vmatprep.subr.bf16.mxu0 %v1883
        %2194 = vmatpush2.bf16.msra.mxu0 %v1882
        %2195 = vmatprep.mubr.bf16.mxu0 %v1271
        %2196 = vmatmul.mubr.bf16.gmra.mxu0 %v1270
        %v2197 = vpop.f32.mrf.mxu0
        %v2198 = vadd.f32 %v2157, %v2197
        %v2199 = vpop.f32.mrf.mxu0
        %v2200 = vadd.f32 %v2159, %v2199
        %v2201 = vpop.f32.mrf.mxu0
        %v2202 = vpop.f32.mrf.mxu0
        %2203 = vdwg.mxu0
        %vm2204 = vcmp.ge.f32.partialorder %v2116, 0.0
        %vm2205 = vcmp.ge.f32.partialorder %v2118, 0.0
        %vm2206 = vcmp.ge.f32.partialorder %v2198, 0.0
        %vm2207 = vcmp.ge.f32.partialorder %v2200, 0.0
        %v2208 = vsel %vm2204, 1.4142135, 0.28284273
        %v2209 = vsel %vm2205, 1.4142135, 0.28284273
        %v2210 = vsel %vm2206, 1.4142135, 0.28284273
        %v2211 = vsel %vm2207, 1.4142135, 0.28284273
        %v2212 = vmul.f32 %v2116, %v2208
        %v2213 = vmul.f32 %v2118, %v2209
        %v2214 = vmul.f32 %v2198, %v2210
        %v2215 = vmul.f32 %v2200, %v2211
        %v2216 = vpack.c.bf16 %v2212, %v2212
        %v2217 = vpack.c.bf16 %v2213, %v2213
        %v2218 = vpack.c.bf16 %v2214, %v2214
        %v2219 = vpack.c.bf16 %v2215, %v2215
        %v2220 = vld [vmem:[#allocation8] sm:$0xff]
        %v2221 = vld [vmem:[#allocation8 + $0x8] sm:$0xff]
        %v2222 = vld [vmem:[#allocation8 + $0x10] sm:$0xff]
        %v2223 = vld [vmem:[#allocation8 + $0x18] sm:$0xff]
        %v2224 = vld [vmem:[#allocation8 + $0x20] sm:$0xff]
        %v2225 = vld [vmem:[#allocation8 + $0x28] sm:$0xff]
        %v2226 = vld [vmem:[#allocation8 + $0x30] sm:$0xff]
        %v2227 = vld [vmem:[#allocation8 + $0x38] sm:$0xff]
        %v2228 = vld [vmem:[#allocation8 + $0x40] sm:$0xff]
        %v2229 = vld [vmem:[#allocation8 + $0x48] sm:$0xff]
        %v2230 = vld [vmem:[#allocation8 + $0x50] sm:$0xff]
        %v2231 = vld [vmem:[#allocation8 + $0x58] sm:$0xff]
        %v2232 = vld [vmem:[#allocation8 + $0x60] sm:$0xff]
        %v2233 = vld [vmem:[#allocation8 + $0x68] sm:$0xff]
        %v2234 = vld [vmem:[#allocation8 + $0x70] sm:$0xff]
        %v2235 = vld [vmem:[#allocation8 + $0x78] sm:$0xff]
        %v2236 = vld [vmem:[#allocation8 + $0x80] sm:$0xff]
        %v2237 = vld [vmem:[#allocation8 + $0x88] sm:$0xff]
        %v2238 = vld [vmem:[#allocation8 + $0x90] sm:$0xff]
        %v2239 = vld [vmem:[#allocation8 + $0x98] sm:$0xff]
        %v2240 = vld [vmem:[#allocation8 + $0xa0] sm:$0xff]
        %v2241 = vld [vmem:[#allocation8 + $0xa8] sm:$0xff]
        %v2242 = vld [vmem:[#allocation8 + $0xb0] sm:$0xff]
        %v2243 = vld [vmem:[#allocation8 + $0xb8] sm:$0xff]
        %v2244 = vld [vmem:[#allocation8 + $0xc0] sm:$0xff]
        %v2245 = vld [vmem:[#allocation8 + $0xc8] sm:$0xff]
        %v2246 = vld [vmem:[#allocation8 + $0xd0] sm:$0xff]
        %v2247 = vld [vmem:[#allocation8 + $0xd8] sm:$0xff]
        %v2248 = vld [vmem:[#allocation8 + $0xe0] sm:$0xff]
        %v2249 = vld [vmem:[#allocation8 + $0xe8] sm:$0xff]
        %v2250 = vld [vmem:[#allocation8 + $0xf0] sm:$0xff]
        %v2251 = vld [vmem:[#allocation8 + $0xf8] sm:$0xff]
        %v2252 = vld [vmem:[#allocation8 + $0x100] sm:$0xff]
        %v2253 = vld [vmem:[#allocation8 + $0x108] sm:$0xff]
        %v2254 = vld [vmem:[#allocation8 + $0x110] sm:$0xff]
        %v2255 = vld [vmem:[#allocation8 + $0x118] sm:$0xff]
        %v2256 = vld [vmem:[#allocation8 + $0x120] sm:$0xff]
        %v2257 = vld [vmem:[#allocation8 + $0x128] sm:$0xff]
        %v2258 = vld [vmem:[#allocation8 + $0x130] sm:$0xff]
        %v2259 = vld [vmem:[#allocation8 + $0x138] sm:$0xff]
        %v2260 = vld [vmem:[#allocation8 + $0x140] sm:$0xff]
        %v2261 = vld [vmem:[#allocation8 + $0x148] sm:$0xff]
        %v2262 = vld [vmem:[#allocation8 + $0x150] sm:$0xff]
        %v2263 = vld [vmem:[#allocation8 + $0x158] sm:$0xff]
        %v2264 = vld [vmem:[#allocation8 + $0x160] sm:$0xff]
        %v2265 = vld [vmem:[#allocation8 + $0x168] sm:$0xff]
        %v2266 = vld [vmem:[#allocation8 + $0x170] sm:$0xff]
        %v2267 = vld [vmem:[#allocation8 + $0x178] sm:$0xff]
        %v2268 = vld [vmem:[#allocation8 + $0x180] sm:$0xff]
        %v2269 = vld [vmem:[#allocation8 + $0x188] sm:$0xff]
        %v2270 = vld [vmem:[#allocation8 + $0x190] sm:$0xff]
        %v2271 = vld [vmem:[#allocation8 + $0x198] sm:$0xff]
        %v2272 = vld [vmem:[#allocation8 + $0x1a0] sm:$0xff]
        %v2273 = vld [vmem:[#allocation8 + $0x1a8] sm:$0xff]
        %v2274 = vld [vmem:[#allocation8 + $0x1b0] sm:$0xff]
        %v2275 = vld [vmem:[#allocation8 + $0x1b8] sm:$0xff]
        %v2276 = vld [vmem:[#allocation8 + $0x1c0] sm:$0xff]
        %v2277 = vld [vmem:[#allocation8 + $0x1c8] sm:$0xff]
        %v2278 = vld [vmem:[#allocation8 + $0x1d0] sm:$0xff]
        %v2279 = vld [vmem:[#allocation8 + $0x1d8] sm:$0xff]
        %v2280 = vld [vmem:[#allocation8 + $0x1e0] sm:$0xff]
        %v2281 = vld [vmem:[#allocation8 + $0x1e8] sm:$0xff]
        %v2282 = vld [vmem:[#allocation8 + $0x1f0] sm:$0xff]
        %v2283 = vld [vmem:[#allocation8 + $0x1f8] sm:$0xff]
        %v2284 = vld [vmem:[#allocation8 + $0x200] sm:$0xff]
        %v2285 = vld [vmem:[#allocation8 + $0x208] sm:$0xff]
        %v2286 = vld [vmem:[#allocation8 + $0x210] sm:$0xff]
        %v2287 = vld [vmem:[#allocation8 + $0x218] sm:$0xff]
        %v2288 = vld [vmem:[#allocation8 + $0x220] sm:$0xff]
        %v2289 = vld [vmem:[#allocation8 + $0x228] sm:$0xff]
        %v2290 = vld [vmem:[#allocation8 + $0x230] sm:$0xff]
        %v2291 = vld [vmem:[#allocation8 + $0x238] sm:$0xff]
        %v2292 = vld [vmem:[#allocation8 + $0x240] sm:$0xff]
        %v2293 = vld [vmem:[#allocation8 + $0x248] sm:$0xff]
        %v2294 = vld [vmem:[#allocation8 + $0x250] sm:$0xff]
        %v2295 = vld [vmem:[#allocation8 + $0x258] sm:$0xff]
        %v2296 = vld [vmem:[#allocation8 + $0x260] sm:$0xff]
        %v2297 = vld [vmem:[#allocation8 + $0x268] sm:$0xff]
        %v2298 = vld [vmem:[#allocation8 + $0x270] sm:$0xff]
        %v2299 = vld [vmem:[#allocation8 + $0x278] sm:$0xff]
        %v2300 = vld [vmem:[#allocation8 + $0x280] sm:$0xff]
        %v2301 = vld [vmem:[#allocation8 + $0x288] sm:$0xff]
        %v2302 = vld [vmem:[#allocation8 + $0x290] sm:$0xff]
        %v2303 = vld [vmem:[#allocation8 + $0x298] sm:$0xff]
        %v2304 = vld [vmem:[#allocation8 + $0x2a0] sm:$0xff]
        %v2305 = vld [vmem:[#allocation8 + $0x2a8] sm:$0xff]
        %v2306 = vld [vmem:[#allocation8 + $0x2b0] sm:$0xff]
        %v2307 = vld [vmem:[#allocation8 + $0x2b8] sm:$0xff]
        %v2308 = vld [vmem:[#allocation8 + $0x2c0] sm:$0xff]
        %v2309 = vld [vmem:[#allocation8 + $0x2c8] sm:$0xff]
        %v2310 = vld [vmem:[#allocation8 + $0x2d0] sm:$0xff]
        %v2311 = vld [vmem:[#allocation8 + $0x2d8] sm:$0xff]
        %v2312 = vld [vmem:[#allocation8 + $0x2e0] sm:$0xff]
        %v2313 = vld [vmem:[#allocation8 + $0x2e8] sm:$0xff]
        %v2314 = vld [vmem:[#allocation8 + $0x2f0] sm:$0xff]
        %v2315 = vld [vmem:[#allocation8 + $0x2f8] sm:$0xff]
        %v2316 = vld [vmem:[#allocation8 + $0x300] sm:$0xff]
        %v2317 = vld [vmem:[#allocation8 + $0x308] sm:$0xff]
        %v2318 = vld [vmem:[#allocation8 + $0x310] sm:$0xff]
        %v2319 = vld [vmem:[#allocation8 + $0x318] sm:$0xff]
        %v2320 = vld [vmem:[#allocation8 + $0x320] sm:$0xff]
        %v2321 = vld [vmem:[#allocation8 + $0x328] sm:$0xff]
        %v2322 = vld [vmem:[#allocation8 + $0x330] sm:$0xff]
        %v2323 = vld [vmem:[#allocation8 + $0x338] sm:$0xff]
        %v2324 = vld [vmem:[#allocation8 + $0x340] sm:$0xff]
        %v2325 = vld [vmem:[#allocation8 + $0x348] sm:$0xff]
        %v2326 = vld [vmem:[#allocation8 + $0x350] sm:$0xff]
        %v2327 = vld [vmem:[#allocation8 + $0x358] sm:$0xff]
        %v2328 = vld [vmem:[#allocation8 + $0x360] sm:$0xff]
        %v2329 = vld [vmem:[#allocation8 + $0x368] sm:$0xff]
        %v2330 = vld [vmem:[#allocation8 + $0x370] sm:$0xff]
        %v2331 = vld [vmem:[#allocation8 + $0x378] sm:$0xff]
        %v2332 = vld [vmem:[#allocation8 + $0x380] sm:$0xff]
        %v2333 = vld [vmem:[#allocation8 + $0x388] sm:$0xff]
        %v2334 = vld [vmem:[#allocation8 + $0x390] sm:$0xff]
        %v2335 = vld [vmem:[#allocation8 + $0x398] sm:$0xff]
        %v2336 = vld [vmem:[#allocation8 + $0x3a0] sm:$0xff]
        %v2337 = vld [vmem:[#allocation8 + $0x3a8] sm:$0xff]
        %v2338 = vld [vmem:[#allocation8 + $0x3b0] sm:$0xff]
        %v2339 = vld [vmem:[#allocation8 + $0x3b8] sm:$0xff]
        %v2340 = vld [vmem:[#allocation8 + $0x3c0] sm:$0xff]
        %v2341 = vld [vmem:[#allocation8 + $0x3c8] sm:$0xff]
        %v2342 = vld [vmem:[#allocation8 + $0x3d0] sm:$0xff]
        %v2343 = vld [vmem:[#allocation8 + $0x3d8] sm:$0xff]
        %v2344 = vld [vmem:[#allocation8 + $0x3e0] sm:$0xff]
        %v2345 = vld [vmem:[#allocation8 + $0x3e8] sm:$0xff]
        %v2346 = vld [vmem:[#allocation8 + $0x3f0] sm:$0xff]
        %v2347 = vld [vmem:[#allocation8 + $0x3f8] sm:$0xff]
        %v2476 = vunpack.c.l.b16 %v2220
        %v2477 = vunpack.c.h.b16 %v2220
        %v2478 = vunpack.c.l.b16 %v2221
        %v2479 = vunpack.c.h.b16 %v2221
        %v2480 = vunpack.c.l.b16 %v2222
        %v2481 = vunpack.c.h.b16 %v2222
        %v2482 = vunpack.c.l.b16 %v2223
        %v2483 = vunpack.c.h.b16 %v2223
        %v2484 = vunpack.c.l.b16 %v2224
        %v2485 = vunpack.c.h.b16 %v2224
        %v2486 = vunpack.c.l.b16 %v2225
        %v2487 = vunpack.c.h.b16 %v2225
        %v2488 = vunpack.c.l.b16 %v2226
        %v2489 = vunpack.c.h.b16 %v2226
        %v2490 = vunpack.c.l.b16 %v2227
        %v2491 = vunpack.c.h.b16 %v2227
        %v2492 = vunpack.c.l.b16 %v2228
        %v2493 = vunpack.c.h.b16 %v2228
        %v2494 = vunpack.c.l.b16 %v2229
        %v2495 = vunpack.c.h.b16 %v2229
        %v2496 = vunpack.c.l.b16 %v2230
        %v2497 = vunpack.c.h.b16 %v2230
        %v2498 = vunpack.c.l.b16 %v2231
        %v2499 = vunpack.c.h.b16 %v2231
        %v2500 = vunpack.c.l.b16 %v2232
        %v2501 = vunpack.c.h.b16 %v2232
        %v2502 = vunpack.c.l.b16 %v2233
        %v2503 = vunpack.c.h.b16 %v2233
        %v2504 = vunpack.c.l.b16 %v2234
        %v2505 = vunpack.c.h.b16 %v2234
        %v2506 = vunpack.c.l.b16 %v2235
        %v2507 = vunpack.c.h.b16 %v2235
        %v2508 = vunpack.c.l.b16 %v2236
        %v2509 = vunpack.c.h.b16 %v2236
        %v2510 = vunpack.c.l.b16 %v2237
        %v2511 = vunpack.c.h.b16 %v2237
        %v2512 = vunpack.c.l.b16 %v2238
        %v2513 = vunpack.c.h.b16 %v2238
        %v2514 = vunpack.c.l.b16 %v2239
        %v2515 = vunpack.c.h.b16 %v2239
        %v2516 = vunpack.c.l.b16 %v2240
        %v2517 = vunpack.c.h.b16 %v2240
        %v2518 = vunpack.c.l.b16 %v2241
        %v2519 = vunpack.c.h.b16 %v2241
        %v2520 = vunpack.c.l.b16 %v2242
        %v2521 = vunpack.c.h.b16 %v2242
        %v2522 = vunpack.c.l.b16 %v2243
        %v2523 = vunpack.c.h.b16 %v2243
        %v2524 = vunpack.c.l.b16 %v2244
        %v2525 = vunpack.c.h.b16 %v2244
        %v2526 = vunpack.c.l.b16 %v2245
        %v2527 = vunpack.c.h.b16 %v2245
        %v2528 = vunpack.c.l.b16 %v2246
        %v2529 = vunpack.c.h.b16 %v2246
        %v2530 = vunpack.c.l.b16 %v2247
        %v2531 = vunpack.c.h.b16 %v2247
        %v2532 = vunpack.c.l.b16 %v2248
        %v2533 = vunpack.c.h.b16 %v2248
        %v2534 = vunpack.c.l.b16 %v2249
        %v2535 = vunpack.c.h.b16 %v2249
        %v2536 = vunpack.c.l.b16 %v2250
        %v2537 = vunpack.c.h.b16 %v2250
        %v2538 = vunpack.c.l.b16 %v2251
        %v2539 = vunpack.c.h.b16 %v2251
        %v2540 = vunpack.c.l.b16 %v2252
        %v2541 = vunpack.c.h.b16 %v2252
        %v2542 = vunpack.c.l.b16 %v2253
        %v2543 = vunpack.c.h.b16 %v2253
        %v2544 = vunpack.c.l.b16 %v2254
        %v2545 = vunpack.c.h.b16 %v2254
        %v2546 = vunpack.c.l.b16 %v2255
        %v2547 = vunpack.c.h.b16 %v2255
        %v2548 = vunpack.c.l.b16 %v2256
        %v2549 = vunpack.c.h.b16 %v2256
        %v2550 = vunpack.c.l.b16 %v2257
        %v2551 = vunpack.c.h.b16 %v2257
        %v2552 = vunpack.c.l.b16 %v2258
        %v2553 = vunpack.c.h.b16 %v2258
        %v2554 = vunpack.c.l.b16 %v2259
        %v2555 = vunpack.c.h.b16 %v2259
        %v2556 = vunpack.c.l.b16 %v2260
        %v2557 = vunpack.c.h.b16 %v2260
        %v2558 = vunpack.c.l.b16 %v2261
        %v2559 = vunpack.c.h.b16 %v2261
        %v2560 = vunpack.c.l.b16 %v2262
        %v2561 = vunpack.c.h.b16 %v2262
        %v2562 = vunpack.c.l.b16 %v2263
        %v2563 = vunpack.c.h.b16 %v2263
        %v2564 = vunpack.c.l.b16 %v2264
        %v2565 = vunpack.c.h.b16 %v2264
        %v2566 = vunpack.c.l.b16 %v2265
        %v2567 = vunpack.c.h.b16 %v2265
        %v2568 = vunpack.c.l.b16 %v2266
        %v2569 = vunpack.c.h.b16 %v2266
        %v2570 = vunpack.c.l.b16 %v2267
        %v2571 = vunpack.c.h.b16 %v2267
        %v2572 = vunpack.c.l.b16 %v2268
        %v2573 = vunpack.c.h.b16 %v2268
        %v2574 = vunpack.c.l.b16 %v2269
        %v2575 = vunpack.c.h.b16 %v2269
        %v2576 = vunpack.c.l.b16 %v2270
        %v2577 = vunpack.c.h.b16 %v2270
        %v2578 = vunpack.c.l.b16 %v2271
        %v2579 = vunpack.c.h.b16 %v2271
        %v2580 = vunpack.c.l.b16 %v2272
        %v2581 = vunpack.c.h.b16 %v2272
        %v2582 = vunpack.c.l.b16 %v2273
        %v2583 = vunpack.c.h.b16 %v2273
        %v2584 = vunpack.c.l.b16 %v2274
        %v2585 = vunpack.c.h.b16 %v2274
        %v2586 = vunpack.c.l.b16 %v2275
        %v2587 = vunpack.c.h.b16 %v2275
        %v2588 = vunpack.c.l.b16 %v2276
        %v2589 = vunpack.c.h.b16 %v2276
        %v2590 = vunpack.c.l.b16 %v2277
        %v2591 = vunpack.c.h.b16 %v2277
        %v2592 = vunpack.c.l.b16 %v2278
        %v2593 = vunpack.c.h.b16 %v2278
        %v2594 = vunpack.c.l.b16 %v2279
        %v2595 = vunpack.c.h.b16 %v2279
        %v2596 = vunpack.c.l.b16 %v2280
        %v2597 = vunpack.c.h.b16 %v2280
        %v2598 = vunpack.c.l.b16 %v2281
        %v2599 = vunpack.c.h.b16 %v2281
        %v2600 = vunpack.c.l.b16 %v2282
        %v2601 = vunpack.c.h.b16 %v2282
        %v2602 = vunpack.c.l.b16 %v2283
        %v2603 = vunpack.c.h.b16 %v2283
        %v2604 = vunpack.c.l.b16 %v2284
        %v2605 = vunpack.c.h.b16 %v2284
        %v2606 = vunpack.c.l.b16 %v2285
        %v2607 = vunpack.c.h.b16 %v2285
        %v2608 = vunpack.c.l.b16 %v2286
        %v2609 = vunpack.c.h.b16 %v2286
        %v2610 = vunpack.c.l.b16 %v2287
        %v2611 = vunpack.c.h.b16 %v2287
        %v2612 = vunpack.c.l.b16 %v2288
        %v2613 = vunpack.c.h.b16 %v2288
        %v2614 = vunpack.c.l.b16 %v2289
        %v2615 = vunpack.c.h.b16 %v2289
        %v2616 = vunpack.c.l.b16 %v2290
        %v2617 = vunpack.c.h.b16 %v2290
        %v2618 = vunpack.c.l.b16 %v2291
        %v2619 = vunpack.c.h.b16 %v2291
        %v2620 = vunpack.c.l.b16 %v2292
        %v2621 = vunpack.c.h.b16 %v2292
        %v2622 = vunpack.c.l.b16 %v2293
        %v2623 = vunpack.c.h.b16 %v2293
        %v2624 = vunpack.c.l.b16 %v2294
        %v2625 = vunpack.c.h.b16 %v2294
        %v2626 = vunpack.c.l.b16 %v2295
        %v2627 = vunpack.c.h.b16 %v2295
        %v2628 = vunpack.c.l.b16 %v2296
        %v2629 = vunpack.c.h.b16 %v2296
        %v2630 = vunpack.c.l.b16 %v2297
        %v2631 = vunpack.c.h.b16 %v2297
        %v2632 = vunpack.c.l.b16 %v2298
        %v2633 = vunpack.c.h.b16 %v2298
        %v2634 = vunpack.c.l.b16 %v2299
        %v2635 = vunpack.c.h.b16 %v2299
        %v2636 = vunpack.c.l.b16 %v2300
        %v2637 = vunpack.c.h.b16 %v2300
        %v2638 = vunpack.c.l.b16 %v2301
        %v2639 = vunpack.c.h.b16 %v2301
        %v2640 = vunpack.c.l.b16 %v2302
        %v2641 = vunpack.c.h.b16 %v2302
        %v2642 = vunpack.c.l.b16 %v2303
        %v2643 = vunpack.c.h.b16 %v2303
        %v2644 = vunpack.c.l.b16 %v2304
        %v2645 = vunpack.c.h.b16 %v2304
        %v2646 = vunpack.c.l.b16 %v2305
        %v2647 = vunpack.c.h.b16 %v2305
        %v2648 = vunpack.c.l.b16 %v2306
        %v2649 = vunpack.c.h.b16 %v2306
        %v2650 = vunpack.c.l.b16 %v2307
        %v2651 = vunpack.c.h.b16 %v2307
        %v2652 = vunpack.c.l.b16 %v2308
        %v2653 = vunpack.c.h.b16 %v2308
        %v2654 = vunpack.c.l.b16 %v2309
        %v2655 = vunpack.c.h.b16 %v2309
        %v2656 = vunpack.c.l.b16 %v2310
        %v2657 = vunpack.c.h.b16 %v2310
        %v2658 = vunpack.c.l.b16 %v2311
        %v2659 = vunpack.c.h.b16 %v2311
        %v2660 = vunpack.c.l.b16 %v2312
        %v2661 = vunpack.c.h.b16 %v2312
        %v2662 = vunpack.c.l.b16 %v2313
        %v2663 = vunpack.c.h.b16 %v2313
        %v2664 = vunpack.c.l.b16 %v2314
        %v2665 = vunpack.c.h.b16 %v2314
        %v2666 = vunpack.c.l.b16 %v2315
        %v2667 = vunpack.c.h.b16 %v2315
        %v2668 = vunpack.c.l.b16 %v2316
        %v2669 = vunpack.c.h.b16 %v2316
        %v2670 = vunpack.c.l.b16 %v2317
        %v2671 = vunpack.c.h.b16 %v2317
        %v2672 = vunpack.c.l.b16 %v2318
        %v2673 = vunpack.c.h.b16 %v2318
        %v2674 = vunpack.c.l.b16 %v2319
        %v2675 = vunpack.c.h.b16 %v2319
        %v2676 = vunpack.c.l.b16 %v2320
        %v2677 = vunpack.c.h.b16 %v2320
        %v2678 = vunpack.c.l.b16 %v2321
        %v2679 = vunpack.c.h.b16 %v2321
        %v2680 = vunpack.c.l.b16 %v2322
        %v2681 = vunpack.c.h.b16 %v2322
        %v2682 = vunpack.c.l.b16 %v2323
        %v2683 = vunpack.c.h.b16 %v2323
        %v2684 = vunpack.c.l.b16 %v2324
        %v2685 = vunpack.c.h.b16 %v2324
        %v2686 = vunpack.c.l.b16 %v2325
        %v2687 = vunpack.c.h.b16 %v2325
        %v2688 = vunpack.c.l.b16 %v2326
        %v2689 = vunpack.c.h.b16 %v2326
        %v2690 = vunpack.c.l.b16 %v2327
        %v2691 = vunpack.c.h.b16 %v2327
        %v2692 = vunpack.c.l.b16 %v2328
        %v2693 = vunpack.c.h.b16 %v2328
        %v2694 = vunpack.c.l.b16 %v2329
        %v2695 = vunpack.c.h.b16 %v2329
        %v2696 = vunpack.c.l.b16 %v2330
        %v2697 = vunpack.c.h.b16 %v2330
        %v2698 = vunpack.c.l.b16 %v2331
        %v2699 = vunpack.c.h.b16 %v2331
        %v2700 = vunpack.c.l.b16 %v2332
        %v2701 = vunpack.c.h.b16 %v2332
        %v2702 = vunpack.c.l.b16 %v2333
        %v2703 = vunpack.c.h.b16 %v2333
        %v2704 = vunpack.c.l.b16 %v2334
        %v2705 = vunpack.c.h.b16 %v2334
        %v2706 = vunpack.c.l.b16 %v2335
        %v2707 = vunpack.c.h.b16 %v2335
        %v2708 = vunpack.c.l.b16 %v2336
        %v2709 = vunpack.c.h.b16 %v2336
        %v2710 = vunpack.c.l.b16 %v2337
        %v2711 = vunpack.c.h.b16 %v2337
        %v2712 = vunpack.c.l.b16 %v2338
        %v2713 = vunpack.c.h.b16 %v2338
        %v2714 = vunpack.c.l.b16 %v2339
        %v2715 = vunpack.c.h.b16 %v2339
        %v2716 = vunpack.c.l.b16 %v2340
        %v2717 = vunpack.c.h.b16 %v2340
        %v2718 = vunpack.c.l.b16 %v2341
        %v2719 = vunpack.c.h.b16 %v2341
        %v2720 = vunpack.c.l.b16 %v2342
        %v2721 = vunpack.c.h.b16 %v2342
        %v2722 = vunpack.c.l.b16 %v2343
        %v2723 = vunpack.c.h.b16 %v2343
        %v2724 = vunpack.c.l.b16 %v2344
        %v2725 = vunpack.c.h.b16 %v2344
        %v2726 = vunpack.c.l.b16 %v2345
        %v2727 = vunpack.c.h.b16 %v2345
        %v2728 = vunpack.c.l.b16 %v2346
        %v2729 = vunpack.c.h.b16 %v2346
        %v2730 = vunpack.c.l.b16 %v2347
        %v2731 = vunpack.c.h.b16 %v2347
        %v2732 = vpack.c.b16 %v2480, %v2476
        %v2733 = vpack.c.b16 %v2481, %v2477
        %v2734 = vpack.c.b16 %v2482, %v2478
        %v2735 = vpack.c.b16 %v2483, %v2479
        %v2736 = vpack.c.b16 %v2488, %v2484
        %v2737 = vpack.c.b16 %v2489, %v2485
        %v2738 = vpack.c.b16 %v2490, %v2486
        %v2739 = vpack.c.b16 %v2491, %v2487
        %v2740 = vpack.c.b16 %v2496, %v2492
        %v2741 = vpack.c.b16 %v2497, %v2493
        %v2742 = vpack.c.b16 %v2498, %v2494
        %v2743 = vpack.c.b16 %v2499, %v2495
        %v2744 = vpack.c.b16 %v2504, %v2500
        %v2745 = vpack.c.b16 %v2505, %v2501
        %v2746 = vpack.c.b16 %v2506, %v2502
        %v2747 = vpack.c.b16 %v2507, %v2503
        %v2748 = vpack.c.b16 %v2512, %v2508
        %v2749 = vpack.c.b16 %v2513, %v2509
        %v2750 = vpack.c.b16 %v2514, %v2510
        %v2751 = vpack.c.b16 %v2515, %v2511
        %v2752 = vpack.c.b16 %v2520, %v2516
        %v2753 = vpack.c.b16 %v2521, %v2517
        %v2754 = vpack.c.b16 %v2522, %v2518
        %v2755 = vpack.c.b16 %v2523, %v2519
        %v2756 = vpack.c.b16 %v2528, %v2524
        %v2757 = vpack.c.b16 %v2529, %v2525
        %v2758 = vpack.c.b16 %v2530, %v2526
        %v2759 = vpack.c.b16 %v2531, %v2527
        %v2760 = vpack.c.b16 %v2536, %v2532
        %v2761 = vpack.c.b16 %v2537, %v2533
        %v2762 = vpack.c.b16 %v2538, %v2534
        %v2763 = vpack.c.b16 %v2539, %v2535
        %v2764 = vpack.c.b16 %v2544, %v2540
        %v2765 = vpack.c.b16 %v2545, %v2541
        %v2766 = vpack.c.b16 %v2546, %v2542
        %v2767 = vpack.c.b16 %v2547, %v2543
        %v2768 = vpack.c.b16 %v2552, %v2548
        %v2769 = vpack.c.b16 %v2553, %v2549
        %v2770 = vpack.c.b16 %v2554, %v2550
        %v2771 = vpack.c.b16 %v2555, %v2551
        %v2772 = vpack.c.b16 %v2560, %v2556
        %v2773 = vpack.c.b16 %v2561, %v2557
        %v2774 = vpack.c.b16 %v2562, %v2558
        %v2775 = vpack.c.b16 %v2563, %v2559
        %v2776 = vpack.c.b16 %v2568, %v2564
        %v2777 = vpack.c.b16 %v2569, %v2565
        %v2778 = vpack.c.b16 %v2570, %v2566
        %v2779 = vpack.c.b16 %v2571, %v2567
        %v2780 = vpack.c.b16 %v2576, %v2572
        %v2781 = vpack.c.b16 %v2577, %v2573
        %v2782 = vpack.c.b16 %v2578, %v2574
        %v2783 = vpack.c.b16 %v2579, %v2575
        %v2784 = vpack.c.b16 %v2584, %v2580
        %v2785 = vpack.c.b16 %v2585, %v2581
        %v2786 = vpack.c.b16 %v2586, %v2582
        %v2787 = vpack.c.b16 %v2587, %v2583
        %v2788 = vpack.c.b16 %v2592, %v2588
        %v2789 = vpack.c.b16 %v2593, %v2589
        %v2790 = vpack.c.b16 %v2594, %v2590
        %v2791 = vpack.c.b16 %v2595, %v2591
        %v2792 = vpack.c.b16 %v2600, %v2596
        %v2793 = vpack.c.b16 %v2601, %v2597
        %v2794 = vpack.c.b16 %v2602, %v2598
        %v2795 = vpack.c.b16 %v2603, %v2599
        %v2796 = vpack.c.b16 %v2608, %v2604
        %v2797 = vpack.c.b16 %v2609, %v2605
        %v2798 = vpack.c.b16 %v2610, %v2606
        %v2799 = vpack.c.b16 %v2611, %v2607
        %v2800 = vpack.c.b16 %v2616, %v2612
        %v2801 = vpack.c.b16 %v2617, %v2613
        %v2802 = vpack.c.b16 %v2618, %v2614
        %v2803 = vpack.c.b16 %v2619, %v2615
        %v2804 = vpack.c.b16 %v2624, %v2620
        %v2805 = vpack.c.b16 %v2625, %v2621
        %v2806 = vpack.c.b16 %v2626, %v2622
        %v2807 = vpack.c.b16 %v2627, %v2623
        %v2808 = vpack.c.b16 %v2632, %v2628
        %v2809 = vpack.c.b16 %v2633, %v2629
        %v2810 = vpack.c.b16 %v2634, %v2630
        %v2811 = vpack.c.b16 %v2635, %v2631
        %v2812 = vpack.c.b16 %v2640, %v2636
        %v2813 = vpack.c.b16 %v2641, %v2637
        %v2814 = vpack.c.b16 %v2642, %v2638
        %v2815 = vpack.c.b16 %v2643, %v2639
        %v2816 = vpack.c.b16 %v2648, %v2644
        %v2817 = vpack.c.b16 %v2649, %v2645
        %v2818 = vpack.c.b16 %v2650, %v2646
        %v2819 = vpack.c.b16 %v2651, %v2647
        %v2820 = vpack.c.b16 %v2656, %v2652
        %v2821 = vpack.c.b16 %v2657, %v2653
        %v2822 = vpack.c.b16 %v2658, %v2654
        %v2823 = vpack.c.b16 %v2659, %v2655
        %v2824 = vpack.c.b16 %v2664, %v2660
        %v2825 = vpack.c.b16 %v2665, %v2661
        %v2826 = vpack.c.b16 %v2666, %v2662
        %v2827 = vpack.c.b16 %v2667, %v2663
        %v2828 = vpack.c.b16 %v2672, %v2668
        %v2829 = vpack.c.b16 %v2673, %v2669
        %v2830 = vpack.c.b16 %v2674, %v2670
        %v2831 = vpack.c.b16 %v2675, %v2671
        %v2832 = vpack.c.b16 %v2680, %v2676
        %v2833 = vpack.c.b16 %v2681, %v2677
        %v2834 = vpack.c.b16 %v2682, %v2678
        %v2835 = vpack.c.b16 %v2683, %v2679
        %v2836 = vpack.c.b16 %v2688, %v2684
        %v2837 = vpack.c.b16 %v2689, %v2685
        %v2838 = vpack.c.b16 %v2690, %v2686
        %v2839 = vpack.c.b16 %v2691, %v2687
        %v2840 = vpack.c.b16 %v2696, %v2692
        %v2841 = vpack.c.b16 %v2697, %v2693
        %v2842 = vpack.c.b16 %v2698, %v2694
        %v2843 = vpack.c.b16 %v2699, %v2695
        %v2844 = vpack.c.b16 %v2704, %v2700
        %v2845 = vpack.c.b16 %v2705, %v2701
        %v2846 = vpack.c.b16 %v2706, %v2702
        %v2847 = vpack.c.b16 %v2707, %v2703
        %v2848 = vpack.c.b16 %v2712, %v2708
        %v2849 = vpack.c.b16 %v2713, %v2709
        %v2850 = vpack.c.b16 %v2714, %v2710
        %v2851 = vpack.c.b16 %v2715, %v2711
        %v2852 = vpack.c.b16 %v2720, %v2716
        %v2853 = vpack.c.b16 %v2721, %v2717
        %v2854 = vpack.c.b16 %v2722, %v2718
        %v2855 = vpack.c.b16 %v2723, %v2719
        %v2856 = vpack.c.b16 %v2728, %v2724
        %v2857 = vpack.c.b16 %v2729, %v2725
        %v2858 = vpack.c.b16 %v2730, %v2726
        %v2859 = vpack.c.b16 %v2731, %v2727
        %2988 = vmatprep.subr.bf16.mxu0 %v2761
        %2989 = vmatpush1.bf16.msra.mxu0 %v2760
        %2990 = vmatprep.subr.bf16.mxu0 %v2757
        %2991 = vmatpush1.bf16.msra.mxu0 %v2756
        %2992 = vmatprep.subr.bf16.mxu0 %v2753
        %2993 = vmatpush1.bf16.msra.mxu0 %v2752
        %2994 = vmatprep.subr.bf16.mxu0 %v2749
        %2995 = vmatpush1.bf16.msra.mxu0 %v2748
        %2996 = vmatprep.subr.bf16.mxu0 %v2745
        %2997 = vmatpush1.bf16.msra.mxu0 %v2744
        %2998 = vmatprep.subr.bf16.mxu0 %v2741
        %2999 = vmatpush1.bf16.msra.mxu0 %v2740
        %3000 = vmatprep.subr.bf16.mxu0 %v2737
        %3001 = vmatpush1.bf16.msra.mxu0 %v2736
        %3002 = vmatprep.subr.bf16.mxu0 %v2733
        %3003 = vmatpush1.bf16.msra.mxu0 %v2732
        %3004 = vmatprep.subr.bf16.mxu0 %v2793
        %3005 = vmatpush2.bf16.msra.mxu0 %v2792
        %3006 = vmatprep.subr.bf16.mxu0 %v2789
        %3007 = vmatpush2.bf16.msra.mxu0 %v2788
        %3008 = vmatprep.subr.bf16.mxu0 %v2785
        %3009 = vmatpush2.bf16.msra.mxu0 %v2784
        %3010 = vmatprep.subr.bf16.mxu0 %v2781
        %3011 = vmatpush2.bf16.msra.mxu0 %v2780
        %3012 = vmatprep.subr.bf16.mxu0 %v2777
        %3013 = vmatpush2.bf16.msra.mxu0 %v2776
        %3014 = vmatprep.subr.bf16.mxu0 %v2773
        %3015 = vmatpush2.bf16.msra.mxu0 %v2772
        %3016 = vmatprep.subr.bf16.mxu0 %v2769
        %3017 = vmatpush2.bf16.msra.mxu0 %v2768
        %3018 = vmatprep.subr.bf16.mxu0 %v2765
        %3019 = vmatpush2.bf16.msra.mxu0 %v2764
        %3020 = vmatprep.mubr.bf16.mxu0 %v2217
        %3021 = vmatmul.mubr.bf16.gmra.mxu0 %v2216
        %v3022 = vpop.f32.mrf.mxu0
        %v3023 = vadd.f32 0.0, %v3022
        %v3024 = vpop.f32.mrf.mxu0
        %v3025 = vadd.f32 0.0, %v3024
        %v3026 = vpop.f32.mrf.mxu0
        %v3027 = vpop.f32.mrf.mxu0
        %3028 = vdwg.mxu0
        %3029 = vmatprep.subr.bf16.mxu0 %v2825
        %3030 = vmatpush1.bf16.msra.mxu0 %v2824
        %3031 = vmatprep.subr.bf16.mxu0 %v2821
        %3032 = vmatpush1.bf16.msra.mxu0 %v2820
        %3033 = vmatprep.subr.bf16.mxu0 %v2817
        %3034 = vmatpush1.bf16.msra.mxu0 %v2816
        %3035 = vmatprep.subr.bf16.mxu0 %v2813
        %3036 = vmatpush1.bf16.msra.mxu0 %v2812
        %3037 = vmatprep.subr.bf16.mxu0 %v2809
        %3038 = vmatpush1.bf16.msra.mxu0 %v2808
        %3039 = vmatprep.subr.bf16.mxu0 %v2805
        %3040 = vmatpush1.bf16.msra.mxu0 %v2804
        %3041 = vmatprep.subr.bf16.mxu0 %v2801
        %3042 = vmatpush1.bf16.msra.mxu0 %v2800
        %3043 = vmatprep.subr.bf16.mxu0 %v2797
        %3044 = vmatpush1.bf16.msra.mxu0 %v2796
        %3045 = vmatprep.subr.bf16.mxu0 %v2857
        %3046 = vmatpush2.bf16.msra.mxu0 %v2856
        %3047 = vmatprep.subr.bf16.mxu0 %v2853
        %3048 = vmatpush2.bf16.msra.mxu0 %v2852
        %3049 = vmatprep.subr.bf16.mxu0 %v2849
        %3050 = vmatpush2.bf16.msra.mxu0 %v2848
        %3051 = vmatprep.subr.bf16.mxu0 %v2845
        %3052 = vmatpush2.bf16.msra.mxu0 %v2844
        %3053 = vmatprep.subr.bf16.mxu0 %v2841
        %3054 = vmatpush2.bf16.msra.mxu0 %v2840
        %3055 = vmatprep.subr.bf16.mxu0 %v2837
        %3056 = vmatpush2.bf16.msra.mxu0 %v2836
        %3057 = vmatprep.subr.bf16.mxu0 %v2833
        %3058 = vmatpush2.bf16.msra.mxu0 %v2832
        %3059 = vmatprep.subr.bf16.mxu0 %v2829
        %3060 = vmatpush2.bf16.msra.mxu0 %v2828
        %3061 = vmatprep.mubr.bf16.mxu0 %v2219
        %3062 = vmatmul.mubr.bf16.gmra.mxu0 %v2218
        %v3063 = vpop.f32.mrf.mxu0
        %v3064 = vadd.f32 %v3023, %v3063
        %v3065 = vpop.f32.mrf.mxu0
        %v3066 = vadd.f32 %v3025, %v3065
        %v3067 = vpop.f32.mrf.mxu0
        %v3068 = vpop.f32.mrf.mxu0
        %3069 = vdwg.mxu0
        %3070 = vmatprep.subr.bf16.mxu0 %v2763
        %3071 = vmatpush1.bf16.msra.mxu0 %v2762
        %3072 = vmatprep.subr.bf16.mxu0 %v2759
        %3073 = vmatpush1.bf16.msra.mxu0 %v2758
        %3074 = vmatprep.subr.bf16.mxu0 %v2755
        %3075 = vmatpush1.bf16.msra.mxu0 %v2754
        %3076 = vmatprep.subr.bf16.mxu0 %v2751
        %3077 = vmatpush1.bf16.msra.mxu0 %v2750
        %3078 = vmatprep.subr.bf16.mxu0 %v2747
        %3079 = vmatpush1.bf16.msra.mxu0 %v2746
        %3080 = vmatprep.subr.bf16.mxu0 %v2743
        %3081 = vmatpush1.bf16.msra.mxu0 %v2742
        %3082 = vmatprep.subr.bf16.mxu0 %v2739
        %3083 = vmatpush1.bf16.msra.mxu0 %v2738
        %3084 = vmatprep.subr.bf16.mxu0 %v2735
        %3085 = vmatpush1.bf16.msra.mxu0 %v2734
        %3086 = vmatprep.subr.bf16.mxu0 %v2795
        %3087 = vmatpush2.bf16.msra.mxu0 %v2794
        %3088 = vmatprep.subr.bf16.mxu0 %v2791
        %3089 = vmatpush2.bf16.msra.mxu0 %v2790
        %3090 = vmatprep.subr.bf16.mxu0 %v2787
        %3091 = vmatpush2.bf16.msra.mxu0 %v2786
        %3092 = vmatprep.subr.bf16.mxu0 %v2783
        %3093 = vmatpush2.bf16.msra.mxu0 %v2782
        %3094 = vmatprep.subr.bf16.mxu0 %v2779
        %3095 = vmatpush2.bf16.msra.mxu0 %v2778
        %3096 = vmatprep.subr.bf16.mxu0 %v2775
        %3097 = vmatpush2.bf16.msra.mxu0 %v2774
        %3098 = vmatprep.subr.bf16.mxu0 %v2771
        %3099 = vmatpush2.bf16.msra.mxu0 %v2770
        %3100 = vmatprep.subr.bf16.mxu0 %v2767
        %3101 = vmatpush2.bf16.msra.mxu0 %v2766
        %3102 = vmatprep.mubr.bf16.mxu0 %v2217
        %3103 = vmatmul.mubr.bf16.gmra.mxu0 %v2216
        %v3104 = vpop.f32.mrf.mxu0
        %v3105 = vadd.f32 0.0, %v3104
        %v3106 = vpop.f32.mrf.mxu0
        %v3107 = vadd.f32 0.0, %v3106
        %v3108 = vpop.f32.mrf.mxu0
        %v3109 = vpop.f32.mrf.mxu0
        %3110 = vdwg.mxu0
        %3111 = vmatprep.subr.bf16.mxu0 %v2827
        %3112 = vmatpush1.bf16.msra.mxu0 %v2826
        %3113 = vmatprep.subr.bf16.mxu0 %v2823
        %3114 = vmatpush1.bf16.msra.mxu0 %v2822
        %3115 = vmatprep.subr.bf16.mxu0 %v2819
        %3116 = vmatpush1.bf16.msra.mxu0 %v2818
        %3117 = vmatprep.subr.bf16.mxu0 %v2815
        %3118 = vmatpush1.bf16.msra.mxu0 %v2814
        %3119 = vmatprep.subr.bf16.mxu0 %v2811
        %3120 = vmatpush1.bf16.msra.mxu0 %v2810
        %3121 = vmatprep.subr.bf16.mxu0 %v2807
        %3122 = vmatpush1.bf16.msra.mxu0 %v2806
        %3123 = vmatprep.subr.bf16.mxu0 %v2803
        %3124 = vmatpush1.bf16.msra.mxu0 %v2802
        %3125 = vmatprep.subr.bf16.mxu0 %v2799
        %3126 = vmatpush1.bf16.msra.mxu0 %v2798
        %3127 = vmatprep.subr.bf16.mxu0 %v2859
        %3128 = vmatpush2.bf16.msra.mxu0 %v2858
        %3129 = vmatprep.subr.bf16.mxu0 %v2855
        %3130 = vmatpush2.bf16.msra.mxu0 %v2854
        %3131 = vmatprep.subr.bf16.mxu0 %v2851
        %3132 = vmatpush2.bf16.msra.mxu0 %v2850
        %3133 = vmatprep.subr.bf16.mxu0 %v2847
        %3134 = vmatpush2.bf16.msra.mxu0 %v2846
        %3135 = vmatprep.subr.bf16.mxu0 %v2843
        %3136 = vmatpush2.bf16.msra.mxu0 %v2842
        %3137 = vmatprep.subr.bf16.mxu0 %v2839
        %3138 = vmatpush2.bf16.msra.mxu0 %v2838
        %3139 = vmatprep.subr.bf16.mxu0 %v2835
        %3140 = vmatpush2.bf16.msra.mxu0 %v2834
        %3141 = vmatprep.subr.bf16.mxu0 %v2831
        %3142 = vmatpush2.bf16.msra.mxu0 %v2830
        %3143 = vmatprep.mubr.bf16.mxu0 %v2219
        %3144 = vmatmul.mubr.bf16.gmra.mxu0 %v2218
        %v3145 = vpop.f32.mrf.mxu0
        %v3146 = vadd.f32 %v3105, %v3145
        %v3147 = vpop.f32.mrf.mxu0
        %v3148 = vadd.f32 %v3107, %v3147
        %v3149 = vpop.f32.mrf.mxu0
        %v3150 = vpop.f32.mrf.mxu0
        %3151 = vdwg.mxu0
        %vm3152 = vcmp.ge.f32.partialorder %v3064, 0.0
        %vm3153 = vcmp.ge.f32.partialorder %v3066, 0.0
        %vm3154 = vcmp.ge.f32.partialorder %v3146, 0.0
        %vm3155 = vcmp.ge.f32.partialorder %v3148, 0.0
        %v3156 = vsel %vm3152, 1.4142135, 0.28284273
        %v3157 = vsel %vm3153, 1.4142135, 0.28284273
        %v3158 = vsel %vm3154, 1.4142135, 0.28284273
        %v3159 = vsel %vm3155, 1.4142135, 0.28284273
        %v3160 = vmul.f32 %v3064, %v3156
        %v3161 = vmul.f32 %v3066, %v3157
        %v3162 = vmul.f32 %v3146, %v3158
        %v3163 = vmul.f32 %v3148, %v3159
        %v3164 = vpack.c.bf16 %v3160, %v3160
        %v3165 = vpack.c.bf16 %v3161, %v3161
        %v3166 = vpack.c.bf16 %v3162, %v3162
        %v3167 = vpack.c.bf16 %v3163, %v3163
        %v3168 = vld [vmem:[#allocation10] sm:$0xff]
        %v3169 = vld [vmem:[#allocation10 + $0x8] sm:$0xff]
        %v3170 = vld [vmem:[#allocation10 + $0x10] sm:$0xff]
        %v3171 = vld [vmem:[#allocation10 + $0x18] sm:$0xff]
        %v3172 = vld [vmem:[#allocation10 + $0x20] sm:$0xff]
        %v3173 = vld [vmem:[#allocation10 + $0x28] sm:$0xff]
        %v3174 = vld [vmem:[#allocation10 + $0x30] sm:$0xff]
        %v3175 = vld [vmem:[#allocation10 + $0x38] sm:$0xff]
        %v3176 = vld [vmem:[#allocation10 + $0x40] sm:$0xff]
        %v3177 = vld [vmem:[#allocation10 + $0x48] sm:$0xff]
        %v3178 = vld [vmem:[#allocation10 + $0x50] sm:$0xff]
        %v3179 = vld [vmem:[#allocation10 + $0x58] sm:$0xff]
        %v3180 = vld [vmem:[#allocation10 + $0x60] sm:$0xff]
        %v3181 = vld [vmem:[#allocation10 + $0x68] sm:$0xff]
        %v3182 = vld [vmem:[#allocation10 + $0x70] sm:$0xff]
        %v3183 = vld [vmem:[#allocation10 + $0x78] sm:$0xff]
        %v3184 = vld [vmem:[#allocation10 + $0x80] sm:$0xff]
        %v3185 = vld [vmem:[#allocation10 + $0x88] sm:$0xff]
        %v3186 = vld [vmem:[#allocation10 + $0x90] sm:$0xff]
        %v3187 = vld [vmem:[#allocation10 + $0x98] sm:$0xff]
        %v3188 = vld [vmem:[#allocation10 + $0xa0] sm:$0xff]
        %v3189 = vld [vmem:[#allocation10 + $0xa8] sm:$0xff]
        %v3190 = vld [vmem:[#allocation10 + $0xb0] sm:$0xff]
        %v3191 = vld [vmem:[#allocation10 + $0xb8] sm:$0xff]
        %v3192 = vld [vmem:[#allocation10 + $0xc0] sm:$0xff]
        %v3193 = vld [vmem:[#allocation10 + $0xc8] sm:$0xff]
        %v3194 = vld [vmem:[#allocation10 + $0xd0] sm:$0xff]
        %v3195 = vld [vmem:[#allocation10 + $0xd8] sm:$0xff]
        %v3196 = vld [vmem:[#allocation10 + $0xe0] sm:$0xff]
        %v3197 = vld [vmem:[#allocation10 + $0xe8] sm:$0xff]
        %v3198 = vld [vmem:[#allocation10 + $0xf0] sm:$0xff]
        %v3199 = vld [vmem:[#allocation10 + $0xf8] sm:$0xff]
        %v3200 = vld [vmem:[#allocation10 + $0x100] sm:$0xff]
        %v3201 = vld [vmem:[#allocation10 + $0x108] sm:$0xff]
        %v3202 = vld [vmem:[#allocation10 + $0x110] sm:$0xff]
        %v3203 = vld [vmem:[#allocation10 + $0x118] sm:$0xff]
        %v3204 = vld [vmem:[#allocation10 + $0x120] sm:$0xff]
        %v3205 = vld [vmem:[#allocation10 + $0x128] sm:$0xff]
        %v3206 = vld [vmem:[#allocation10 + $0x130] sm:$0xff]
        %v3207 = vld [vmem:[#allocation10 + $0x138] sm:$0xff]
        %v3208 = vld [vmem:[#allocation10 + $0x140] sm:$0xff]
        %v3209 = vld [vmem:[#allocation10 + $0x148] sm:$0xff]
        %v3210 = vld [vmem:[#allocation10 + $0x150] sm:$0xff]
        %v3211 = vld [vmem:[#allocation10 + $0x158] sm:$0xff]
        %v3212 = vld [vmem:[#allocation10 + $0x160] sm:$0xff]
        %v3213 = vld [vmem:[#allocation10 + $0x168] sm:$0xff]
        %v3214 = vld [vmem:[#allocation10 + $0x170] sm:$0xff]
        %v3215 = vld [vmem:[#allocation10 + $0x178] sm:$0xff]
        %v3216 = vld [vmem:[#allocation10 + $0x180] sm:$0xff]
        %v3217 = vld [vmem:[#allocation10 + $0x188] sm:$0xff]
        %v3218 = vld [vmem:[#allocation10 + $0x190] sm:$0xff]
        %v3219 = vld [vmem:[#allocation10 + $0x198] sm:$0xff]
        %v3220 = vld [vmem:[#allocation10 + $0x1a0] sm:$0xff]
        %v3221 = vld [vmem:[#allocation10 + $0x1a8] sm:$0xff]
        %v3222 = vld [vmem:[#allocation10 + $0x1b0] sm:$0xff]
        %v3223 = vld [vmem:[#allocation10 + $0x1b8] sm:$0xff]
        %v3224 = vld [vmem:[#allocation10 + $0x1c0] sm:$0xff]
        %v3225 = vld [vmem:[#allocation10 + $0x1c8] sm:$0xff]
        %v3226 = vld [vmem:[#allocation10 + $0x1d0] sm:$0xff]
        %v3227 = vld [vmem:[#allocation10 + $0x1d8] sm:$0xff]
        %v3228 = vld [vmem:[#allocation10 + $0x1e0] sm:$0xff]
        %v3229 = vld [vmem:[#allocation10 + $0x1e8] sm:$0xff]
        %v3230 = vld [vmem:[#allocation10 + $0x1f0] sm:$0xff]
        %v3231 = vld [vmem:[#allocation10 + $0x1f8] sm:$0xff]
        %v3232 = vld [vmem:[#allocation10 + $0x200] sm:$0xff]
        %v3233 = vld [vmem:[#allocation10 + $0x208] sm:$0xff]
        %v3234 = vld [vmem:[#allocation10 + $0x210] sm:$0xff]
        %v3235 = vld [vmem:[#allocation10 + $0x218] sm:$0xff]
        %v3236 = vld [vmem:[#allocation10 + $0x220] sm:$0xff]
        %v3237 = vld [vmem:[#allocation10 + $0x228] sm:$0xff]
        %v3238 = vld [vmem:[#allocation10 + $0x230] sm:$0xff]
        %v3239 = vld [vmem:[#allocation10 + $0x238] sm:$0xff]
        %v3240 = vld [vmem:[#allocation10 + $0x240] sm:$0xff]
        %v3241 = vld [vmem:[#allocation10 + $0x248] sm:$0xff]
        %v3242 = vld [vmem:[#allocation10 + $0x250] sm:$0xff]
        %v3243 = vld [vmem:[#allocation10 + $0x258] sm:$0xff]
        %v3244 = vld [vmem:[#allocation10 + $0x260] sm:$0xff]
        %v3245 = vld [vmem:[#allocation10 + $0x268] sm:$0xff]
        %v3246 = vld [vmem:[#allocation10 + $0x270] sm:$0xff]
        %v3247 = vld [vmem:[#allocation10 + $0x278] sm:$0xff]
        %v3248 = vld [vmem:[#allocation10 + $0x280] sm:$0xff]
        %v3249 = vld [vmem:[#allocation10 + $0x288] sm:$0xff]
        %v3250 = vld [vmem:[#allocation10 + $0x290] sm:$0xff]
        %v3251 = vld [vmem:[#allocation10 + $0x298] sm:$0xff]
        %v3252 = vld [vmem:[#allocation10 + $0x2a0] sm:$0xff]
        %v3253 = vld [vmem:[#allocation10 + $0x2a8] sm:$0xff]
        %v3254 = vld [vmem:[#allocation10 + $0x2b0] sm:$0xff]
        %v3255 = vld [vmem:[#allocation10 + $0x2b8] sm:$0xff]
        %v3256 = vld [vmem:[#allocation10 + $0x2c0] sm:$0xff]
        %v3257 = vld [vmem:[#allocation10 + $0x2c8] sm:$0xff]
        %v3258 = vld [vmem:[#allocation10 + $0x2d0] sm:$0xff]
        %v3259 = vld [vmem:[#allocation10 + $0x2d8] sm:$0xff]
        %v3260 = vld [vmem:[#allocation10 + $0x2e0] sm:$0xff]
        %v3261 = vld [vmem:[#allocation10 + $0x2e8] sm:$0xff]
        %v3262 = vld [vmem:[#allocation10 + $0x2f0] sm:$0xff]
        %v3263 = vld [vmem:[#allocation10 + $0x2f8] sm:$0xff]
        %v3264 = vld [vmem:[#allocation10 + $0x300] sm:$0xff]
        %v3265 = vld [vmem:[#allocation10 + $0x308] sm:$0xff]
        %v3266 = vld [vmem:[#allocation10 + $0x310] sm:$0xff]
        %v3267 = vld [vmem:[#allocation10 + $0x318] sm:$0xff]
        %v3268 = vld [vmem:[#allocation10 + $0x320] sm:$0xff]
        %v3269 = vld [vmem:[#allocation10 + $0x328] sm:$0xff]
        %v3270 = vld [vmem:[#allocation10 + $0x330] sm:$0xff]
        %v3271 = vld [vmem:[#allocation10 + $0x338] sm:$0xff]
        %v3272 = vld [vmem:[#allocation10 + $0x340] sm:$0xff]
        %v3273 = vld [vmem:[#allocation10 + $0x348] sm:$0xff]
        %v3274 = vld [vmem:[#allocation10 + $0x350] sm:$0xff]
        %v3275 = vld [vmem:[#allocation10 + $0x358] sm:$0xff]
        %v3276 = vld [vmem:[#allocation10 + $0x360] sm:$0xff]
        %v3277 = vld [vmem:[#allocation10 + $0x368] sm:$0xff]
        %v3278 = vld [vmem:[#allocation10 + $0x370] sm:$0xff]
        %v3279 = vld [vmem:[#allocation10 + $0x378] sm:$0xff]
        %v3280 = vld [vmem:[#allocation10 + $0x380] sm:$0xff]
        %v3281 = vld [vmem:[#allocation10 + $0x388] sm:$0xff]
        %v3282 = vld [vmem:[#allocation10 + $0x390] sm:$0xff]
        %v3283 = vld [vmem:[#allocation10 + $0x398] sm:$0xff]
        %v3284 = vld [vmem:[#allocation10 + $0x3a0] sm:$0xff]
        %v3285 = vld [vmem:[#allocation10 + $0x3a8] sm:$0xff]
        %v3286 = vld [vmem:[#allocation10 + $0x3b0] sm:$0xff]
        %v3287 = vld [vmem:[#allocation10 + $0x3b8] sm:$0xff]
        %v3288 = vld [vmem:[#allocation10 + $0x3c0] sm:$0xff]
        %v3289 = vld [vmem:[#allocation10 + $0x3c8] sm:$0xff]
        %v3290 = vld [vmem:[#allocation10 + $0x3d0] sm:$0xff]
        %v3291 = vld [vmem:[#allocation10 + $0x3d8] sm:$0xff]
        %v3292 = vld [vmem:[#allocation10 + $0x3e0] sm:$0xff]
        %v3293 = vld [vmem:[#allocation10 + $0x3e8] sm:$0xff]
        %v3294 = vld [vmem:[#allocation10 + $0x3f0] sm:$0xff]
        %v3295 = vld [vmem:[#allocation10 + $0x3f8] sm:$0xff]
        %v3424 = vunpack.c.l.b16 %v3168
        %v3425 = vunpack.c.h.b16 %v3168
        %v3426 = vunpack.c.l.b16 %v3169
        %v3427 = vunpack.c.h.b16 %v3169
        %v3428 = vunpack.c.l.b16 %v3170
        %v3429 = vunpack.c.h.b16 %v3170
        %v3430 = vunpack.c.l.b16 %v3171
        %v3431 = vunpack.c.h.b16 %v3171
        %v3432 = vunpack.c.l.b16 %v3172
        %v3433 = vunpack.c.h.b16 %v3172
        %v3434 = vunpack.c.l.b16 %v3173
        %v3435 = vunpack.c.h.b16 %v3173
        %v3436 = vunpack.c.l.b16 %v3174
        %v3437 = vunpack.c.h.b16 %v3174
        %v3438 = vunpack.c.l.b16 %v3175
        %v3439 = vunpack.c.h.b16 %v3175
        %v3440 = vunpack.c.l.b16 %v3176
        %v3441 = vunpack.c.h.b16 %v3176
        %v3442 = vunpack.c.l.b16 %v3177
        %v3443 = vunpack.c.h.b16 %v3177
        %v3444 = vunpack.c.l.b16 %v3178
        %v3445 = vunpack.c.h.b16 %v3178
        %v3446 = vunpack.c.l.b16 %v3179
        %v3447 = vunpack.c.h.b16 %v3179
        %v3448 = vunpack.c.l.b16 %v3180
        %v3449 = vunpack.c.h.b16 %v3180
        %v3450 = vunpack.c.l.b16 %v3181
        %v3451 = vunpack.c.h.b16 %v3181
        %v3452 = vunpack.c.l.b16 %v3182
        %v3453 = vunpack.c.h.b16 %v3182
        %v3454 = vunpack.c.l.b16 %v3183
        %v3455 = vunpack.c.h.b16 %v3183
        %v3456 = vunpack.c.l.b16 %v3184
        %v3457 = vunpack.c.h.b16 %v3184
        %v3458 = vunpack.c.l.b16 %v3185
        %v3459 = vunpack.c.h.b16 %v3185
        %v3460 = vunpack.c.l.b16 %v3186
        %v3461 = vunpack.c.h.b16 %v3186
        %v3462 = vunpack.c.l.b16 %v3187
        %v3463 = vunpack.c.h.b16 %v3187
        %v3464 = vunpack.c.l.b16 %v3188
        %v3465 = vunpack.c.h.b16 %v3188
        %v3466 = vunpack.c.l.b16 %v3189
        %v3467 = vunpack.c.h.b16 %v3189
        %v3468 = vunpack.c.l.b16 %v3190
        %v3469 = vunpack.c.h.b16 %v3190
        %v3470 = vunpack.c.l.b16 %v3191
        %v3471 = vunpack.c.h.b16 %v3191
        %v3472 = vunpack.c.l.b16 %v3192
        %v3473 = vunpack.c.h.b16 %v3192
        %v3474 = vunpack.c.l.b16 %v3193
        %v3475 = vunpack.c.h.b16 %v3193
        %v3476 = vunpack.c.l.b16 %v3194
        %v3477 = vunpack.c.h.b16 %v3194
        %v3478 = vunpack.c.l.b16 %v3195
        %v3479 = vunpack.c.h.b16 %v3195
        %v3480 = vunpack.c.l.b16 %v3196
        %v3481 = vunpack.c.h.b16 %v3196
        %v3482 = vunpack.c.l.b16 %v3197
        %v3483 = vunpack.c.h.b16 %v3197
        %v3484 = vunpack.c.l.b16 %v3198
        %v3485 = vunpack.c.h.b16 %v3198
        %v3486 = vunpack.c.l.b16 %v3199
        %v3487 = vunpack.c.h.b16 %v3199
        %v3488 = vunpack.c.l.b16 %v3200
        %v3489 = vunpack.c.h.b16 %v3200
        %v3490 = vunpack.c.l.b16 %v3201
        %v3491 = vunpack.c.h.b16 %v3201
        %v3492 = vunpack.c.l.b16 %v3202
        %v3493 = vunpack.c.h.b16 %v3202
        %v3494 = vunpack.c.l.b16 %v3203
        %v3495 = vunpack.c.h.b16 %v3203
        %v3496 = vunpack.c.l.b16 %v3204
        %v3497 = vunpack.c.h.b16 %v3204
        %v3498 = vunpack.c.l.b16 %v3205
        %v3499 = vunpack.c.h.b16 %v3205
        %v3500 = vunpack.c.l.b16 %v3206
        %v3501 = vunpack.c.h.b16 %v3206
        %v3502 = vunpack.c.l.b16 %v3207
        %v3503 = vunpack.c.h.b16 %v3207
        %v3504 = vunpack.c.l.b16 %v3208
        %v3505 = vunpack.c.h.b16 %v3208
        %v3506 = vunpack.c.l.b16 %v3209
        %v3507 = vunpack.c.h.b16 %v3209
        %v3508 = vunpack.c.l.b16 %v3210
        %v3509 = vunpack.c.h.b16 %v3210
        %v3510 = vunpack.c.l.b16 %v3211
        %v3511 = vunpack.c.h.b16 %v3211
        %v3512 = vunpack.c.l.b16 %v3212
        %v3513 = vunpack.c.h.b16 %v3212
        %v3514 = vunpack.c.l.b16 %v3213
        %v3515 = vunpack.c.h.b16 %v3213
        %v3516 = vunpack.c.l.b16 %v3214
        %v3517 = vunpack.c.h.b16 %v3214
        %v3518 = vunpack.c.l.b16 %v3215
        %v3519 = vunpack.c.h.b16 %v3215
        %v3520 = vunpack.c.l.b16 %v3216
        %v3521 = vunpack.c.h.b16 %v3216
        %v3522 = vunpack.c.l.b16 %v3217
        %v3523 = vunpack.c.h.b16 %v3217
        %v3524 = vunpack.c.l.b16 %v3218
        %v3525 = vunpack.c.h.b16 %v3218
        %v3526 = vunpack.c.l.b16 %v3219
        %v3527 = vunpack.c.h.b16 %v3219
        %v3528 = vunpack.c.l.b16 %v3220
        %v3529 = vunpack.c.h.b16 %v3220
        %v3530 = vunpack.c.l.b16 %v3221
        %v3531 = vunpack.c.h.b16 %v3221
        %v3532 = vunpack.c.l.b16 %v3222
        %v3533 = vunpack.c.h.b16 %v3222
        %v3534 = vunpack.c.l.b16 %v3223
        %v3535 = vunpack.c.h.b16 %v3223
        %v3536 = vunpack.c.l.b16 %v3224
        %v3537 = vunpack.c.h.b16 %v3224
        %v3538 = vunpack.c.l.b16 %v3225
        %v3539 = vunpack.c.h.b16 %v3225
        %v3540 = vunpack.c.l.b16 %v3226
        %v3541 = vunpack.c.h.b16 %v3226
        %v3542 = vunpack.c.l.b16 %v3227
        %v3543 = vunpack.c.h.b16 %v3227
        %v3544 = vunpack.c.l.b16 %v3228
        %v3545 = vunpack.c.h.b16 %v3228
        %v3546 = vunpack.c.l.b16 %v3229
        %v3547 = vunpack.c.h.b16 %v3229
        %v3548 = vunpack.c.l.b16 %v3230
        %v3549 = vunpack.c.h.b16 %v3230
        %v3550 = vunpack.c.l.b16 %v3231
        %v3551 = vunpack.c.h.b16 %v3231
        %v3552 = vunpack.c.l.b16 %v3232
        %v3553 = vunpack.c.h.b16 %v3232
        %v3554 = vunpack.c.l.b16 %v3233
        %v3555 = vunpack.c.h.b16 %v3233
        %v3556 = vunpack.c.l.b16 %v3234
        %v3557 = vunpack.c.h.b16 %v3234
        %v3558 = vunpack.c.l.b16 %v3235
        %v3559 = vunpack.c.h.b16 %v3235
        %v3560 = vunpack.c.l.b16 %v3236
        %v3561 = vunpack.c.h.b16 %v3236
        %v3562 = vunpack.c.l.b16 %v3237
        %v3563 = vunpack.c.h.b16 %v3237
        %v3564 = vunpack.c.l.b16 %v3238
        %v3565 = vunpack.c.h.b16 %v3238
        %v3566 = vunpack.c.l.b16 %v3239
        %v3567 = vunpack.c.h.b16 %v3239
        %v3568 = vunpack.c.l.b16 %v3240
        %v3569 = vunpack.c.h.b16 %v3240
        %v3570 = vunpack.c.l.b16 %v3241
        %v3571 = vunpack.c.h.b16 %v3241
        %v3572 = vunpack.c.l.b16 %v3242
        %v3573 = vunpack.c.h.b16 %v3242
        %v3574 = vunpack.c.l.b16 %v3243
        %v3575 = vunpack.c.h.b16 %v3243
        %v3576 = vunpack.c.l.b16 %v3244
        %v3577 = vunpack.c.h.b16 %v3244
        %v3578 = vunpack.c.l.b16 %v3245
        %v3579 = vunpack.c.h.b16 %v3245
        %v3580 = vunpack.c.l.b16 %v3246
        %v3581 = vunpack.c.h.b16 %v3246
        %v3582 = vunpack.c.l.b16 %v3247
        %v3583 = vunpack.c.h.b16 %v3247
        %v3584 = vunpack.c.l.b16 %v3248
        %v3585 = vunpack.c.h.b16 %v3248
        %v3586 = vunpack.c.l.b16 %v3249
        %v3587 = vunpack.c.h.b16 %v3249
        %v3588 = vunpack.c.l.b16 %v3250
        %v3589 = vunpack.c.h.b16 %v3250
        %v3590 = vunpack.c.l.b16 %v3251
        %v3591 = vunpack.c.h.b16 %v3251
        %v3592 = vunpack.c.l.b16 %v3252
        %v3593 = vunpack.c.h.b16 %v3252
        %v3594 = vunpack.c.l.b16 %v3253
        %v3595 = vunpack.c.h.b16 %v3253
        %v3596 = vunpack.c.l.b16 %v3254
        %v3597 = vunpack.c.h.b16 %v3254
        %v3598 = vunpack.c.l.b16 %v3255
        %v3599 = vunpack.c.h.b16 %v3255
        %v3600 = vunpack.c.l.b16 %v3256
        %v3601 = vunpack.c.h.b16 %v3256
        %v3602 = vunpack.c.l.b16 %v3257
        %v3603 = vunpack.c.h.b16 %v3257
        %v3604 = vunpack.c.l.b16 %v3258
        %v3605 = vunpack.c.h.b16 %v3258
        %v3606 = vunpack.c.l.b16 %v3259
        %v3607 = vunpack.c.h.b16 %v3259
        %v3608 = vunpack.c.l.b16 %v3260
        %v3609 = vunpack.c.h.b16 %v3260
        %v3610 = vunpack.c.l.b16 %v3261
        %v3611 = vunpack.c.h.b16 %v3261
        %v3612 = vunpack.c.l.b16 %v3262
        %v3613 = vunpack.c.h.b16 %v3262
        %v3614 = vunpack.c.l.b16 %v3263
        %v3615 = vunpack.c.h.b16 %v3263
        %v3616 = vunpack.c.l.b16 %v3264
        %v3617 = vunpack.c.h.b16 %v3264
        %v3618 = vunpack.c.l.b16 %v3265
        %v3619 = vunpack.c.h.b16 %v3265
        %v3620 = vunpack.c.l.b16 %v3266
        %v3621 = vunpack.c.h.b16 %v3266
        %v3622 = vunpack.c.l.b16 %v3267
        %v3623 = vunpack.c.h.b16 %v3267
        %v3624 = vunpack.c.l.b16 %v3268
        %v3625 = vunpack.c.h.b16 %v3268
        %v3626 = vunpack.c.l.b16 %v3269
        %v3627 = vunpack.c.h.b16 %v3269
        %v3628 = vunpack.c.l.b16 %v3270
        %v3629 = vunpack.c.h.b16 %v3270
        %v3630 = vunpack.c.l.b16 %v3271
        %v3631 = vunpack.c.h.b16 %v3271
        %v3632 = vunpack.c.l.b16 %v3272
        %v3633 = vunpack.c.h.b16 %v3272
        %v3634 = vunpack.c.l.b16 %v3273
        %v3635 = vunpack.c.h.b16 %v3273
        %v3636 = vunpack.c.l.b16 %v3274
        %v3637 = vunpack.c.h.b16 %v3274
        %v3638 = vunpack.c.l.b16 %v3275
        %v3639 = vunpack.c.h.b16 %v3275
        %v3640 = vunpack.c.l.b16 %v3276
        %v3641 = vunpack.c.h.b16 %v3276
        %v3642 = vunpack.c.l.b16 %v3277
        %v3643 = vunpack.c.h.b16 %v3277
        %v3644 = vunpack.c.l.b16 %v3278
        %v3645 = vunpack.c.h.b16 %v3278
        %v3646 = vunpack.c.l.b16 %v3279
        %v3647 = vunpack.c.h.b16 %v3279
        %v3648 = vunpack.c.l.b16 %v3280
        %v3649 = vunpack.c.h.b16 %v3280
        %v3650 = vunpack.c.l.b16 %v3281
        %v3651 = vunpack.c.h.b16 %v3281
        %v3652 = vunpack.c.l.b16 %v3282
        %v3653 = vunpack.c.h.b16 %v3282
        %v3654 = vunpack.c.l.b16 %v3283
        %v3655 = vunpack.c.h.b16 %v3283
        %v3656 = vunpack.c.l.b16 %v3284
        %v3657 = vunpack.c.h.b16 %v3284
        %v3658 = vunpack.c.l.b16 %v3285
        %v3659 = vunpack.c.h.b16 %v3285
        %v3660 = vunpack.c.l.b16 %v3286
        %v3661 = vunpack.c.h.b16 %v3286
        %v3662 = vunpack.c.l.b16 %v3287
        %v3663 = vunpack.c.h.b16 %v3287
        %v3664 = vunpack.c.l.b16 %v3288
        %v3665 = vunpack.c.h.b16 %v3288
        %v3666 = vunpack.c.l.b16 %v3289
        %v3667 = vunpack.c.h.b16 %v3289
        %v3668 = vunpack.c.l.b16 %v3290
        %v3669 = vunpack.c.h.b16 %v3290
        %v3670 = vunpack.c.l.b16 %v3291
        %v3671 = vunpack.c.h.b16 %v3291
        %v3672 = vunpack.c.l.b16 %v3292
        %v3673 = vunpack.c.h.b16 %v3292
        %v3674 = vunpack.c.l.b16 %v3293
        %v3675 = vunpack.c.h.b16 %v3293
        %v3676 = vunpack.c.l.b16 %v3294
        %v3677 = vunpack.c.h.b16 %v3294
        %v3678 = vunpack.c.l.b16 %v3295
        %v3679 = vunpack.c.h.b16 %v3295
        %v3680 = vpack.c.b16 %v3428, %v3424
        %v3681 = vpack.c.b16 %v3429, %v3425
        %v3682 = vpack.c.b16 %v3430, %v3426
        %v3683 = vpack.c.b16 %v3431, %v3427
        %v3684 = vpack.c.b16 %v3436, %v3432
        %v3685 = vpack.c.b16 %v3437, %v3433
        %v3686 = vpack.c.b16 %v3438, %v3434
        %v3687 = vpack.c.b16 %v3439, %v3435
        %v3688 = vpack.c.b16 %v3444, %v3440
        %v3689 = vpack.c.b16 %v3445, %v3441
        %v3690 = vpack.c.b16 %v3446, %v3442
        %v3691 = vpack.c.b16 %v3447, %v3443
        %v3692 = vpack.c.b16 %v3452, %v3448
        %v3693 = vpack.c.b16 %v3453, %v3449
        %v3694 = vpack.c.b16 %v3454, %v3450
        %v3695 = vpack.c.b16 %v3455, %v3451
        %v3696 = vpack.c.b16 %v3460, %v3456
        %v3697 = vpack.c.b16 %v3461, %v3457
        %v3698 = vpack.c.b16 %v3462, %v3458
        %v3699 = vpack.c.b16 %v3463, %v3459
        %v3700 = vpack.c.b16 %v3468, %v3464
        %v3701 = vpack.c.b16 %v3469, %v3465
        %v3702 = vpack.c.b16 %v3470, %v3466
        %v3703 = vpack.c.b16 %v3471, %v3467
        %v3704 = vpack.c.b16 %v3476, %v3472
        %v3705 = vpack.c.b16 %v3477, %v3473
        %v3706 = vpack.c.b16 %v3478, %v3474
        %v3707 = vpack.c.b16 %v3479, %v3475
        %v3708 = vpack.c.b16 %v3484, %v3480
        %v3709 = vpack.c.b16 %v3485, %v3481
        %v3710 = vpack.c.b16 %v3486, %v3482
        %v3711 = vpack.c.b16 %v3487, %v3483
        %v3712 = vpack.c.b16 %v3492, %v3488
        %v3713 = vpack.c.b16 %v3493, %v3489
        %v3714 = vpack.c.b16 %v3494, %v3490
        %v3715 = vpack.c.b16 %v3495, %v3491
        %v3716 = vpack.c.b16 %v3500, %v3496
        %v3717 = vpack.c.b16 %v3501, %v3497
        %v3718 = vpack.c.b16 %v3502, %v3498
        %v3719 = vpack.c.b16 %v3503, %v3499
        %v3720 = vpack.c.b16 %v3508, %v3504
        %v3721 = vpack.c.b16 %v3509, %v3505
        %v3722 = vpack.c.b16 %v3510, %v3506
        %v3723 = vpack.c.b16 %v3511, %v3507
        %v3724 = vpack.c.b16 %v3516, %v3512
        %v3725 = vpack.c.b16 %v3517, %v3513
        %v3726 = vpack.c.b16 %v3518, %v3514
        %v3727 = vpack.c.b16 %v3519, %v3515
        %v3728 = vpack.c.b16 %v3524, %v3520
        %v3729 = vpack.c.b16 %v3525, %v3521
        %v3730 = vpack.c.b16 %v3526, %v3522
        %v3731 = vpack.c.b16 %v3527, %v3523
        %v3732 = vpack.c.b16 %v3532, %v3528
        %v3733 = vpack.c.b16 %v3533, %v3529
        %v3734 = vpack.c.b16 %v3534, %v3530
        %v3735 = vpack.c.b16 %v3535, %v3531
        %v3736 = vpack.c.b16 %v3540, %v3536
        %v3737 = vpack.c.b16 %v3541, %v3537
        %v3738 = vpack.c.b16 %v3542, %v3538
        %v3739 = vpack.c.b16 %v3543, %v3539
        %v3740 = vpack.c.b16 %v3548, %v3544
        %v3741 = vpack.c.b16 %v3549, %v3545
        %v3742 = vpack.c.b16 %v3550, %v3546
        %v3743 = vpack.c.b16 %v3551, %v3547
        %v3744 = vpack.c.b16 %v3556, %v3552
        %v3745 = vpack.c.b16 %v3557, %v3553
        %v3746 = vpack.c.b16 %v3558, %v3554
        %v3747 = vpack.c.b16 %v3559, %v3555
        %v3748 = vpack.c.b16 %v3564, %v3560
        %v3749 = vpack.c.b16 %v3565, %v3561
        %v3750 = vpack.c.b16 %v3566, %v3562
        %v3751 = vpack.c.b16 %v3567, %v3563
        %v3752 = vpack.c.b16 %v3572, %v3568
        %v3753 = vpack.c.b16 %v3573, %v3569
        %v3754 = vpack.c.b16 %v3574, %v3570
        %v3755 = vpack.c.b16 %v3575, %v3571
        %v3756 = vpack.c.b16 %v3580, %v3576
        %v3757 = vpack.c.b16 %v3581, %v3577
        %v3758 = vpack.c.b16 %v3582, %v3578
        %v3759 = vpack.c.b16 %v3583, %v3579
        %v3760 = vpack.c.b16 %v3588, %v3584
        %v3761 = vpack.c.b16 %v3589, %v3585
        %v3762 = vpack.c.b16 %v3590, %v3586
        %v3763 = vpack.c.b16 %v3591, %v3587
        %v3764 = vpack.c.b16 %v3596, %v3592
        %v3765 = vpack.c.b16 %v3597, %v3593
        %v3766 = vpack.c.b16 %v3598, %v3594
        %v3767 = vpack.c.b16 %v3599, %v3595
        %v3768 = vpack.c.b16 %v3604, %v3600
        %v3769 = vpack.c.b16 %v3605, %v3601
        %v3770 = vpack.c.b16 %v3606, %v3602
        %v3771 = vpack.c.b16 %v3607, %v3603
        %v3772 = vpack.c.b16 %v3612, %v3608
        %v3773 = vpack.c.b16 %v3613, %v3609
        %v3774 = vpack.c.b16 %v3614, %v3610
        %v3775 = vpack.c.b16 %v3615, %v3611
        %v3776 = vpack.c.b16 %v3620, %v3616
        %v3777 = vpack.c.b16 %v3621, %v3617
        %v3778 = vpack.c.b16 %v3622, %v3618
        %v3779 = vpack.c.b16 %v3623, %v3619
        %v3780 = vpack.c.b16 %v3628, %v3624
        %v3781 = vpack.c.b16 %v3629, %v3625
        %v3782 = vpack.c.b16 %v3630, %v3626
        %v3783 = vpack.c.b16 %v3631, %v3627
        %v3784 = vpack.c.b16 %v3636, %v3632
        %v3785 = vpack.c.b16 %v3637, %v3633
        %v3786 = vpack.c.b16 %v3638, %v3634
        %v3787 = vpack.c.b16 %v3639, %v3635
        %v3788 = vpack.c.b16 %v3644, %v3640
        %v3789 = vpack.c.b16 %v3645, %v3641
        %v3790 = vpack.c.b16 %v3646, %v3642
        %v3791 = vpack.c.b16 %v3647, %v3643
        %v3792 = vpack.c.b16 %v3652, %v3648
        %v3793 = vpack.c.b16 %v3653, %v3649
        %v3794 = vpack.c.b16 %v3654, %v3650
        %v3795 = vpack.c.b16 %v3655, %v3651
        %v3796 = vpack.c.b16 %v3660, %v3656
        %v3797 = vpack.c.b16 %v3661, %v3657
        %v3798 = vpack.c.b16 %v3662, %v3658
        %v3799 = vpack.c.b16 %v3663, %v3659
        %v3800 = vpack.c.b16 %v3668, %v3664
        %v3801 = vpack.c.b16 %v3669, %v3665
        %v3802 = vpack.c.b16 %v3670, %v3666
        %v3803 = vpack.c.b16 %v3671, %v3667
        %v3804 = vpack.c.b16 %v3676, %v3672
        %v3805 = vpack.c.b16 %v3677, %v3673
        %v3806 = vpack.c.b16 %v3678, %v3674
        %v3807 = vpack.c.b16 %v3679, %v3675
        %3936 = vmatprep.subr.bf16.mxu0 %v3709
        %3937 = vmatpush1.bf16.msra.mxu0 %v3708
        %3938 = vmatprep.subr.bf16.mxu0 %v3705
        %3939 = vmatpush1.bf16.msra.mxu0 %v3704
        %3940 = vmatprep.subr.bf16.mxu0 %v3701
        %3941 = vmatpush1.bf16.msra.mxu0 %v3700
        %3942 = vmatprep.subr.bf16.mxu0 %v3697
        %3943 = vmatpush1.bf16.msra.mxu0 %v3696
        %3944 = vmatprep.subr.bf16.mxu0 %v3693
        %3945 = vmatpush1.bf16.msra.mxu0 %v3692
        %3946 = vmatprep.subr.bf16.mxu0 %v3689
        %3947 = vmatpush1.bf16.msra.mxu0 %v3688
        %3948 = vmatprep.subr.bf16.mxu0 %v3685
        %3949 = vmatpush1.bf16.msra.mxu0 %v3684
        %3950 = vmatprep.subr.bf16.mxu0 %v3681
        %3951 = vmatpush1.bf16.msra.mxu0 %v3680
        %3952 = vmatprep.subr.bf16.mxu0 %v3741
        %3953 = vmatpush2.bf16.msra.mxu0 %v3740
        %3954 = vmatprep.subr.bf16.mxu0 %v3737
        %3955 = vmatpush2.bf16.msra.mxu0 %v3736
        %3956 = vmatprep.subr.bf16.mxu0 %v3733
        %3957 = vmatpush2.bf16.msra.mxu0 %v3732
        %3958 = vmatprep.subr.bf16.mxu0 %v3729
        %3959 = vmatpush2.bf16.msra.mxu0 %v3728
        %3960 = vmatprep.subr.bf16.mxu0 %v3725
        %3961 = vmatpush2.bf16.msra.mxu0 %v3724
        %3962 = vmatprep.subr.bf16.mxu0 %v3721
        %3963 = vmatpush2.bf16.msra.mxu0 %v3720
        %3964 = vmatprep.subr.bf16.mxu0 %v3717
        %3965 = vmatpush2.bf16.msra.mxu0 %v3716
        %3966 = vmatprep.subr.bf16.mxu0 %v3713
        %3967 = vmatpush2.bf16.msra.mxu0 %v3712
        %3968 = vmatprep.mubr.bf16.mxu0 %v3165
        %3969 = vmatmul.mubr.bf16.gmra.mxu0 %v3164
        %v3970 = vpop.f32.mrf.mxu0
        %v3971 = vadd.f32 0.0, %v3970
        %v3972 = vpop.f32.mrf.mxu0
        %v3973 = vadd.f32 0.0, %v3972
        %v3974 = vpop.f32.mrf.mxu0
        %v3975 = vpop.f32.mrf.mxu0
        %3976 = vdwg.mxu0
        %3977 = vmatprep.subr.bf16.mxu0 %v3773
        %3978 = vmatpush1.bf16.msra.mxu0 %v3772
        %3979 = vmatprep.subr.bf16.mxu0 %v3769
        %3980 = vmatpush1.bf16.msra.mxu0 %v3768
        %3981 = vmatprep.subr.bf16.mxu0 %v3765
        %3982 = vmatpush1.bf16.msra.mxu0 %v3764
        %3983 = vmatprep.subr.bf16.mxu0 %v3761
        %3984 = vmatpush1.bf16.msra.mxu0 %v3760
        %3985 = vmatprep.subr.bf16.mxu0 %v3757
        %3986 = vmatpush1.bf16.msra.mxu0 %v3756
        %3987 = vmatprep.subr.bf16.mxu0 %v3753
        %3988 = vmatpush1.bf16.msra.mxu0 %v3752
        %3989 = vmatprep.subr.bf16.mxu0 %v3749
        %3990 = vmatpush1.bf16.msra.mxu0 %v3748
        %3991 = vmatprep.subr.bf16.mxu0 %v3745
        %3992 = vmatpush1.bf16.msra.mxu0 %v3744
        %3993 = vmatprep.subr.bf16.mxu0 %v3805
        %3994 = vmatpush2.bf16.msra.mxu0 %v3804
        %3995 = vmatprep.subr.bf16.mxu0 %v3801
        %3996 = vmatpush2.bf16.msra.mxu0 %v3800
        %3997 = vmatprep.subr.bf16.mxu0 %v3797
        %3998 = vmatpush2.bf16.msra.mxu0 %v3796
        %3999 = vmatprep.subr.bf16.mxu0 %v3793
        %4000 = vmatpush2.bf16.msra.mxu0 %v3792
        %4001 = vmatprep.subr.bf16.mxu0 %v3789
        %4002 = vmatpush2.bf16.msra.mxu0 %v3788
        %4003 = vmatprep.subr.bf16.mxu0 %v3785
        %4004 = vmatpush2.bf16.msra.mxu0 %v3784
        %4005 = vmatprep.subr.bf16.mxu0 %v3781
        %4006 = vmatpush2.bf16.msra.mxu0 %v3780
        %4007 = vmatprep.subr.bf16.mxu0 %v3777
        %4008 = vmatpush2.bf16.msra.mxu0 %v3776
        %4009 = vmatprep.mubr.bf16.mxu0 %v3167
        %4010 = vmatmul.mubr.bf16.gmra.mxu0 %v3166
        %v4011 = vpop.f32.mrf.mxu0
        %v4012 = vadd.f32 %v3971, %v4011
        %v4013 = vpop.f32.mrf.mxu0
        %v4014 = vadd.f32 %v3973, %v4013
        %v4015 = vpop.f32.mrf.mxu0
        %v4016 = vpop.f32.mrf.mxu0
        %4017 = vdwg.mxu0
        %4018 = vmatprep.subr.bf16.mxu0 %v3711
        %4019 = vmatpush1.bf16.msra.mxu0 %v3710
        %4020 = vmatprep.subr.bf16.mxu0 %v3707
        %4021 = vmatpush1.bf16.msra.mxu0 %v3706
        %4022 = vmatprep.subr.bf16.mxu0 %v3703
        %4023 = vmatpush1.bf16.msra.mxu0 %v3702
        %4024 = vmatprep.subr.bf16.mxu0 %v3699
        %4025 = vmatpush1.bf16.msra.mxu0 %v3698
        %4026 = vmatprep.subr.bf16.mxu0 %v3695
        %4027 = vmatpush1.bf16.msra.mxu0 %v3694
        %4028 = vmatprep.subr.bf16.mxu0 %v3691
        %4029 = vmatpush1.bf16.msra.mxu0 %v3690
        %4030 = vmatprep.subr.bf16.mxu0 %v3687
        %4031 = vmatpush1.bf16.msra.mxu0 %v3686
        %4032 = vmatprep.subr.bf16.mxu0 %v3683
        %4033 = vmatpush1.bf16.msra.mxu0 %v3682
        %4034 = vmatprep.subr.bf16.mxu0 %v3743
        %4035 = vmatpush2.bf16.msra.mxu0 %v3742
        %4036 = vmatprep.subr.bf16.mxu0 %v3739
        %4037 = vmatpush2.bf16.msra.mxu0 %v3738
        %4038 = vmatprep.subr.bf16.mxu0 %v3735
        %4039 = vmatpush2.bf16.msra.mxu0 %v3734
        %4040 = vmatprep.subr.bf16.mxu0 %v3731
        %4041 = vmatpush2.bf16.msra.mxu0 %v3730
        %4042 = vmatprep.subr.bf16.mxu0 %v3727
        %4043 = vmatpush2.bf16.msra.mxu0 %v3726
        %4044 = vmatprep.subr.bf16.mxu0 %v3723
        %4045 = vmatpush2.bf16.msra.mxu0 %v3722
        %4046 = vmatprep.subr.bf16.mxu0 %v3719
        %4047 = vmatpush2.bf16.msra.mxu0 %v3718
        %4048 = vmatprep.subr.bf16.mxu0 %v3715
        %4049 = vmatpush2.bf16.msra.mxu0 %v3714
        %4050 = vmatprep.mubr.bf16.mxu0 %v3165
        %4051 = vmatmul.mubr.bf16.gmra.mxu0 %v3164
        %v4052 = vpop.f32.mrf.mxu0
        %v4053 = vadd.f32 0.0, %v4052
        %v4054 = vpop.f32.mrf.mxu0
        %v4055 = vadd.f32 0.0, %v4054
        %v4056 = vpop.f32.mrf.mxu0
        %v4057 = vpop.f32.mrf.mxu0
        %4058 = vdwg.mxu0
        %4059 = vmatprep.subr.bf16.mxu0 %v3775
        %4060 = vmatpush1.bf16.msra.mxu0 %v3774
        %4061 = vmatprep.subr.bf16.mxu0 %v3771
        %4062 = vmatpush1.bf16.msra.mxu0 %v3770
        %4063 = vmatprep.subr.bf16.mxu0 %v3767
        %4064 = vmatpush1.bf16.msra.mxu0 %v3766
        %4065 = vmatprep.subr.bf16.mxu0 %v3763
        %4066 = vmatpush1.bf16.msra.mxu0 %v3762
        %4067 = vmatprep.subr.bf16.mxu0 %v3759
        %4068 = vmatpush1.bf16.msra.mxu0 %v3758
        %4069 = vmatprep.subr.bf16.mxu0 %v3755
        %4070 = vmatpush1.bf16.msra.mxu0 %v3754
        %4071 = vmatprep.subr.bf16.mxu0 %v3751
        %4072 = vmatpush1.bf16.msra.mxu0 %v3750
        %4073 = vmatprep.subr.bf16.mxu0 %v3747
        %4074 = vmatpush1.bf16.msra.mxu0 %v3746
        %4075 = vmatprep.subr.bf16.mxu0 %v3807
        %4076 = vmatpush2.bf16.msra.mxu0 %v3806
        %4077 = vmatprep.subr.bf16.mxu0 %v3803
        %4078 = vmatpush2.bf16.msra.mxu0 %v3802
        %4079 = vmatprep.subr.bf16.mxu0 %v3799
        %4080 = vmatpush2.bf16.msra.mxu0 %v3798
        %4081 = vmatprep.subr.bf16.mxu0 %v3795
        %4082 = vmatpush2.bf16.msra.mxu0 %v3794
        %4083 = vmatprep.subr.bf16.mxu0 %v3791
        %4084 = vmatpush2.bf16.msra.mxu0 %v3790
        %4085 = vmatprep.subr.bf16.mxu0 %v3787
        %4086 = vmatpush2.bf16.msra.mxu0 %v3786
        %4087 = vmatprep.subr.bf16.mxu0 %v3783
        %4088 = vmatpush2.bf16.msra.mxu0 %v3782
        %4089 = vmatprep.subr.bf16.mxu0 %v3779
        %4090 = vmatpush2.bf16.msra.mxu0 %v3778
        %4091 = vmatprep.mubr.bf16.mxu0 %v3167
        %4092 = vmatmul.mubr.bf16.gmra.mxu0 %v3166
        %v4093 = vpop.f32.mrf.mxu0
        %v4094 = vadd.f32 %v4053, %v4093
        %v4095 = vpop.f32.mrf.mxu0
        %v4096 = vadd.f32 %v4055, %v4095
        %v4097 = vpop.f32.mrf.mxu0
        %v4098 = vpop.f32.mrf.mxu0
        %4099 = vdwg.mxu0
        %vm4100 = vcmp.ge.f32.partialorder %v4012, 0.0
        %vm4101 = vcmp.ge.f32.partialorder %v4014, 0.0
        %vm4102 = vcmp.ge.f32.partialorder %v4094, 0.0
        %vm4103 = vcmp.ge.f32.partialorder %v4096, 0.0
        %v4104 = vsel %vm4100, 1.4142135, 0.28284273
        %v4105 = vsel %vm4101, 1.4142135, 0.28284273
        %v4106 = vsel %vm4102, 1.4142135, 0.28284273
        %v4107 = vsel %vm4103, 1.4142135, 0.28284273
        %v4108 = vmul.f32 %v4012, %v4104
        %v4109 = vmul.f32 %v4014, %v4105
        %v4110 = vmul.f32 %v4094, %v4106
        %v4111 = vmul.f32 %v4096, %v4107
        %4112 = vst [vmem:[%s298] sm:$0xff] %v4108
        %4113 = vst [vmem:[%s298 + $0x8] sm:$0xff] %v4109
        %4114 = vst [vmem:[%s298 + $0x10] sm:$0xff] %v4110
        %4115 = vst [vmem:[%s298 + $0x18] sm:$0xff] %v4111
        %s4116 = sand.u32 %s142, 1
        %s4117 = scalar_lea.sflag [#allocation4], %s4116
        %s4118 = sand.u32 %s142, 1
        %s4119 = smul.addr %s4118, 32
        %s4120 = scalar_lea.vmem [#allocation11], %s4119
        // Predicated region
        $region61: #{tpu_custom_call.1} parent=39 // pred_check
          %p4121 = pneg %p152
        $region62: #{tpu_custom_call.1} parent=39 // pred_check_branch
          %4123 = sbr.rel (%p4121) target = $region64
        $region63: #{tpu_custom_call.1} parent=39 // pred_region
          %s4125 = ssub.s32 512, 512
          %4126 = vsyncadd %s4117, %s4125
          %s4127 = smul.addr %s24, 4
          %s4128 = smul.addr %s4127, 128
          %s4129 = scalar_lea.hbm %s5, %s4128
          %s4131 = sshll.u32 %s4120, 4
          %s4132 = int_to_ptr.vmem [resolvable:$true] %s4131
          %4134 = dma.vmem_to_hbm [thread:$0]  %s4132, 512, %s4129, %s4117
        $region64: #{tpu_custom_call.1} parent=39 // pred_fallthru
          _
      $region40: #{tpu_custom_call.1} parent=5 // pred_fallthru
        _
      %p4135 = scmp.le.s32.totalorder 2, %s19
      // Predicated region
      $region65: #{tpu_custom_call.1} parent=5 // pred_check
        %p4136 = pneg %p4135
      $region66: #{tpu_custom_call.1} parent=5 // pred_check_branch
        %4138 = sbr.rel (%p4136) target = $region68
      $region67: #{tpu_custom_call.1} parent=5 // pred_region
        %s4139 = ssub.s32 %s19, 2
        // Predicated region
        $region69: #{tpu_custom_call.1} parent=67 // pred_check
          %p4140 = pneg %p158
        $region70: #{tpu_custom_call.1} parent=67 // pred_check_branch
          %4142 = sbr.rel (%p4140) target = $region72
        $region71: #{tpu_custom_call.1} parent=67 // pred_region
          %s4143 = sand.u32 %s143, 1
          %s4144 = scalar_lea.sflag [#allocation4], %s4143
          %s4145 = sand.u32 %s143, 1
          %s4146 = smul.addr %s4145, 32
          %s4147 = scalar_lea.vmem [#allocation11], %s4146
          %4148 = dma.done %s4144, 512
        $region72: #{tpu_custom_call.1} parent=67 // pred_fallthru
          _
      $region68: #{tpu_custom_call.1} parent=5 // pred_fallthru
        _
    $region6: #{tpu_custom_call.1} parent=1 // loop_footer
      %s23 = sadd.s32 1, %s19
    $region7: #{tpu_custom_call.1} parent=1 // loop_footer_branch
      %18 = sbr.rel target = $region3
    $region8: #{tpu_custom_call.1} parent=1 // loop_exit
      _
    %4149 = vsyncpa [#allocation3], 1
    %s4150 = scalar_lea.sflag [#allocation3], 1
    %4151 = vsyncpa %s4150, 1
    %4152 = vsyncpa [#allocation6], 1
    %4153 = vsyncpa [#allocation9], 1
    %4154 = vsyncpa [#allocation4], 1
    %s4155 = scalar_lea.sflag [#allocation4], 1
    %4156 = vsyncpa %s4155, 1

</llo_original>
